<compile_context>
chip_gen: v7x
topology: tpu7x:2x2x1
jax: 0.10.0
libtpu: 0.0.40
codegen_flags: <defaults>
</compile_context>

<pallas_src>
import functools
import math

import jax
import jax.numpy as jnp
from jax.experimental import pallas as pl
from jax.experimental.pallas import tpu as pltpu


def _attention_set_kernel(w1_ref, w2_ref, e_ref, o_ref,
                          m_sc, l_sc, acc_sc, s_sc,
                          *, att_reg, inv_tem, l_total, mask_l):
    b_blk, _, l_tile = e_ref.shape
    li = pl.program_id(1)

    @pl.when(li == 0)
    def _init():
        m_sc[...] = jnp.full(m_sc.shape, -jnp.inf, jnp.float32)
        l_sc[...] = jnp.zeros(l_sc.shape, jnp.float32)
        acc_sc[...] = jnp.zeros(acc_sc.shape, jnp.float32)

    w1 = w1_ref[...]                                       # (D, D), resident
    w2_col = w2_ref[...].astype(jnp.float32)               # (D, 1), resident

    # D x D projection per batch row on the MXU (f32 accumulation); the (1, D)
    # W2 projection is a VPU multiply + sublane reduce (keeps the MXU free).
    for b in range(b_blk):
        e_b = e_ref[b]                                     # (D, l_tile)
        h_b = jnp.dot(w1, e_b, preferred_element_type=jnp.float32)
        h_b = jnp.maximum(h_b, 0.0)                        # relu
        s_b = jnp.sum(w2_col * h_b, axis=0, keepdims=True)  # (1, l_tile) f32
        s_sc[pl.ds(b, 1), :] = s_b

    # att_reg / att_tem are folded into compile-time scalars.
    logits = (s_sc[...] + att_reg) * inv_tem               # (b_blk, l_tile) f32
    if mask_l:
        pos = li * l_tile + jax.lax.broadcasted_iota(jnp.int32, (b_blk, l_tile), 1)
        logits = jnp.where(pos < l_total, logits, -jnp.inf)

    # Online (flash-style) softmax update, all stats in f32.
    m_prev = m_sc[...]                                     # (b_blk, 1)
    m_new = jnp.maximum(m_prev, jnp.max(logits, axis=-1, keepdims=True))
    alpha = jnp.exp(m_prev - m_new)                        # (b_blk, 1)
    p = jnp.exp(logits - m_new)                            # (b_blk, l_tile)

    e_all = e_ref[...].astype(jnp.float32)                 # (b_blk, D, l_tile)
    acc_sc[...] = alpha * acc_sc[...] + jnp.sum(e_all * p[:, None, :], axis=-1)
    l_sc[...] = alpha * l_sc[...] + jnp.sum(p, axis=-1, keepdims=True)
    m_sc[...] = m_new

    @pl.when(li == pl.num_programs(1) - 1)
    def _finalize():
        inv_den = pl.reciprocal(l_sc[...], approx=True)    # EUP, ~free
        o_ref[...] = (acc_sc[...] * inv_den).astype(o_ref.dtype)


def attention_set_forward(embeds, w1, w2, *, att_reg=0.0, att_tem=1.0,
                          b_blk=8, l_tile=128, interpret=False):
    """embeds: (B, D, L), w1: (D, D), w2: (1, D)  ->  (B, D)."""
    B, D, L = embeds.shape
    if w1.shape != (D, D):
        raise ValueError(f"w1 must be {(D, D)}, got {w1.shape}")
    if w2.shape != (1, D):
        raise ValueError(f"w2 must be {(1, D)}, got {w2.shape}")

    if L <= l_tile:
        l_tile = L  # single full-extent tile; no 128-multiple requirement.
    Lp = pl.cdiv(L, l_tile) * l_tile
    Bp = pl.cdiv(B, b_blk) * b_blk

    x = embeds
    if Bp != B or Lp != L:
        x = jnp.pad(embeds, ((0, Bp - B), (0, 0), (0, Lp - L)))
    w2_col = jnp.reshape(w2, (D, 1))

    grid = (Bp // b_blk, Lp // l_tile)

    itemsize = jnp.dtype(embeds.dtype).itemsize
    block_bytes = b_blk * D * l_tile * itemsize
    est = (3 * block_bytes                         # pipelined embeds blocks
           + D * D * itemsize + D * itemsize       # resident W1 / W2
           + 2 * b_blk * D * itemsize              # output block
           + 4 * b_blk * (D + l_tile + 2))         # f32 scratch
    vmem_limit = int(min(max(2 * est, 32 * 1024 * 1024), 48 * 1024 * 1024))

    kernel = functools.partial(
        _attention_set_kernel,
        att_reg=float(att_reg),
        inv_tem=float(1.0 / (att_tem + 1e-4)),
        l_total=int(L),
        mask_l=bool(Lp != L),
    )

    out = pl.pallas_call(
        kernel,
        out_shape=jax.ShapeDtypeStruct((Bp, D), embeds.dtype),
        grid_spec=pltpu.PrefetchScalarGridSpec(
            num_scalar_prefetch=0,
            grid=grid,
            in_specs=[
                pl.BlockSpec((D, D), lambda b, l: (0, 0)),            # W1 resident
                pl.BlockSpec((D, 1), lambda b, l: (0, 0)),            # W2 (column) resident
                pl.BlockSpec((b_blk, D, l_tile), lambda b, l: (b, 0, l)),  # embeds stream
            ],
            out_specs=pl.BlockSpec((b_blk, D), lambda b, l: (b, 0)),
            scratch_shapes=[
                pltpu.VMEM((b_blk, 1), jnp.float32),        # running max
                pltpu.VMEM((b_blk, 1), jnp.float32),        # running denom
                pltpu.VMEM((b_blk, D), jnp.float32),        # running weighted sum
                pltpu.VMEM((b_blk, l_tile), jnp.float32),   # per-tile logits staging
            ],
        ),
        compiler_params=pltpu.CompilerParams(
            dimension_semantics=("parallel", "arbitrary"),
            vmem_limit_bytes=vmem_limit,
        ),
        interpret=interpret,
    )(w1, w2_col, x)

    return out[:B]


def attention_set_reference(embeds, w1, w2, att_reg, att_tem):
    hi = jax.lax.Precision.HIGHEST
    h = jax.nn.relu(jnp.einsum('kc,bcl->bkl', w1, embeds, precision=hi))
    s = jnp.einsum('kc,bcl->bkl', w2, h, precision=hi)          # (B, 1, L)
    t = (s + att_reg) / (att_tem + 1e-4)
    a = jax.nn.softmax(t, axis=-1)
    return jnp.sum(embeds * a, axis=-1)                          # (B, D)


if __name__ == "__main__":
    key = jax.random.PRNGKey(0)

    def run_case(B, D, L, att_reg, att_tem, k):
        k1, k2, k3 = jax.random.split(k, 3)
        scale = 1.0 / math.sqrt(D)
        embeds = jax.random.normal(k1, (B, D, L), jnp.float32)
        w1 = scale * jax.random.normal(k2, (D, D), jnp.float32)
        w2 = scale * jax.random.normal(k3, (1, D), jnp.float32)

        out = attention_set_forward(embeds, w1, w2,
                                    att_reg=att_reg, att_tem=att_tem)
        out = jax.block_until_ready(out)

        ref = jax.block_until_ready(
            attention_set_reference(embeds, w1, w2, att_reg, att_tem))

        if out.shape != (B, D):
            raise RuntimeError(f"bad output shape {out.shape}, expected {(B, D)}")
        err = float(jnp.max(jnp.abs(out - ref)))
        tol = 5e-2 * float(jnp.max(jnp.abs(ref))) + 5e-3
        if not err <= tol:
            raise RuntimeError(
                f"mismatch B={B} D={D} L={L}: max_err={err:.3e} tol={tol:.3e}")

    k0, k1 = jax.random.split(key)
    # Aligned shapes: 2 batch blocks x 2 L tiles (exercises online softmax).
    run_case(B=16, D=128, L=256, att_reg=0.0, att_tem=1.0, k=k0)
    # Ragged shapes: B and L padded + masked inside the kernel.
    run_case(B=10, D=64, L=200, att_reg=0.1, att_tem=0.7, k=k1)

    print("KERNEL_OK")
</pallas_src>

<mosaic_0001>
module attributes {stable_mosaic.version = 11 : i64} {
  func.func @_attention_set_kernel(%arg0: i32, %arg1: i32, %arg2: memref<128x128xf32, #tpu.memory_space<vmem>>, %arg3: memref<128x1xf32, #tpu.memory_space<vmem>>, %arg4: memref<8x128x128xf32, #tpu.memory_space<vmem>>, %arg5: memref<8x128xf32, #tpu.memory_space<vmem>>, %arg6: memref<8x1xf32, #tpu.memory_space<vmem>>, %arg7: memref<8x1xf32, #tpu.memory_space<vmem>>, %arg8: memref<8x128xf32, #tpu.memory_space<vmem>>, %arg9: memref<8x128xf32, #tpu.memory_space<vmem>>) attributes {dimension_semantics = [#tpu.dimension_semantics<parallel>, #tpu.dimension_semantics<arbitrary>], iteration_bounds = array<i64: 2, 2>, scalar_prefetch = 0 : i64, scratch_operands = 4 : i64, tpu.core_type = #tpu.core_type<tc>, window_params = [{pipeline_mode = #tpu.pipeline_mode<synchronous>, transform_indices = @transform_0, window_bounds = array<i64: 128, 128>}, {pipeline_mode = #tpu.pipeline_mode<synchronous>, transform_indices = @transform_1, window_bounds = array<i64: 128, 1>}, {transform_indices = @transform_2, window_bounds = array<i64: 8, 128, 128>}, {transform_indices = @transform_3, window_bounds = array<i64: 8, 128>}]} {
    %c0_i32 = arith.constant 0 : i32
    %0 = arith.cmpi eq, %arg1, %c0_i32 : i32
    %1 = arith.extui %0 : i1 to i32
    %c0_i32_0 = arith.constant 0 : i32
    %2 = arith.cmpi ne, %1, %c0_i32_0 : i32
    scf.if %2 {
      %cst_83 = arith.constant 0xFF800000 : f32
      %119 = vector.broadcast %cst_83 : f32 to vector<8x1xf32>
      %c0_84 = arith.constant 0 : index
      %c0_85 = arith.constant 0 : index
      %120 = vector.load %arg6[%c0_84, %c0_85] : memref<8x1xf32, #tpu.memory_space<vmem>>, vector<8x1xf32>
      tpu.vector_store %arg6[%c0_84, %c0_85], %119 {strides = array<i32>} : memref<8x1xf32, #tpu.memory_space<vmem>>, vector<8x1xf32>,
      %cst_86 = arith.constant 0.000000e+00 : f32
      %121 = vector.broadcast %cst_86 : f32 to vector<8x1xf32>
      %c0_87 = arith.constant 0 : index
      %c0_88 = arith.constant 0 : index
      %122 = vector.load %arg7[%c0_87, %c0_88] : memref<8x1xf32, #tpu.memory_space<vmem>>, vector<8x1xf32>
      tpu.vector_store %arg7[%c0_87, %c0_88], %121 {strides = array<i32>} : memref<8x1xf32, #tpu.memory_space<vmem>>, vector<8x1xf32>,
      %cst_89 = arith.constant 0.000000e+00 : f32
      %123 = vector.broadcast %cst_89 : f32 to vector<8x128xf32>
      %c0_90 = arith.constant 0 : index
      %c0_91 = arith.constant 0 : index
      %124 = vector.load %arg8[%c0_90, %c0_91] : memref<8x128xf32, #tpu.memory_space<vmem>>, vector<8x128xf32>
      tpu.vector_store %arg8[%c0_90, %c0_91], %123 {strides = array<i32>} : memref<8x128xf32, #tpu.memory_space<vmem>>, vector<8x128xf32>,
    } else {
    }
    %c0 = arith.constant 0 : index
    %c0_1 = arith.constant 0 : index
    %3 = vector.load %arg2[%c0, %c0_1] : memref<128x128xf32, #tpu.memory_space<vmem>>, vector<128x128xf32>
    %c0_2 = arith.constant 0 : index
    %c0_3 = arith.constant 0 : index
    %4 = vector.load %arg3[%c0_2, %c0_3] : memref<128x1xf32, #tpu.memory_space<vmem>>, vector<128x1xf32>
    %c0_4 = arith.constant 0 : index
    %c0_5 = arith.constant 0 : index
    %c0_6 = arith.constant 0 : index
    %5 = vector.load %arg4[%c0_4, %c0_5, %c0_6] : memref<8x128x128xf32, #tpu.memory_space<vmem>>, vector<1x128x128xf32>
    %6 = vector.shape_cast %5 : vector<1x128x128xf32> to vector<128x128xf32>
    %cst = arith.constant dense<0.000000e+00> : vector<128x128xf32>
    %7 = tpu.matmul %3, %6, %cst {dimension_numbers = #tpu.dot_dimension_numbers<[1], [0], [0], [1], [0, 0, 1, 1], [], []>} : vector<128x128xf32>, vector<128x128xf32>, vector<128x128xf32> -> vector<128x128xf32>
    %cst_7 = arith.constant 0.000000e+00 : f32
    %8 = vector.broadcast %cst_7 : f32 to vector<128x128xf32>
    %9 = arith.maximumf %7, %8 : vector<128x128xf32>
    %10 = vector.broadcast %4 : vector<128x1xf32> to vector<128x128xf32>
    %11 = arith.mulf %10, %9 : vector<128x128xf32>
    %cst_8 = arith.constant dense<0.000000e+00> : vector<128xf32>
    %12 = vector.multi_reduction <add>, %11, %cst_8 [0] : vector<128x128xf32> to vector<128xf32>
    %13 = vector.shape_cast %12 : vector<128xf32> to vector<1x128xf32>
    %c0_9 = arith.constant 0 : index
    %c0_10 = arith.constant 0 : index
    %14 = vector.load %arg9[%c0_9, %c0_10] : memref<8x128xf32, #tpu.memory_space<vmem>>, vector<1x128xf32>
    tpu.vector_store %arg9[%c0_9, %c0_10], %13 {strides = array<i32>} : memref<8x128xf32, #tpu.memory_space<vmem>>, vector<1x128xf32>,
    %c1 = arith.constant 1 : index
    %c0_11 = arith.constant 0 : index
    %c0_12 = arith.constant 0 : index
    %15 = vector.load %arg4[%c1, %c0_11, %c0_12] : memref<8x128x128xf32, #tpu.memory_space<vmem>>, vector<1x128x128xf32>
    %16 = vector.shape_cast %15 : vector<1x128x128xf32> to vector<128x128xf32>
    %cst_13 = arith.constant dense<0.000000e+00> : vector<128x128xf32>
    %17 = tpu.matmul %3, %16, %cst_13 {dimension_numbers = #tpu.dot_dimension_numbers<[1], [0], [0], [1], [0, 0, 1, 1], [], []>} : vector<128x128xf32>, vector<128x128xf32>, vector<128x128xf32> -> vector<128x128xf32>
    %cst_14 = arith.constant 0.000000e+00 : f32
    %18 = vector.broadcast %cst_14 : f32 to vector<128x128xf32>
    %19 = arith.maximumf %17, %18 : vector<128x128xf32>
    %20 = vector.broadcast %4 : vector<128x1xf32> to vector<128x128xf32>
    %21 = arith.mulf %20, %19 : vector<128x128xf32>
    %cst_15 = arith.constant dense<0.000000e+00> : vector<128xf32>
    %22 = vector.multi_reduction <add>, %21, %cst_15 [0] : vector<128x128xf32> to vector<128xf32>
    %23 = vector.shape_cast %22 : vector<128xf32> to vector<1x128xf32>
    %c1_16 = arith.constant 1 : index
    %c0_17 = arith.constant 0 : index
    %24 = vector.load %arg9[%c1_16, %c0_17] : memref<8x128xf32, #tpu.memory_space<vmem>>, vector<1x128xf32>
    tpu.vector_store %arg9[%c1_16, %c0_17], %23 {strides = array<i32>} : memref<8x128xf32, #tpu.memory_space<vmem>>, vector<1x128xf32>,
    %c2 = arith.constant 2 : index
    %c0_18 = arith.constant 0 : index
    %c0_19 = arith.constant 0 : index
    %25 = vector.load %arg4[%c2, %c0_18, %c0_19] : memref<8x128x128xf32, #tpu.memory_space<vmem>>, vector<1x128x128xf32>
    %26 = vector.shape_cast %25 : vector<1x128x128xf32> to vector<128x128xf32>
    %cst_20 = arith.constant dense<0.000000e+00> : vector<128x128xf32>
    %27 = tpu.matmul %3, %26, %cst_20 {dimension_numbers = #tpu.dot_dimension_numbers<[1], [0], [0], [1], [0, 0, 1, 1], [], []>} : vector<128x128xf32>, vector<128x128xf32>, vector<128x128xf32> -> vector<128x128xf32>
    %cst_21 = arith.constant 0.000000e+00 : f32
    %28 = vector.broadcast %cst_21 : f32 to vector<128x128xf32>
    %29 = arith.maximumf %27, %28 : vector<128x128xf32>
    %30 = vector.broadcast %4 : vector<128x1xf32> to vector<128x128xf32>
    %31 = arith.mulf %30, %29 : vector<128x128xf32>
    %cst_22 = arith.constant dense<0.000000e+00> : vector<128xf32>
    %32 = vector.multi_reduction <add>, %31, %cst_22 [0] : vector<128x128xf32> to vector<128xf32>
    %33 = vector.shape_cast %32 : vector<128xf32> to vector<1x128xf32>
    %c2_23 = arith.constant 2 : index
    %c0_24 = arith.constant 0 : index
    %34 = vector.load %arg9[%c2_23, %c0_24] : memref<8x128xf32, #tpu.memory_space<vmem>>, vector<1x128xf32>
    tpu.vector_store %arg9[%c2_23, %c0_24], %33 {strides = array<i32>} : memref<8x128xf32, #tpu.memory_space<vmem>>, vector<1x128xf32>,
    %c3 = arith.constant 3 : index
    %c0_25 = arith.constant 0 : index
    %c0_26 = arith.constant 0 : index
    %35 = vector.load %arg4[%c3, %c0_25, %c0_26] : memref<8x128x128xf32, #tpu.memory_space<vmem>>, vector<1x128x128xf32>
    %36 = vector.shape_cast %35 : vector<1x128x128xf32> to vector<128x128xf32>
    %cst_27 = arith.constant dense<0.000000e+00> : vector<128x128xf32>
    %37 = tpu.matmul %3, %36, %cst_27 {dimension_numbers = #tpu.dot_dimension_numbers<[1], [0], [0], [1], [0, 0, 1, 1], [], []>} : vector<128x128xf32>, vector<128x128xf32>, vector<128x128xf32> -> vector<128x128xf32>
    %cst_28 = arith.constant 0.000000e+00 : f32
    %38 = vector.broadcast %cst_28 : f32 to vector<128x128xf32>
    %39 = arith.maximumf %37, %38 : vector<128x128xf32>
    %40 = vector.broadcast %4 : vector<128x1xf32> to vector<128x128xf32>
    %41 = arith.mulf %40, %39 : vector<128x128xf32>
    %cst_29 = arith.constant dense<0.000000e+00> : vector<128xf32>
    %42 = vector.multi_reduction <add>, %41, %cst_29 [0] : vector<128x128xf32> to vector<128xf32>
    %43 = vector.shape_cast %42 : vector<128xf32> to vector<1x128xf32>
    %c3_30 = arith.constant 3 : index
    %c0_31 = arith.constant 0 : index
    %44 = vector.load %arg9[%c3_30, %c0_31] : memref<8x128xf32, #tpu.memory_space<vmem>>, vector<1x128xf32>
    tpu.vector_store %arg9[%c3_30, %c0_31], %43 {strides = array<i32>} : memref<8x128xf32, #tpu.memory_space<vmem>>, vector<1x128xf32>,
    %c4 = arith.constant 4 : index
    %c0_32 = arith.constant 0 : index
    %c0_33 = arith.constant 0 : index
    %45 = vector.load %arg4[%c4, %c0_32, %c0_33] : memref<8x128x128xf32, #tpu.memory_space<vmem>>, vector<1x128x128xf32>
    %46 = vector.shape_cast %45 : vector<1x128x128xf32> to vector<128x128xf32>
    %cst_34 = arith.constant dense<0.000000e+00> : vector<128x128xf32>
    %47 = tpu.matmul %3, %46, %cst_34 {dimension_numbers = #tpu.dot_dimension_numbers<[1], [0], [0], [1], [0, 0, 1, 1], [], []>} : vector<128x128xf32>, vector<128x128xf32>, vector<128x128xf32> -> vector<128x128xf32>
    %cst_35 = arith.constant 0.000000e+00 : f32
    %48 = vector.broadcast %cst_35 : f32 to vector<128x128xf32>
    %49 = arith.maximumf %47, %48 : vector<128x128xf32>
    %50 = vector.broadcast %4 : vector<128x1xf32> to vector<128x128xf32>
    %51 = arith.mulf %50, %49 : vector<128x128xf32>
    %cst_36 = arith.constant dense<0.000000e+00> : vector<128xf32>
    %52 = vector.multi_reduction <add>, %51, %cst_36 [0] : vector<128x128xf32> to vector<128xf32>
    %53 = vector.shape_cast %52 : vector<128xf32> to vector<1x128xf32>
    %c4_37 = arith.constant 4 : index
    %c0_38 = arith.constant 0 : index
    %54 = vector.load %arg9[%c4_37, %c0_38] : memref<8x128xf32, #tpu.memory_space<vmem>>, vector<1x128xf32>
    tpu.vector_store %arg9[%c4_37, %c0_38], %53 {strides = array<i32>} : memref<8x128xf32, #tpu.memory_space<vmem>>, vector<1x128xf32>,
    %c5 = arith.constant 5 : index
    %c0_39 = arith.constant 0 : index
    %c0_40 = arith.constant 0 : index
    %55 = vector.load %arg4[%c5, %c0_39, %c0_40] : memref<8x128x128xf32, #tpu.memory_space<vmem>>, vector<1x128x128xf32>
    %56 = vector.shape_cast %55 : vector<1x128x128xf32> to vector<128x128xf32>
    %cst_41 = arith.constant dense<0.000000e+00> : vector<128x128xf32>
    %57 = tpu.matmul %3, %56, %cst_41 {dimension_numbers = #tpu.dot_dimension_numbers<[1], [0], [0], [1], [0, 0, 1, 1], [], []>} : vector<128x128xf32>, vector<128x128xf32>, vector<128x128xf32> -> vector<128x128xf32>
    %cst_42 = arith.constant 0.000000e+00 : f32
    %58 = vector.broadcast %cst_42 : f32 to vector<128x128xf32>
    %59 = arith.maximumf %57, %58 : vector<128x128xf32>
    %60 = vector.broadcast %4 : vector<128x1xf32> to vector<128x128xf32>
    %61 = arith.mulf %60, %59 : vector<128x128xf32>
    %cst_43 = arith.constant dense<0.000000e+00> : vector<128xf32>
    %62 = vector.multi_reduction <add>, %61, %cst_43 [0] : vector<128x128xf32> to vector<128xf32>
    %63 = vector.shape_cast %62 : vector<128xf32> to vector<1x128xf32>
    %c5_44 = arith.constant 5 : index
    %c0_45 = arith.constant 0 : index
    %64 = vector.load %arg9[%c5_44, %c0_45] : memref<8x128xf32, #tpu.memory_space<vmem>>, vector<1x128xf32>
    tpu.vector_store %arg9[%c5_44, %c0_45], %63 {strides = array<i32>} : memref<8x128xf32, #tpu.memory_space<vmem>>, vector<1x128xf32>,
    %c6 = arith.constant 6 : index
    %c0_46 = arith.constant 0 : index
    %c0_47 = arith.constant 0 : index
    %65 = vector.load %arg4[%c6, %c0_46, %c0_47] : memref<8x128x128xf32, #tpu.memory_space<vmem>>, vector<1x128x128xf32>
    %66 = vector.shape_cast %65 : vector<1x128x128xf32> to vector<128x128xf32>
    %cst_48 = arith.constant dense<0.000000e+00> : vector<128x128xf32>
    %67 = tpu.matmul %3, %66, %cst_48 {dimension_numbers = #tpu.dot_dimension_numbers<[1], [0], [0], [1], [0, 0, 1, 1], [], []>} : vector<128x128xf32>, vector<128x128xf32>, vector<128x128xf32> -> vector<128x128xf32>
    %cst_49 = arith.constant 0.000000e+00 : f32
    %68 = vector.broadcast %cst_49 : f32 to vector<128x128xf32>
    %69 = arith.maximumf %67, %68 : vector<128x128xf32>
    %70 = vector.broadcast %4 : vector<128x1xf32> to vector<128x128xf32>
    %71 = arith.mulf %70, %69 : vector<128x128xf32>
    %cst_50 = arith.constant dense<0.000000e+00> : vector<128xf32>
    %72 = vector.multi_reduction <add>, %71, %cst_50 [0] : vector<128x128xf32> to vector<128xf32>
    %73 = vector.shape_cast %72 : vector<128xf32> to vector<1x128xf32>
    %c6_51 = arith.constant 6 : index
    %c0_52 = arith.constant 0 : index
    %74 = vector.load %arg9[%c6_51, %c0_52] : memref<8x128xf32, #tpu.memory_space<vmem>>, vector<1x128xf32>
    tpu.vector_store %arg9[%c6_51, %c0_52], %73 {strides = array<i32>} : memref<8x128xf32, #tpu.memory_space<vmem>>, vector<1x128xf32>,
    %c7 = arith.constant 7 : index
    %c0_53 = arith.constant 0 : index
    %c0_54 = arith.constant 0 : index
    %75 = vector.load %arg4[%c7, %c0_53, %c0_54] : memref<8x128x128xf32, #tpu.memory_space<vmem>>, vector<1x128x128xf32>
    %76 = vector.shape_cast %75 : vector<1x128x128xf32> to vector<128x128xf32>
    %cst_55 = arith.constant dense<0.000000e+00> : vector<128x128xf32>
    %77 = tpu.matmul %3, %76, %cst_55 {dimension_numbers = #tpu.dot_dimension_numbers<[1], [0], [0], [1], [0, 0, 1, 1], [], []>} : vector<128x128xf32>, vector<128x128xf32>, vector<128x128xf32> -> vector<128x128xf32>
    %cst_56 = arith.constant 0.000000e+00 : f32
    %78 = vector.broadcast %cst_56 : f32 to vector<128x128xf32>
    %79 = arith.maximumf %77, %78 : vector<128x128xf32>
    %80 = vector.broadcast %4 : vector<128x1xf32> to vector<128x128xf32>
    %81 = arith.mulf %80, %79 : vector<128x128xf32>
    %cst_57 = arith.constant dense<0.000000e+00> : vector<128xf32>
    %82 = vector.multi_reduction <add>, %81, %cst_57 [0] : vector<128x128xf32> to vector<128xf32>
    %83 = vector.shape_cast %82 : vector<128xf32> to vector<1x128xf32>
    %c7_58 = arith.constant 7 : index
    %c0_59 = arith.constant 0 : index
    %84 = vector.load %arg9[%c7_58, %c0_59] : memref<8x128xf32, #tpu.memory_space<vmem>>, vector<1x128xf32>
    tpu.vector_store %arg9[%c7_58, %c0_59], %83 {strides = array<i32>} : memref<8x128xf32, #tpu.memory_space<vmem>>, vector<1x128xf32>,
    %c0_60 = arith.constant 0 : index
    %c0_61 = arith.constant 0 : index
    %85 = vector.load %arg9[%c0_60, %c0_61] : memref<8x128xf32, #tpu.memory_space<vmem>>, vector<8x128xf32>
    %cst_62 = arith.constant 0.000000e+00 : f32
    %86 = vector.broadcast %cst_62 : f32 to vector<8x128xf32>
    %87 = arith.addf %85, %86 : vector<8x128xf32>
    %cst_63 = arith.constant 0.999899983 : f32
    %88 = vector.broadcast %cst_63 : f32 to vector<8x128xf32>
    %89 = arith.mulf %87, %88 : vector<8x128xf32>
    %c0_64 = arith.constant 0 : index
    %c0_65 = arith.constant 0 : index
    %90 = vector.load %arg6[%c0_64, %c0_65] : memref<8x1xf32, #tpu.memory_space<vmem>>, vector<8x1xf32>
    %cst_66 = arith.constant dense<0xFF800000> : vector<8xf32>
    %91 = vector.multi_reduction <maximumf>, %89, %cst_66 [1] : vector<8x128xf32> to vector<8xf32>
    %92 = vector.shape_cast %91 : vector<8xf32> to vector<8x1xf32>
    %93 = arith.maximumf %90, %92 : vector<8x1xf32>
    %94 = arith.subf %90, %93 : vector<8x1xf32>
    %95 = math.exp %94 : vector<8x1xf32>
    %96 = vector.broadcast %93 : vector<8x1xf32> to vector<8x128xf32>
    %97 = arith.subf %89, %96 : vector<8x128xf32>
    %98 = math.exp %97 : vector<8x128xf32>
    %c0_67 = arith.constant 0 : index
    %c0_68 = arith.constant 0 : index
    %c0_69 = arith.constant 0 : index
    %99 = vector.load %arg4[%c0_67, %c0_68, %c0_69] : memref<8x128x128xf32, #tpu.memory_space<vmem>>, vector<8x128x128xf32>
    %c0_70 = arith.constant 0 : index
    %c0_71 = arith.constant 0 : index
    %100 = vector.load %arg8[%c0_70, %c0_71] : memref<8x128xf32, #tpu.memory_space<vmem>>, vector<8x128xf32>
    %101 = vector.broadcast %95 : vector<8x1xf32> to vector<8x128xf32>
    %102 = arith.mulf %101, %100 : vector<8x128xf32>
    %103 = vector.shape_cast %98 : vector<8x128xf32> to vector<8x1x128xf32>
    %104 = vector.broadcast %103 : vector<8x1x128xf32> to vector<8x128x128xf32>
    %105 = arith.mulf %99, %104 : vector<8x128x128xf32>
    %cst_72 = arith.constant dense<0.000000e+00> : vector<8x128xf32>
    %106 = vector.multi_reduction <add>, %105, %cst_72 [2] : vector<8x128x128xf32> to vector<8x128xf32>
    %107 = arith.addf %102, %106 : vector<8x128xf32>
    %c0_73 = arith.constant 0 : index
    %c0_74 = arith.constant 0 : index
    %108 = vector.load %arg8[%c0_73, %c0_74] : memref<8x128xf32, #tpu.memory_space<vmem>>, vector<8x128xf32>
    tpu.vector_store %arg8[%c0_73, %c0_74], %107 {strides = array<i32>} : memref<8x128xf32, #tpu.memory_space<vmem>>, vector<8x128xf32>,
    %c0_75 = arith.constant 0 : index
    %c0_76 = arith.constant 0 : index
    %109 = vector.load %arg7[%c0_75, %c0_76] : memref<8x1xf32, #tpu.memory_space<vmem>>, vector<8x1xf32>
    %110 = arith.mulf %95, %109 : vector<8x1xf32>
    %cst_77 = arith.constant dense<0.000000e+00> : vector<8xf32>
    %111 = vector.multi_reduction <add>, %98, %cst_77 [1] : vector<8x128xf32> to vector<8xf32>
    %112 = vector.shape_cast %111 : vector<8xf32> to vector<8x1xf32>
    %113 = arith.addf %110, %112 : vector<8x1xf32>
    %c0_78 = arith.constant 0 : index
    %c0_79 = arith.constant 0 : index
    %114 = vector.load %arg7[%c0_78, %c0_79] : memref<8x1xf32, #tpu.memory_space<vmem>>, vector<8x1xf32>
    tpu.vector_store %arg7[%c0_78, %c0_79], %113 {strides = array<i32>} : memref<8x1xf32, #tpu.memory_space<vmem>>, vector<8x1xf32>,
    %c0_80 = arith.constant 0 : index
    %c0_81 = arith.constant 0 : index
    %115 = vector.load %arg6[%c0_80, %c0_81] : memref<8x1xf32, #tpu.memory_space<vmem>>, vector<8x1xf32>
    tpu.vector_store %arg6[%c0_80, %c0_81], %93 {strides = array<i32>} : memref<8x1xf32, #tpu.memory_space<vmem>>, vector<8x1xf32>,
    %c1_i32 = arith.constant 1 : i32
    %116 = arith.cmpi eq, %arg1, %c1_i32 : i32
    %117 = arith.extui %116 : i1 to i32
    %c0_i32_82 = arith.constant 0 : i32
    %118 = arith.cmpi ne, %117, %c0_i32_82 : i32
    scf.if %118 {
      %c0_83 = arith.constant 0 : index
      %c0_84 = arith.constant 0 : index
      %119 = vector.load %arg7[%c0_83, %c0_84] : memref<8x1xf32, #tpu.memory_space<vmem>>, vector<8x1xf32>
      %120 = tpu.reciprocal %119 {approx = true} : vector<8x1xf32> -> vector<8x1xf32>
      %c0_85 = arith.constant 0 : index
      %c0_86 = arith.constant 0 : index
      %121 = vector.load %arg8[%c0_85, %c0_86] : memref<8x128xf32, #tpu.memory_space<vmem>>, vector<8x128xf32>
      %122 = vector.broadcast %120 : vector<8x1xf32> to vector<8x128xf32>
      %123 = arith.mulf %121, %122 : vector<8x128xf32>
      %c0_87 = arith.constant 0 : index
      %c0_88 = arith.constant 0 : index
      %124 = vector.load %arg5[%c0_87, %c0_88] : memref<8x128xf32, #tpu.memory_space<vmem>>, vector<8x128xf32>
      tpu.vector_store %arg5[%c0_87, %c0_88], %123 {strides = array<i32>} : memref<8x128xf32, #tpu.memory_space<vmem>>, vector<8x128xf32>,
    } else {
    }
    return
  }
  func.func @transform_0(%arg0: i32, %arg1: i32) -> (i32, i32) {
    %c0_i32 = arith.constant 0 : i32
    %c0_i32_0 = arith.constant 0 : i32
    %c0_i32_1 = arith.constant 0 : i32
    return %c0_i32, %c0_i32_0 : i32, i32
  }
  func.func @transform_1(%arg0: i32, %arg1: i32) -> (i32, i32) {
    %c0_i32 = arith.constant 0 : i32
    %c0_i32_0 = arith.constant 0 : i32
    %c0_i32_1 = arith.constant 0 : i32
    return %c0_i32, %c0_i32_0 : i32, i32
  }
  func.func @transform_2(%arg0: i32, %arg1: i32) -> (i32, i32, i32) {
    %c0_i32 = arith.constant 0 : i32
    %c0_i32_0 = arith.constant 0 : i32
    return %arg0, %c0_i32, %arg1 : i32, i32, i32
  }
  func.func @transform_3(%arg0: i32, %arg1: i32) -> (i32, i32) {
    %c0_i32 = arith.constant 0 : i32
    %c0_i32_0 = arith.constant 0 : i32
    return %arg0, %c0_i32 : i32, i32
  }
}

</mosaic_0001>

<llo_original>
// kernel: tpu_custom_call.1
$region0: #{tpu_custom_call.1}
  #allocation0 [shape = 'u32[]', space=smem, size = 0x4, offset = 0x4, fixed_abs, tag = 'smem constant byte address 0x4 - core index']
  #allocation1 [shape = 'u32[144,128]{1,0:T(1,128)}', space=vmem, size = 0x12000, scoped, tag = 'internal scratch']
  #allocation2 [shape = 'f32[8,1]{1,0:T(8,128)}', space=vmem, size = 0x1000, scoped, tag = 'scratch operand']
  #allocation3 [shape = 'f32[8,1]{1,0:T(8,128)}', space=vmem, size = 0x1000, scoped, tag = 'scratch operand']
  #allocation4 [shape = 'f32[8,128]{1,0:T(8,128)}', space=vmem, size = 0x1000, scoped, tag = 'scratch operand']
  #allocation5 [shape = 'f32[8,128]{1,0:T(8,128)}', space=vmem, size = 0x1000, scoped, tag = 'scratch operand']
  %s0 = inlined_call_operand.hbm [shape: f32[128,128], index: 0, kind: input, shape index: {}]
  %s1 = inlined_call_operand.vmem [shape: f32[128,1], index: 1, kind: input, shape index: {}]
  %s2 = inlined_call_operand.hbm [shape: f32[16,128,256], index: 2, kind: input, shape index: {}]
  %s3 = inlined_call_operand.hbm [shape: f32[16,128], index: 3, kind: output, shape index: {}]
  %s4 = sld [smem:[#allocation0]]
  $region61: #{tpu_custom_call.1} parent=0
    _
  %s6 = ssub.s32 1, %s4
  %s7 = scalar_select 0, %s6, %s4
  $region1: #{tpu_custom_call.1} parent=0
    #allocation6 [shape = 'u8[65536]{0}', space=vmem, size = 0x10000, scoped, tag = 'input window, operand 0, single buffered']
    #allocation7 [shape = 's32[2]{0}', space=sflag, size = 0x8, scoped, tag = 'scoped memory for tpu_custom_call.1']
    #allocation8 [shape = 's32[2]{0}', space=sflag, size = 0x8, scoped, tag = 'scoped memory for tpu_custom_call.1']
    #allocation9 [shape = 'u8[1048576]{0}', space=vmem, size = 0x100000, scoped, tag = 'input window, operand 2']
    #allocation10 [shape = 's32[2]{0}', space=sflag, size = 0x8, scoped, tag = 'scoped memory for tpu_custom_call.1']
    #allocation11 [shape = 'u8[8192]{0}', space=vmem, size = 0x2000, scoped, tag = 'output window, operand 0']
    %8 = vsyncpa [#allocation7], 0
    %9 = vsyncpa [#allocation10], 0
    %s10 = scalar_lea.sflag [#allocation10], 1
    %11 = vsyncpa %s10, 0
    %12 = vsyncpa [#allocation8], 0
    %s13 = scalar_lea.sflag [#allocation8], 1
    %14 = vsyncpa %s13, 0
    loop: start=0, step=1, limit=6
    $region2: #{tpu_custom_call.1} parent=1 // loop_pre_header
      _
    $region3: #{tpu_custom_call.1} parent=1 // loop_header
      %s16 = sphi 0, %s20
      %p17 = scmp.ge.s32.totalorder %s16, 6
      %s23 = sphi 0, %s35
      %s24 = sphi 0, %s31
      %s25 = sphi 0, %s23
      %s26 = sphi 0, %s24
      %s27 = sphi 0, %s25
      %s28 = sphi 0, %s26
      %s36 = sphi 0, %s36
      %s38 = sphi 0, %s36
      %s39 = sphi 0, %s38
      %s53 = sphi 0, %s39
      %s57 = sphi 0, %s57
      %s59 = sphi 0, %s57
      %s60 = sphi 0, %s59
      %s74 = sphi 0, %s60
      %s82 = sphi 0, %s84
      %s85 = sphi 0, %s82
      %s86 = sphi 0, %s85
      %s102 = sphi 0, %s86
      %s108 = sphi 0, %s110
      %s111 = sphi 0, %s108
      %s112 = sphi 0, %s111
      %s128 = sphi 0, %s112
    $region4: #{tpu_custom_call.1} parent=1 // loop_header_branch
      %19 = sbr.rel (%p17) target = $region8
    $region5: #{tpu_custom_call.1} parent=1 // loop_body
      %s21 = ssub.s32 %s16, 1
      %s22 = ssub.s32 %s16, 2
      %s29 = sadd.s32 1, %s24
      %p30 = scmp.ge.s32.totalorder %s29, 2
      %s31 = scalar_select %p30, 0, %s29
      %s32 = sadd.s32 1, %s23
      %s33 = scalar_select %p30, %s32, %s23
      %p34 = scmp.ge.s32.totalorder %s33, 2
      %s35 = scalar_select %p34, 0, %s33
      %s37 = sadd.s32 %s36, 1
      %p40 = scmp.eq.s32.totalorder %s16, 3
      %p41 = scmp.ne.s32.totalorder %s36, %s38
      %p42 = scmp.eq.s32.totalorder %s16, 0
      %p43 = por %p41, %p42
      %p44 = scmp.ne.s32.totalorder %s36, %s38
      %p45 = scmp.eq.s32.totalorder %s21, 3
      %p46 = por %p44, %p45
      %p47 = scmp.ne.s32.totalorder %s38, %s39
      %p48 = scmp.eq.s32.totalorder %s21, 0
      %p49 = por %p47, %p48
      %p50 = scmp.ne.s32.totalorder %s38, %s39
      %p51 = scmp.eq.s32.totalorder %s22, 3
      %p52 = por %p50, %p51
      %p54 = scmp.ne.s32.totalorder %s39, %s53
      %p55 = scmp.eq.s32.totalorder %s22, 0
      %p56 = por %p54, %p55
      %s58 = sadd.s32 %s57, 1
      %p61 = scmp.eq.s32.totalorder %s16, 3
      %p62 = scmp.ne.s32.totalorder %s57, %s59
      %p63 = scmp.eq.s32.totalorder %s16, 0
      %p64 = por %p62, %p63
      %p65 = scmp.ne.s32.totalorder %s57, %s59
      %p66 = scmp.eq.s32.totalorder %s21, 3
      %p67 = por %p65, %p66
      %p68 = scmp.ne.s32.totalorder %s59, %s60
      %p69 = scmp.eq.s32.totalorder %s21, 0
      %p70 = por %p68, %p69
      %p71 = scmp.ne.s32.totalorder %s59, %s60
      %p72 = scmp.eq.s32.totalorder %s22, 3
      %p73 = por %p71, %p72
      %p75 = scmp.ne.s32.totalorder %s60, %s74
      %p76 = scmp.eq.s32.totalorder %s22, 0
      %p77 = por %p75, %p76
      %s78 = ssub.s32 %s23, %s35
      %s79 = ssub.s32 %s24, %s31
      %s80 = sor.u32 %s78, %s79
      %p81 = scmp.eq.s32.totalorder %s80, 0
      %s83 = sadd.s32 %s82, 1
      %s84 = scalar_select %p81, %s82, %s83
      %p87 = pneg %p81
      %p88 = scmp.eq.s32.totalorder %s16, 3
      %p89 = por %p87, %p88
      %p90 = scmp.ne.s32.totalorder %s82, %s85
      %p91 = scmp.eq.s32.totalorder %s16, 0
      %p92 = por %p90, %p91
      %p93 = scmp.ne.s32.totalorder %s82, %s85
      %p94 = scmp.eq.s32.totalorder %s21, 3
      %p95 = por %p93, %p94
      %p96 = scmp.ne.s32.totalorder %s85, %s86
      %p97 = scmp.eq.s32.totalorder %s21, 0
      %p98 = por %p96, %p97
      %p99 = scmp.ne.s32.totalorder %s85, %s86
      %p100 = scmp.eq.s32.totalorder %s22, 3
      %p101 = por %p99, %p100
      %p103 = scmp.ne.s32.totalorder %s86, %s102
      %p104 = scmp.eq.s32.totalorder %s22, 0
      %p105 = por %p103, %p104
      %s106 = ssub.s32 %s23, %s35
      %p107 = scmp.eq.s32.totalorder %s106, 0
      %s109 = sadd.s32 %s108, 1
      %s110 = scalar_select %p107, %s108, %s109
      %p113 = pneg %p107
      %p114 = scmp.eq.s32.totalorder %s16, 3
      %p115 = por %p113, %p114
      %p116 = scmp.ne.s32.totalorder %s108, %s111
      %p117 = scmp.eq.s32.totalorder %s16, 0
      %p118 = por %p116, %p117
      %p119 = scmp.ne.s32.totalorder %s108, %s111
      %p120 = scmp.eq.s32.totalorder %s21, 3
      %p121 = por %p119, %p120
      %p122 = scmp.ne.s32.totalorder %s111, %s112
      %p123 = scmp.eq.s32.totalorder %s21, 0
      %p124 = por %p122, %p123
      %p125 = scmp.ne.s32.totalorder %s111, %s112
      %p126 = scmp.eq.s32.totalorder %s22, 3
      %p127 = por %p125, %p126
      %p129 = scmp.ne.s32.totalorder %s112, %s128
      %p130 = scmp.eq.s32.totalorder %s22, 0
      %p131 = por %p129, %p130
      %p132 = scmp.le.s32.totalorder 1, %s16
      %p133 = scmp.lt.s32.totalorder %s16, 5
      %p134 = pnand %p132, %p133
      %p135 = pneg %p134
      // Predicated region
      $region9: #{tpu_custom_call.1} parent=5 // pred_check
        _
      $region10: #{tpu_custom_call.1} parent=5 // pred_check_branch
        %137 = sbr.rel (%p134) target = $region12
      $region11: #{tpu_custom_call.1} parent=5 // pred_region
        %s138 = ssub.s32 %s16, 1
        // Predicated region
        $region13: #{tpu_custom_call.1} parent=11 // pred_check
          %p139 = pneg %p49
        $region14: #{tpu_custom_call.1} parent=11 // pred_check_branch
          %141 = sbr.rel (%p139) target = $region16
        $region15: #{tpu_custom_call.1} parent=11 // pred_region
          %s143 = ssub.s32 2048, 2048
          %144 = vsyncadd [#allocation7], %s143
          %s145 = sshll.u32 [#allocation6], 4
          %s146 = int_to_ptr.vmem [resolvable:$true] %s145
          %151 = dma.hbm_to_vmem [thread:$0]  %s0, 2048, %s146, [#allocation7], 128, 128, 8
        $region16: #{tpu_custom_call.1} parent=11 // pred_fallthru
          _
        // Predicated region
        $region17: #{tpu_custom_call.1} parent=11 // pred_check
          %p152 = pneg %p70
        $region18: #{tpu_custom_call.1} parent=11 // pred_check_branch
          %154 = sbr.rel (%p152) target = $region20
        $region19: #{tpu_custom_call.1} parent=11 // pred_region
          _
        $region20: #{tpu_custom_call.1} parent=11 // pred_fallthru
          _
      $region12: #{tpu_custom_call.1} parent=5 // pred_fallthru
        _
      %p155 = scmp.lt.s32.totalorder %s16, 4
      // Predicated region
      $region21: #{tpu_custom_call.1} parent=5 // pred_check
        %p156 = pneg %p155
      $region22: #{tpu_custom_call.1} parent=5 // pred_check_branch
        %158 = sbr.rel (%p156) target = $region24
      $region23: #{tpu_custom_call.1} parent=5 // pred_region
        // Predicated region
        $region25: #{tpu_custom_call.1} parent=23 // pred_check
          %p159 = pneg %p92
        $region26: #{tpu_custom_call.1} parent=23 // pred_check_branch
          %161 = sbr.rel (%p159) target = $region28
        $region27: #{tpu_custom_call.1} parent=23 // pred_region
          %s162 = sand.u32 %s82, 1
          %s163 = scalar_lea.sflag [#allocation10], %s162
          %s164 = sand.u32 %s82, 1
          %s165 = smul.addr %s164, 1024
          %s166 = scalar_lea.vmem [#allocation9], %s165
          %s167 = smul.u32 8, %s23
          %s169 = ssub.s32 16384, 16384
          %170 = vsyncadd %s163, %s169
          %s171 = smul.addr %s167, 32
          %s172 = sadd.s32 %s24, %s171
          %s173 = smul.addr %s172, 128
          %s174 = scalar_lea.hbm %s2, %s173
          %s175 = sshll.u32 %s166, 4
          %s176 = int_to_ptr.vmem [resolvable:$true] %s175
          %181 = dma.hbm_to_vmem [thread:$0]  %s174, 16384, %s176, %s163, 256, 128, 8
        $region28: #{tpu_custom_call.1} parent=23 // pred_fallthru
          _
      $region24: #{tpu_custom_call.1} parent=5 // pred_fallthru
        _
      %p182 = scmp.le.s32.totalorder 1, %s16
      %p183 = scmp.lt.s32.totalorder %s16, 5
      %p184 = pnand %p182, %p183
      %p185 = pneg %p184
      // Predicated region
      $region29: #{tpu_custom_call.1} parent=5 // pred_check
        _
      $region30: #{tpu_custom_call.1} parent=5 // pred_check_branch
        %187 = sbr.rel (%p184) target = $region32
      $region31: #{tpu_custom_call.1} parent=5 // pred_region
        %s188 = ssub.s32 %s16, 1
        // Predicated region
        $region33: #{tpu_custom_call.1} parent=31 // pred_check
          %p189 = pneg %p49
        $region34: #{tpu_custom_call.1} parent=31 // pred_check_branch
          %191 = sbr.rel (%p189) target = $region36
        $region35: #{tpu_custom_call.1} parent=31 // pred_region
          %192 = dma.done [#allocation7], 2048
        $region36: #{tpu_custom_call.1} parent=31 // pred_fallthru
          _
        %s193 = sand.u32 %s85, 1
        %s194 = scalar_lea.sflag [#allocation10], %s193
        %s195 = sand.u32 %s85, 1
        %s196 = smul.addr %s195, 1024
        %s197 = scalar_lea.vmem [#allocation9], %s196
        // Predicated region
        $region37: #{tpu_custom_call.1} parent=31 // pred_check
          %p198 = pneg %p98
        $region38: #{tpu_custom_call.1} parent=31 // pred_check_branch
          %200 = sbr.rel (%p198) target = $region40
        $region39: #{tpu_custom_call.1} parent=31 // pred_region
          %201 = dma.done %s194, 16384
        $region40: #{tpu_custom_call.1} parent=31 // pred_fallthru
          _
        %p202 = pneg %p49
        %p203 = pneg %p46
        %p204 = pneg %p70
        %p205 = pneg %p67
        %s206 = sand.u32 %s85, 1
        %s207 = scalar_lea.sflag [#allocation10], %s206
        %s208 = sand.u32 %s85, 1
        %s209 = smul.addr %s208, 1024
        %s210 = scalar_lea.vmem [#allocation9], %s209
        %p211 = pneg %p98
        %p212 = pneg %p95
        %p213 = pneg %p124
        %p214 = pneg %p121
        %s215 = sand.u32 %s111, 1
        %s216 = scalar_lea.sflag [#allocation8], %s215
        %s217 = sand.u32 %s111, 1
        %s218 = smul.addr %s217, 8
        %s219 = scalar_lea.vmem [#allocation11], %s218
        %s220 = smul.u32 8, %s25
        %p221 = scmp.eq.s32.totalorder %s26, 0
        // Predicated region
        $region41: #{tpu_custom_call.1} parent=31 // pred_check
          %p222 = pneg %p221
        $region42: #{tpu_custom_call.1} parent=31 // pred_check_branch
          %224 = sbr.rel (%p222) target = $region44
        $region43: #{tpu_custom_call.1} parent=31 // pred_region
          %vm225 = vcmask 7168
          %226 = vst.msk [vmem:[#allocation2] sm:$0xff] %vm225, -inf
          %227 = vst.msk [vmem:[#allocation3] sm:$0xff] %vm225, 0.0
          %228 = vst [vmem:[#allocation4] sm:$0xff] 0.0
        $region44: #{tpu_custom_call.1} parent=31 // pred_fallthru
          _
        %v229 = vld [vmem:[#allocation6] sm:$0xff]
        %v230 = vld [vmem:[#allocation6 + $0x8] sm:$0xff]
        %v231 = vld [vmem:[#allocation6 + $0x10] sm:$0xff]
        %v232 = vld [vmem:[#allocation6 + $0x18] sm:$0xff]
        %v233 = vld [vmem:[#allocation6 + $0x20] sm:$0xff]
        %v234 = vld [vmem:[#allocation6 + $0x28] sm:$0xff]
        %v235 = vld [vmem:[#allocation6 + $0x30] sm:$0xff]
        %v236 = vld [vmem:[#allocation6 + $0x38] sm:$0xff]
        %v237 = vld [vmem:[#allocation6 + $0x40] sm:$0xff]
        %v238 = vld [vmem:[#allocation6 + $0x48] sm:$0xff]
        %v239 = vld [vmem:[#allocation6 + $0x50] sm:$0xff]
        %v240 = vld [vmem:[#allocation6 + $0x58] sm:$0xff]
        %v241 = vld [vmem:[#allocation6 + $0x60] sm:$0xff]
        %v242 = vld [vmem:[#allocation6 + $0x68] sm:$0xff]
        %v243 = vld [vmem:[#allocation6 + $0x70] sm:$0xff]
        %v244 = vld [vmem:[#allocation6 + $0x78] sm:$0xff]
        %v245 = vld [vmem:[%s1] sm:$0xff]
        %v246 = vld [vmem:[%s1 + $0x8] sm:$0xff]
        %v247 = vld [vmem:[%s1 + $0x10] sm:$0xff]
        %v248 = vld [vmem:[%s1 + $0x18] sm:$0xff]
        %v249 = vld [vmem:[%s1 + $0x20] sm:$0xff]
        %v250 = vld [vmem:[%s1 + $0x28] sm:$0xff]
        %v251 = vld [vmem:[%s1 + $0x30] sm:$0xff]
        %v252 = vld [vmem:[%s1 + $0x38] sm:$0xff]
        %v253 = vld [vmem:[%s1 + $0x40] sm:$0xff]
        %v254 = vld [vmem:[%s1 + $0x48] sm:$0xff]
        %v255 = vld [vmem:[%s1 + $0x50] sm:$0xff]
        %v256 = vld [vmem:[%s1 + $0x58] sm:$0xff]
        %v257 = vld [vmem:[%s1 + $0x60] sm:$0xff]
        %v258 = vld [vmem:[%s1 + $0x68] sm:$0xff]
        %v259 = vld [vmem:[%s1 + $0x70] sm:$0xff]
        %v260 = vld [vmem:[%s1 + $0x78] sm:$0xff]
        %v261 = vld [vmem:[%s197] sm:$0xff]
        %v262 = vld [vmem:[%s197 + $0x8] sm:$0xff]
        %v263 = vld [vmem:[%s197 + $0x10] sm:$0xff]
        %v264 = vld [vmem:[%s197 + $0x18] sm:$0xff]
        %v265 = vld [vmem:[%s197 + $0x20] sm:$0xff]
        %v266 = vld [vmem:[%s197 + $0x28] sm:$0xff]
        %v267 = vld [vmem:[%s197 + $0x30] sm:$0xff]
        %v268 = vld [vmem:[%s197 + $0x38] sm:$0xff]
        %v269 = vld [vmem:[%s197 + $0x40] sm:$0xff]
        %v270 = vld [vmem:[%s197 + $0x48] sm:$0xff]
        %v271 = vld [vmem:[%s197 + $0x50] sm:$0xff]
        %v272 = vld [vmem:[%s197 + $0x58] sm:$0xff]
        %v273 = vld [vmem:[%s197 + $0x60] sm:$0xff]
        %v274 = vld [vmem:[%s197 + $0x68] sm:$0xff]
        %v275 = vld [vmem:[%s197 + $0x70] sm:$0xff]
        %v276 = vld [vmem:[%s197 + $0x78] sm:$0xff]
        %277 = vmatprep.subr.mxu0 0.0
        %278 = vmatpush1.msra.mxu0 %v261
        %279 = vmatprep.subr.mxu0 0.0
        %280 = vmatpush1.msra.mxu0 %v262
        %281 = vmatprep.subr.mxu0 0.0
        %282 = vmatpush1.msra.mxu0 %v263
        %283 = vmatprep.subr.mxu0 0.0
        %284 = vmatpush1.msra.mxu0 %v264
        %285 = vmatprep.subr.mxu0 0.0
        %286 = vmatpush1.msra.mxu0 %v265
        %287 = vmatprep.subr.mxu0 0.0
        %288 = vmatpush1.msra.mxu0 %v266
        %289 = vmatprep.subr.mxu0 0.0
        %290 = vmatpush1.msra.mxu0 %v267
        %291 = vmatprep.subr.mxu0 0.0
        %292 = vmatpush1.msra.mxu0 %v268
        %293 = vmatprep.subr.mxu0 0.0
        %294 = vmatpush1.msra.mxu0 %v269
        %295 = vmatprep.subr.mxu0 0.0
        %296 = vmatpush1.msra.mxu0 %v270
        %297 = vmatprep.subr.mxu0 0.0
        %298 = vmatpush1.msra.mxu0 %v271
        %299 = vmatprep.subr.mxu0 0.0
        %300 = vmatpush1.msra.mxu0 %v272
        %301 = vmatprep.subr.mxu0 0.0
        %302 = vmatpush1.msra.mxu0 %v273
        %303 = vmatprep.subr.mxu0 0.0
        %304 = vmatpush1.msra.mxu0 %v274
        %305 = vmatprep.subr.mxu0 0.0
        %306 = vmatpush1.msra.mxu0 %v275
        %307 = vmatprep.subr.mxu0 0.0
        %308 = vmatpush1.msra.mxu0 %v276
        %309 = vmatprep.subr.mxu0 0.0
        %310 = vmatpush1.msra.mxu0 0.0
        %311 = vmatprep.subr.mxu0 0.0
        %312 = vmatpush1.msra.mxu0 0.0
        %313 = vmatprep.subr.mxu0 0.0
        %314 = vmatpush1.msra.mxu0 0.0
        %315 = vmatprep.subr.mxu0 0.0
        %316 = vmatpush1.msra.mxu0 0.0
        %317 = vmatprep.subr.mxu0 0.0
        %318 = vmatpush1.msra.mxu0 0.0
        %319 = vmatprep.subr.mxu0 0.0
        %320 = vmatpush1.msra.mxu0 0.0
        %321 = vmatprep.subr.mxu0 0.0
        %322 = vmatpush1.msra.mxu0 0.0
        %323 = vmatprep.subr.mxu0 0.0
        %324 = vmatpush1.msra.mxu0 0.0
        %325 = vmatprep.subr.mxu0 0.0
        %326 = vmatpush1.msra.mxu0 0.0
        %327 = vmatprep.subr.mxu0 0.0
        %328 = vmatpush1.msra.mxu0 0.0
        %329 = vmatprep.subr.mxu0 0.0
        %330 = vmatpush1.msra.mxu0 0.0
        %331 = vmatprep.subr.mxu0 0.0
        %332 = vmatpush1.msra.mxu0 0.0
        %333 = vmatprep.subr.mxu0 0.0
        %334 = vmatpush1.msra.mxu0 0.0
        %335 = vmatprep.subr.mxu0 0.0
        %336 = vmatpush1.msra.mxu0 0.0
        %337 = vmatprep.subr.mxu0 0.0
        %338 = vmatpush1.msra.mxu0 0.0
        %339 = vmatprep.subr.mxu0 0.0
        %340 = vmatpush1.msra.mxu0 0.0
        %341 = vmatprep.mubr.f32.mxu0 0.0
        %342 = vmatmul.mubr.f32.gmra.mrb[0].mxu0 %v229
        %v343 = vpop.f32.mrb[0].mxu0
        %v344 = vadd.f32 0.0, %v343
        %v345 = vpop.f32.mrb[0].mxu0
        %346 = vmatprep.mubr.f32.mxu0 0.0
        %347 = vmatmul.mubr.f32.gmra.mrb[0].mxu0 %v230
        %v348 = vpop.f32.mrb[0].mxu0
        %v349 = vadd.f32 0.0, %v348
        %v350 = vpop.f32.mrb[0].mxu0
        %351 = vmatprep.mubr.f32.mxu0 0.0
        %352 = vmatmul.mubr.f32.gmra.mrb[0].mxu0 %v231
        %v353 = vpop.f32.mrb[0].mxu0
        %v354 = vadd.f32 0.0, %v353
        %v355 = vpop.f32.mrb[0].mxu0
        %356 = vmatprep.mubr.f32.mxu0 0.0
        %357 = vmatmul.mubr.f32.gmra.mrb[0].mxu0 %v232
        %v358 = vpop.f32.mrb[0].mxu0
        %v359 = vadd.f32 0.0, %v358
        %v360 = vpop.f32.mrb[0].mxu0
        %361 = vmatprep.mubr.f32.mxu0 0.0
        %362 = vmatmul.mubr.f32.gmra.mrb[0].mxu0 %v233
        %v363 = vpop.f32.mrb[0].mxu0
        %v364 = vadd.f32 0.0, %v363
        %v365 = vpop.f32.mrb[0].mxu0
        %366 = vmatprep.mubr.f32.mxu0 0.0
        %367 = vmatmul.mubr.f32.gmra.mrb[0].mxu0 %v234
        %v368 = vpop.f32.mrb[0].mxu0
        %v369 = vadd.f32 0.0, %v368
        %v370 = vpop.f32.mrb[0].mxu0
        %371 = vmatprep.mubr.f32.mxu0 0.0
        %372 = vmatmul.mubr.f32.gmra.mrb[0].mxu0 %v235
        %v373 = vpop.f32.mrb[0].mxu0
        %v374 = vadd.f32 0.0, %v373
        %v375 = vpop.f32.mrb[0].mxu0
        %376 = vmatprep.mubr.f32.mxu0 0.0
        %377 = vmatmul.mubr.f32.gmra.mrb[0].mxu0 %v236
        %v378 = vpop.f32.mrb[0].mxu0
        %v379 = vadd.f32 0.0, %v378
        %v380 = vpop.f32.mrb[0].mxu0
        %381 = vmatprep.mubr.f32.mxu0 0.0
        %382 = vmatmul.mubr.f32.gmra.mrb[0].mxu0 %v237
        %v383 = vpop.f32.mrb[0].mxu0
        %v384 = vadd.f32 0.0, %v383
        %v385 = vpop.f32.mrb[0].mxu0
        %386 = vmatprep.mubr.f32.mxu0 0.0
        %387 = vmatmul.mubr.f32.gmra.mrb[0].mxu0 %v238
        %v388 = vpop.f32.mrb[0].mxu0
        %v389 = vadd.f32 0.0, %v388
        %v390 = vpop.f32.mrb[0].mxu0
        %391 = vmatprep.mubr.f32.mxu0 0.0
        %392 = vmatmul.mubr.f32.gmra.mrb[0].mxu0 %v239
        %v393 = vpop.f32.mrb[0].mxu0
        %v394 = vadd.f32 0.0, %v393
        %v395 = vpop.f32.mrb[0].mxu0
        %396 = vmatprep.mubr.f32.mxu0 0.0
        %397 = vmatmul.mubr.f32.gmra.mrb[0].mxu0 %v240
        %v398 = vpop.f32.mrb[0].mxu0
        %v399 = vadd.f32 0.0, %v398
        %v400 = vpop.f32.mrb[0].mxu0
        %401 = vmatprep.mubr.f32.mxu0 0.0
        %402 = vmatmul.mubr.f32.gmra.mrb[0].mxu0 %v241
        %v403 = vpop.f32.mrb[0].mxu0
        %v404 = vadd.f32 0.0, %v403
        %v405 = vpop.f32.mrb[0].mxu0
        %406 = vmatprep.mubr.f32.mxu0 0.0
        %407 = vmatmul.mubr.f32.gmra.mrb[0].mxu0 %v242
        %v408 = vpop.f32.mrb[0].mxu0
        %v409 = vadd.f32 0.0, %v408
        %v410 = vpop.f32.mrb[0].mxu0
        %411 = vmatprep.mubr.f32.mxu0 0.0
        %412 = vmatmul.mubr.f32.gmra.mrb[0].mxu0 %v243
        %v413 = vpop.f32.mrb[0].mxu0
        %v414 = vadd.f32 0.0, %v413
        %v415 = vpop.f32.mrb[0].mxu0
        %416 = vmatprep.mubr.f32.mxu0 0.0
        %417 = vmatmul.mubr.f32.gmra.mrb[0].mxu0 %v244
        %v418 = vpop.f32.mrb[0].mxu0
        %v419 = vadd.f32 0.0, %v418
        %v420 = vpop.f32.mrb[0].mxu0
        %421 = vdwg.mxu0
        %v422 = vmax.f32 %v344, 0.0
        %v423 = vmax.f32 %v349, 0.0
        %v424 = vmax.f32 %v354, 0.0
        %v425 = vmax.f32 %v359, 0.0
        %v426 = vmax.f32 %v364, 0.0
        %v427 = vmax.f32 %v369, 0.0
        %v428 = vmax.f32 %v374, 0.0
        %v429 = vmax.f32 %v379, 0.0
        %v430 = vmax.f32 %v384, 0.0
        %v431 = vmax.f32 %v389, 0.0
        %v432 = vmax.f32 %v394, 0.0
        %v433 = vmax.f32 %v399, 0.0
        %v434 = vmax.f32 %v404, 0.0
        %v435 = vmax.f32 %v409, 0.0
        %v436 = vmax.f32 %v414, 0.0
        %v437 = vmax.f32 %v419, 0.0
        %439 = vset.pattern.permute.xlu0 0
        %440 = vperm.xlu0 %439, %v245
        %v441 = vpop.permute.xlu0 %440
        %444 = vset.pattern.permute.xlu0 0
        %445 = vperm.xlu0 %444, %v246
        %v446 = vpop.permute.xlu0 %445
        %449 = vset.pattern.permute.xlu0 0
        %450 = vperm.xlu0 %449, %v247
        %v451 = vpop.permute.xlu0 %450
        %454 = vset.pattern.permute.xlu0 0
        %455 = vperm.xlu0 %454, %v248
        %v456 = vpop.permute.xlu0 %455
        %459 = vset.pattern.permute.xlu0 0
        %460 = vperm.xlu0 %459, %v249
        %v461 = vpop.permute.xlu0 %460
        %464 = vset.pattern.permute.xlu0 0
        %465 = vperm.xlu0 %464, %v250
        %v466 = vpop.permute.xlu0 %465
        %469 = vset.pattern.permute.xlu0 0
        %470 = vperm.xlu0 %469, %v251
        %v471 = vpop.permute.xlu0 %470
        %474 = vset.pattern.permute.xlu0 0
        %475 = vperm.xlu0 %474, %v252
        %v476 = vpop.permute.xlu0 %475
        %479 = vset.pattern.permute.xlu0 0
        %480 = vperm.xlu0 %479, %v253
        %v481 = vpop.permute.xlu0 %480
        %484 = vset.pattern.permute.xlu0 0
        %485 = vperm.xlu0 %484, %v254
        %v486 = vpop.permute.xlu0 %485
        %489 = vset.pattern.permute.xlu0 0
        %490 = vperm.xlu0 %489, %v255
        %v491 = vpop.permute.xlu0 %490
        %494 = vset.pattern.permute.xlu0 0
        %495 = vperm.xlu0 %494, %v256
        %v496 = vpop.permute.xlu0 %495
        %499 = vset.pattern.permute.xlu0 0
        %500 = vperm.xlu0 %499, %v257
        %v501 = vpop.permute.xlu0 %500
        %504 = vset.pattern.permute.xlu0 0
        %505 = vperm.xlu0 %504, %v258
        %v506 = vpop.permute.xlu0 %505
        %509 = vset.pattern.permute.xlu0 0
        %510 = vperm.xlu0 %509, %v259
        %v511 = vpop.permute.xlu0 %510
        %514 = vset.pattern.permute.xlu0 0
        %515 = vperm.xlu0 %514, %v260
        %v516 = vpop.permute.xlu0 %515
        %v518 = vmul.f32 %v441, %v422
        %v519 = vmul.f32 %v446, %v423
        %v520 = vmul.f32 %v451, %v424
        %v521 = vmul.f32 %v456, %v425
        %v522 = vmul.f32 %v461, %v426
        %v523 = vmul.f32 %v466, %v427
        %v524 = vmul.f32 %v471, %v428
        %v525 = vmul.f32 %v476, %v429
        %v526 = vmul.f32 %v481, %v430
        %v527 = vmul.f32 %v486, %v431
        %v528 = vmul.f32 %v491, %v432
        %v529 = vmul.f32 %v496, %v433
        %v530 = vmul.f32 %v501, %v434
        %v531 = vmul.f32 %v506, %v435
        %v532 = vmul.f32 %v511, %v436
        %v533 = vmul.f32 %v516, %v437
        %v534 = vadd.f32 %v518, %v519
        %v535 = vadd.f32 %v534, %v520
        %v536 = vadd.f32 %v535, %v521
        %v537 = vadd.f32 %v536, %v522
        %v538 = vadd.f32 %v537, %v523
        %v539 = vadd.f32 %v538, %v524
        %v540 = vadd.f32 %v539, %v525
        %v541 = vadd.f32 %v540, %v526
        %v542 = vadd.f32 %v541, %v527
        %v543 = vadd.f32 %v542, %v528
        %v544 = vadd.f32 %v543, %v529
        %v545 = vadd.f32 %v544, %v530
        %v546 = vadd.f32 %v545, %v531
        %v547 = vadd.f32 %v546, %v532
        %v548 = vadd.f32 %v547, %v533
        %v549 = vrot.slane %v548, 4
        %v550 = vadd.f32 %v548, %v549
        %v551 = vrot.slane %v550, 2
        %v552 = vadd.f32 %v550, %v551
        %v553 = vrot.slane %v552, 1
        %v554 = vadd.f32 %v552, %v553
        %555 = vst [vmem:[#allocation5] sm:$0x1] %v554
        %s556 = scalar_lea.vmem %s197, 128 [#allocation9]
        %v557 = vld [vmem:[%s556] sm:$0xff]
        %v558 = vld [vmem:[%s556 + $0x8] sm:$0xff]
        %v559 = vld [vmem:[%s556 + $0x10] sm:$0xff]
        %v560 = vld [vmem:[%s556 + $0x18] sm:$0xff]
        %v561 = vld [vmem:[%s556 + $0x20] sm:$0xff]
        %v562 = vld [vmem:[%s556 + $0x28] sm:$0xff]
        %v563 = vld [vmem:[%s556 + $0x30] sm:$0xff]
        %v564 = vld [vmem:[%s556 + $0x38] sm:$0xff]
        %v565 = vld [vmem:[%s556 + $0x40] sm:$0xff]
        %v566 = vld [vmem:[%s556 + $0x48] sm:$0xff]
        %v567 = vld [vmem:[%s556 + $0x50] sm:$0xff]
        %v568 = vld [vmem:[%s556 + $0x58] sm:$0xff]
        %v569 = vld [vmem:[%s556 + $0x60] sm:$0xff]
        %v570 = vld [vmem:[%s556 + $0x68] sm:$0xff]
        %v571 = vld [vmem:[%s556 + $0x70] sm:$0xff]
        %v572 = vld [vmem:[%s556 + $0x78] sm:$0xff]
        %573 = vmatprep.subr.mxu0 0.0
        %574 = vmatpush1.msra.mxu0 %v557
        %575 = vmatprep.subr.mxu0 0.0
        %576 = vmatpush1.msra.mxu0 %v558
        %577 = vmatprep.subr.mxu0 0.0
        %578 = vmatpush1.msra.mxu0 %v559
        %579 = vmatprep.subr.mxu0 0.0
        %580 = vmatpush1.msra.mxu0 %v560
        %581 = vmatprep.subr.mxu0 0.0
        %582 = vmatpush1.msra.mxu0 %v561
        %583 = vmatprep.subr.mxu0 0.0
        %584 = vmatpush1.msra.mxu0 %v562
        %585 = vmatprep.subr.mxu0 0.0
        %586 = vmatpush1.msra.mxu0 %v563
        %587 = vmatprep.subr.mxu0 0.0
        %588 = vmatpush1.msra.mxu0 %v564
        %589 = vmatprep.subr.mxu0 0.0
        %590 = vmatpush1.msra.mxu0 %v565
        %591 = vmatprep.subr.mxu0 0.0
        %592 = vmatpush1.msra.mxu0 %v566
        %593 = vmatprep.subr.mxu0 0.0
        %594 = vmatpush1.msra.mxu0 %v567
        %595 = vmatprep.subr.mxu0 0.0
        %596 = vmatpush1.msra.mxu0 %v568
        %597 = vmatprep.subr.mxu0 0.0
        %598 = vmatpush1.msra.mxu0 %v569
        %599 = vmatprep.subr.mxu0 0.0
        %600 = vmatpush1.msra.mxu0 %v570
        %601 = vmatprep.subr.mxu0 0.0
        %602 = vmatpush1.msra.mxu0 %v571
        %603 = vmatprep.subr.mxu0 0.0
        %604 = vmatpush1.msra.mxu0 %v572
        %605 = vmatprep.subr.mxu0 0.0
        %606 = vmatpush1.msra.mxu0 0.0
        %607 = vmatprep.subr.mxu0 0.0
        %608 = vmatpush1.msra.mxu0 0.0
        %609 = vmatprep.subr.mxu0 0.0
        %610 = vmatpush1.msra.mxu0 0.0
        %611 = vmatprep.subr.mxu0 0.0
        %612 = vmatpush1.msra.mxu0 0.0
        %613 = vmatprep.subr.mxu0 0.0
        %614 = vmatpush1.msra.mxu0 0.0
        %615 = vmatprep.subr.mxu0 0.0
        %616 = vmatpush1.msra.mxu0 0.0
        %617 = vmatprep.subr.mxu0 0.0
        %618 = vmatpush1.msra.mxu0 0.0
        %619 = vmatprep.subr.mxu0 0.0
        %620 = vmatpush1.msra.mxu0 0.0
        %621 = vmatprep.subr.mxu0 0.0
        %622 = vmatpush1.msra.mxu0 0.0
        %623 = vmatprep.subr.mxu0 0.0
        %624 = vmatpush1.msra.mxu0 0.0
        %625 = vmatprep.subr.mxu0 0.0
        %626 = vmatpush1.msra.mxu0 0.0
        %627 = vmatprep.subr.mxu0 0.0
        %628 = vmatpush1.msra.mxu0 0.0
        %629 = vmatprep.subr.mxu0 0.0
        %630 = vmatpush1.msra.mxu0 0.0
        %631 = vmatprep.subr.mxu0 0.0
        %632 = vmatpush1.msra.mxu0 0.0
        %633 = vmatprep.subr.mxu0 0.0
        %634 = vmatpush1.msra.mxu0 0.0
        %635 = vmatprep.subr.mxu0 0.0
        %636 = vmatpush1.msra.mxu0 0.0
        %637 = vmatprep.mubr.f32.mxu0 0.0
        %638 = vmatmul.mubr.f32.gmra.mrb[0].mxu0 %v229
        %v639 = vpop.f32.mrb[0].mxu0
        %v640 = vadd.f32 0.0, %v639
        %v641 = vpop.f32.mrb[0].mxu0
        %642 = vmatprep.mubr.f32.mxu0 0.0
        %643 = vmatmul.mubr.f32.gmra.mrb[0].mxu0 %v230
        %v644 = vpop.f32.mrb[0].mxu0
        %v645 = vadd.f32 0.0, %v644
        %v646 = vpop.f32.mrb[0].mxu0
        %647 = vmatprep.mubr.f32.mxu0 0.0
        %648 = vmatmul.mubr.f32.gmra.mrb[0].mxu0 %v231
        %v649 = vpop.f32.mrb[0].mxu0
        %v650 = vadd.f32 0.0, %v649
        %v651 = vpop.f32.mrb[0].mxu0
        %652 = vmatprep.mubr.f32.mxu0 0.0
        %653 = vmatmul.mubr.f32.gmra.mrb[0].mxu0 %v232
        %v654 = vpop.f32.mrb[0].mxu0
        %v655 = vadd.f32 0.0, %v654
        %v656 = vpop.f32.mrb[0].mxu0
        %657 = vmatprep.mubr.f32.mxu0 0.0
        %658 = vmatmul.mubr.f32.gmra.mrb[0].mxu0 %v233
        %v659 = vpop.f32.mrb[0].mxu0
        %v660 = vadd.f32 0.0, %v659
        %v661 = vpop.f32.mrb[0].mxu0
        %662 = vmatprep.mubr.f32.mxu0 0.0
        %663 = vmatmul.mubr.f32.gmra.mrb[0].mxu0 %v234
        %v664 = vpop.f32.mrb[0].mxu0
        %v665 = vadd.f32 0.0, %v664
        %v666 = vpop.f32.mrb[0].mxu0
        %667 = vmatprep.mubr.f32.mxu0 0.0
        %668 = vmatmul.mubr.f32.gmra.mrb[0].mxu0 %v235
        %v669 = vpop.f32.mrb[0].mxu0
        %v670 = vadd.f32 0.0, %v669
        %v671 = vpop.f32.mrb[0].mxu0
        %672 = vmatprep.mubr.f32.mxu0 0.0
        %673 = vmatmul.mubr.f32.gmra.mrb[0].mxu0 %v236
        %v674 = vpop.f32.mrb[0].mxu0
        %v675 = vadd.f32 0.0, %v674
        %v676 = vpop.f32.mrb[0].mxu0
        %677 = vmatprep.mubr.f32.mxu0 0.0
        %678 = vmatmul.mubr.f32.gmra.mrb[0].mxu0 %v237
        %v679 = vpop.f32.mrb[0].mxu0
        %v680 = vadd.f32 0.0, %v679
        %v681 = vpop.f32.mrb[0].mxu0
        %682 = vmatprep.mubr.f32.mxu0 0.0
        %683 = vmatmul.mubr.f32.gmra.mrb[0].mxu0 %v238
        %v684 = vpop.f32.mrb[0].mxu0
        %v685 = vadd.f32 0.0, %v684
        %v686 = vpop.f32.mrb[0].mxu0
        %687 = vmatprep.mubr.f32.mxu0 0.0
        %688 = vmatmul.mubr.f32.gmra.mrb[0].mxu0 %v239
        %v689 = vpop.f32.mrb[0].mxu0
        %v690 = vadd.f32 0.0, %v689
        %v691 = vpop.f32.mrb[0].mxu0
        %692 = vmatprep.mubr.f32.mxu0 0.0
        %693 = vmatmul.mubr.f32.gmra.mrb[0].mxu0 %v240
        %v694 = vpop.f32.mrb[0].mxu0
        %v695 = vadd.f32 0.0, %v694
        %v696 = vpop.f32.mrb[0].mxu0
        %697 = vmatprep.mubr.f32.mxu0 0.0
        %698 = vmatmul.mubr.f32.gmra.mrb[0].mxu0 %v241
        %v699 = vpop.f32.mrb[0].mxu0
        %v700 = vadd.f32 0.0, %v699
        %v701 = vpop.f32.mrb[0].mxu0
        %702 = vmatprep.mubr.f32.mxu0 0.0
        %703 = vmatmul.mubr.f32.gmra.mrb[0].mxu0 %v242
        %v704 = vpop.f32.mrb[0].mxu0
        %v705 = vadd.f32 0.0, %v704
        %v706 = vpop.f32.mrb[0].mxu0
        %707 = vmatprep.mubr.f32.mxu0 0.0
        %708 = vmatmul.mubr.f32.gmra.mrb[0].mxu0 %v243
        %v709 = vpop.f32.mrb[0].mxu0
        %v710 = vadd.f32 0.0, %v709
        %v711 = vpop.f32.mrb[0].mxu0
        %712 = vmatprep.mubr.f32.mxu0 0.0
        %713 = vmatmul.mubr.f32.gmra.mrb[0].mxu0 %v244
        %v714 = vpop.f32.mrb[0].mxu0
        %v715 = vadd.f32 0.0, %v714
        %v716 = vpop.f32.mrb[0].mxu0
        %717 = vdwg.mxu0
        %v718 = vmax.f32 %v640, 0.0
        %v719 = vmax.f32 %v645, 0.0
        %v720 = vmax.f32 %v650, 0.0
        %v721 = vmax.f32 %v655, 0.0
        %v722 = vmax.f32 %v660, 0.0
        %v723 = vmax.f32 %v665, 0.0
        %v724 = vmax.f32 %v670, 0.0
        %v725 = vmax.f32 %v675, 0.0
        %v726 = vmax.f32 %v680, 0.0
        %v727 = vmax.f32 %v685, 0.0
        %v728 = vmax.f32 %v690, 0.0
        %v729 = vmax.f32 %v695, 0.0
        %v730 = vmax.f32 %v700, 0.0
        %v731 = vmax.f32 %v705, 0.0
        %v732 = vmax.f32 %v710, 0.0
        %v733 = vmax.f32 %v715, 0.0
        %v734 = vmul.f32 %v441, %v718
        %v735 = vmul.f32 %v446, %v719
        %v736 = vmul.f32 %v451, %v720
        %v737 = vmul.f32 %v456, %v721
        %v738 = vmul.f32 %v461, %v722
        %v739 = vmul.f32 %v466, %v723
        %v740 = vmul.f32 %v471, %v724
        %v741 = vmul.f32 %v476, %v725
        %v742 = vmul.f32 %v481, %v726
        %v743 = vmul.f32 %v486, %v727
        %v744 = vmul.f32 %v491, %v728
        %v745 = vmul.f32 %v496, %v729
        %v746 = vmul.f32 %v501, %v730
        %v747 = vmul.f32 %v506, %v731
        %v748 = vmul.f32 %v511, %v732
        %v749 = vmul.f32 %v516, %v733
        %v750 = vadd.f32 %v734, %v735
        %v751 = vadd.f32 %v750, %v736
        %v752 = vadd.f32 %v751, %v737
        %v753 = vadd.f32 %v752, %v738
        %v754 = vadd.f32 %v753, %v739
        %v755 = vadd.f32 %v754, %v740
        %v756 = vadd.f32 %v755, %v741
        %v757 = vadd.f32 %v756, %v742
        %v758 = vadd.f32 %v757, %v743
        %v759 = vadd.f32 %v758, %v744
        %v760 = vadd.f32 %v759, %v745
        %v761 = vadd.f32 %v760, %v746
        %v762 = vadd.f32 %v761, %v747
        %v763 = vadd.f32 %v762, %v748
        %v764 = vadd.f32 %v763, %v749
        %v765 = vrot.slane %v764, 4
        %v766 = vadd.f32 %v764, %v765
        %v767 = vrot.slane %v766, 2
        %v768 = vadd.f32 %v766, %v767
        %v769 = vrot.slane %v768, 1
        %v770 = vadd.f32 %v768, %v769
        %771 = vst [vmem:[#allocation5 + $0x1] sm:$0x1] %v770
        %s772 = scalar_lea.vmem %s197, 256 [#allocation9]
        %v773 = vld [vmem:[%s772] sm:$0xff]
        %v774 = vld [vmem:[%s772 + $0x8] sm:$0xff]
        %v775 = vld [vmem:[%s772 + $0x10] sm:$0xff]
        %v776 = vld [vmem:[%s772 + $0x18] sm:$0xff]
        %v777 = vld [vmem:[%s772 + $0x20] sm:$0xff]
        %v778 = vld [vmem:[%s772 + $0x28] sm:$0xff]
        %v779 = vld [vmem:[%s772 + $0x30] sm:$0xff]
        %v780 = vld [vmem:[%s772 + $0x38] sm:$0xff]
        %v781 = vld [vmem:[%s772 + $0x40] sm:$0xff]
        %v782 = vld [vmem:[%s772 + $0x48] sm:$0xff]
        %v783 = vld [vmem:[%s772 + $0x50] sm:$0xff]
        %v784 = vld [vmem:[%s772 + $0x58] sm:$0xff]
        %v785 = vld [vmem:[%s772 + $0x60] sm:$0xff]
        %v786 = vld [vmem:[%s772 + $0x68] sm:$0xff]
        %v787 = vld [vmem:[%s772 + $0x70] sm:$0xff]
        %v788 = vld [vmem:[%s772 + $0x78] sm:$0xff]
        %789 = vmatprep.subr.mxu0 0.0
        %790 = vmatpush1.msra.mxu0 %v773
        %791 = vmatprep.subr.mxu0 0.0
        %792 = vmatpush1.msra.mxu0 %v774
        %793 = vmatprep.subr.mxu0 0.0
        %794 = vmatpush1.msra.mxu0 %v775
        %795 = vmatprep.subr.mxu0 0.0
        %796 = vmatpush1.msra.mxu0 %v776
        %797 = vmatprep.subr.mxu0 0.0
        %798 = vmatpush1.msra.mxu0 %v777
        %799 = vmatprep.subr.mxu0 0.0
        %800 = vmatpush1.msra.mxu0 %v778
        %801 = vmatprep.subr.mxu0 0.0
        %802 = vmatpush1.msra.mxu0 %v779
        %803 = vmatprep.subr.mxu0 0.0
        %804 = vmatpush1.msra.mxu0 %v780
        %805 = vmatprep.subr.mxu0 0.0
        %806 = vmatpush1.msra.mxu0 %v781
        %807 = vmatprep.subr.mxu0 0.0
        %808 = vmatpush1.msra.mxu0 %v782
        %809 = vmatprep.subr.mxu0 0.0
        %810 = vmatpush1.msra.mxu0 %v783
        %811 = vmatprep.subr.mxu0 0.0
        %812 = vmatpush1.msra.mxu0 %v784
        %813 = vmatprep.subr.mxu0 0.0
        %814 = vmatpush1.msra.mxu0 %v785
        %815 = vmatprep.subr.mxu0 0.0
        %816 = vmatpush1.msra.mxu0 %v786
        %817 = vmatprep.subr.mxu0 0.0
        %818 = vmatpush1.msra.mxu0 %v787
        %819 = vmatprep.subr.mxu0 0.0
        %820 = vmatpush1.msra.mxu0 %v788
        %821 = vmatprep.subr.mxu0 0.0
        %822 = vmatpush1.msra.mxu0 0.0
        %823 = vmatprep.subr.mxu0 0.0
        %824 = vmatpush1.msra.mxu0 0.0
        %825 = vmatprep.subr.mxu0 0.0
        %826 = vmatpush1.msra.mxu0 0.0
        %827 = vmatprep.subr.mxu0 0.0
        %828 = vmatpush1.msra.mxu0 0.0
        %829 = vmatprep.subr.mxu0 0.0
        %830 = vmatpush1.msra.mxu0 0.0
        %831 = vmatprep.subr.mxu0 0.0
        %832 = vmatpush1.msra.mxu0 0.0
        %833 = vmatprep.subr.mxu0 0.0
        %834 = vmatpush1.msra.mxu0 0.0
        %835 = vmatprep.subr.mxu0 0.0
        %836 = vmatpush1.msra.mxu0 0.0
        %837 = vmatprep.subr.mxu0 0.0
        %838 = vmatpush1.msra.mxu0 0.0
        %839 = vmatprep.subr.mxu0 0.0
        %840 = vmatpush1.msra.mxu0 0.0
        %841 = vmatprep.subr.mxu0 0.0
        %842 = vmatpush1.msra.mxu0 0.0
        %843 = vmatprep.subr.mxu0 0.0
        %844 = vmatpush1.msra.mxu0 0.0
        %845 = vmatprep.subr.mxu0 0.0
        %846 = vmatpush1.msra.mxu0 0.0
        %847 = vmatprep.subr.mxu0 0.0
        %848 = vmatpush1.msra.mxu0 0.0
        %849 = vmatprep.subr.mxu0 0.0
        %850 = vmatpush1.msra.mxu0 0.0
        %851 = vmatprep.subr.mxu0 0.0
        %852 = vmatpush1.msra.mxu0 0.0
        %853 = vmatprep.mubr.f32.mxu0 0.0
        %854 = vmatmul.mubr.f32.gmra.mrb[0].mxu0 %v229
        %v855 = vpop.f32.mrb[0].mxu0
        %v856 = vadd.f32 0.0, %v855
        %v857 = vpop.f32.mrb[0].mxu0
        %858 = vmatprep.mubr.f32.mxu0 0.0
        %859 = vmatmul.mubr.f32.gmra.mrb[0].mxu0 %v230
        %v860 = vpop.f32.mrb[0].mxu0
        %v861 = vadd.f32 0.0, %v860
        %v862 = vpop.f32.mrb[0].mxu0
        %863 = vmatprep.mubr.f32.mxu0 0.0
        %864 = vmatmul.mubr.f32.gmra.mrb[0].mxu0 %v231
        %v865 = vpop.f32.mrb[0].mxu0
        %v866 = vadd.f32 0.0, %v865
        %v867 = vpop.f32.mrb[0].mxu0
        %868 = vmatprep.mubr.f32.mxu0 0.0
        %869 = vmatmul.mubr.f32.gmra.mrb[0].mxu0 %v232
        %v870 = vpop.f32.mrb[0].mxu0
        %v871 = vadd.f32 0.0, %v870
        %v872 = vpop.f32.mrb[0].mxu0
        %873 = vmatprep.mubr.f32.mxu0 0.0
        %874 = vmatmul.mubr.f32.gmra.mrb[0].mxu0 %v233
        %v875 = vpop.f32.mrb[0].mxu0
        %v876 = vadd.f32 0.0, %v875
        %v877 = vpop.f32.mrb[0].mxu0
        %878 = vmatprep.mubr.f32.mxu0 0.0
        %879 = vmatmul.mubr.f32.gmra.mrb[0].mxu0 %v234
        %v880 = vpop.f32.mrb[0].mxu0
        %v881 = vadd.f32 0.0, %v880
        %v882 = vpop.f32.mrb[0].mxu0
        %883 = vmatprep.mubr.f32.mxu0 0.0
        %884 = vmatmul.mubr.f32.gmra.mrb[0].mxu0 %v235
        %v885 = vpop.f32.mrb[0].mxu0
        %v886 = vadd.f32 0.0, %v885
        %v887 = vpop.f32.mrb[0].mxu0
        %888 = vmatprep.mubr.f32.mxu0 0.0
        %889 = vmatmul.mubr.f32.gmra.mrb[0].mxu0 %v236
        %v890 = vpop.f32.mrb[0].mxu0
        %v891 = vadd.f32 0.0, %v890
        %v892 = vpop.f32.mrb[0].mxu0
        %893 = vmatprep.mubr.f32.mxu0 0.0
        %894 = vmatmul.mubr.f32.gmra.mrb[0].mxu0 %v237
        %v895 = vpop.f32.mrb[0].mxu0
        %v896 = vadd.f32 0.0, %v895
        %v897 = vpop.f32.mrb[0].mxu0
        %898 = vmatprep.mubr.f32.mxu0 0.0
        %899 = vmatmul.mubr.f32.gmra.mrb[0].mxu0 %v238
        %v900 = vpop.f32.mrb[0].mxu0
        %v901 = vadd.f32 0.0, %v900
        %v902 = vpop.f32.mrb[0].mxu0
        %903 = vmatprep.mubr.f32.mxu0 0.0
        %904 = vmatmul.mubr.f32.gmra.mrb[0].mxu0 %v239
        %v905 = vpop.f32.mrb[0].mxu0
        %v906 = vadd.f32 0.0, %v905
        %v907 = vpop.f32.mrb[0].mxu0
        %908 = vmatprep.mubr.f32.mxu0 0.0
        %909 = vmatmul.mubr.f32.gmra.mrb[0].mxu0 %v240
        %v910 = vpop.f32.mrb[0].mxu0
        %v911 = vadd.f32 0.0, %v910
        %v912 = vpop.f32.mrb[0].mxu0
        %913 = vmatprep.mubr.f32.mxu0 0.0
        %914 = vmatmul.mubr.f32.gmra.mrb[0].mxu0 %v241
        %v915 = vpop.f32.mrb[0].mxu0
        %v916 = vadd.f32 0.0, %v915
        %v917 = vpop.f32.mrb[0].mxu0
        %918 = vmatprep.mubr.f32.mxu0 0.0
        %919 = vmatmul.mubr.f32.gmra.mrb[0].mxu0 %v242
        %v920 = vpop.f32.mrb[0].mxu0
        %v921 = vadd.f32 0.0, %v920
        %v922 = vpop.f32.mrb[0].mxu0
        %923 = vmatprep.mubr.f32.mxu0 0.0
        %924 = vmatmul.mubr.f32.gmra.mrb[0].mxu0 %v243
        %v925 = vpop.f32.mrb[0].mxu0
        %v926 = vadd.f32 0.0, %v925
        %v927 = vpop.f32.mrb[0].mxu0
        %928 = vmatprep.mubr.f32.mxu0 0.0
        %929 = vmatmul.mubr.f32.gmra.mrb[0].mxu0 %v244
        %v930 = vpop.f32.mrb[0].mxu0
        %v931 = vadd.f32 0.0, %v930
        %v932 = vpop.f32.mrb[0].mxu0
        %933 = vdwg.mxu0
        %v934 = vmax.f32 %v856, 0.0
        %v935 = vmax.f32 %v861, 0.0
        %v936 = vmax.f32 %v866, 0.0
        %v937 = vmax.f32 %v871, 0.0
        %v938 = vmax.f32 %v876, 0.0
        %v939 = vmax.f32 %v881, 0.0
        %v940 = vmax.f32 %v886, 0.0
        %v941 = vmax.f32 %v891, 0.0
        %v942 = vmax.f32 %v896, 0.0
        %v943 = vmax.f32 %v901, 0.0
        %v944 = vmax.f32 %v906, 0.0
        %v945 = vmax.f32 %v911, 0.0
        %v946 = vmax.f32 %v916, 0.0
        %v947 = vmax.f32 %v921, 0.0
        %v948 = vmax.f32 %v926, 0.0
        %v949 = vmax.f32 %v931, 0.0
        %v950 = vmul.f32 %v441, %v934
        %v951 = vmul.f32 %v446, %v935
        %v952 = vmul.f32 %v451, %v936
        %v953 = vmul.f32 %v456, %v937
        %v954 = vmul.f32 %v461, %v938
        %v955 = vmul.f32 %v466, %v939
        %v956 = vmul.f32 %v471, %v940
        %v957 = vmul.f32 %v476, %v941
        %v958 = vmul.f32 %v481, %v942
        %v959 = vmul.f32 %v486, %v943
        %v960 = vmul.f32 %v491, %v944
        %v961 = vmul.f32 %v496, %v945
        %v962 = vmul.f32 %v501, %v946
        %v963 = vmul.f32 %v506, %v947
        %v964 = vmul.f32 %v511, %v948
        %v965 = vmul.f32 %v516, %v949
        %v966 = vadd.f32 %v950, %v951
        %v967 = vadd.f32 %v966, %v952
        %v968 = vadd.f32 %v967, %v953
        %v969 = vadd.f32 %v968, %v954
        %v970 = vadd.f32 %v969, %v955
        %v971 = vadd.f32 %v970, %v956
        %v972 = vadd.f32 %v971, %v957
        %v973 = vadd.f32 %v972, %v958
        %v974 = vadd.f32 %v973, %v959
        %v975 = vadd.f32 %v974, %v960
        %v976 = vadd.f32 %v975, %v961
        %v977 = vadd.f32 %v976, %v962
        %v978 = vadd.f32 %v977, %v963
        %v979 = vadd.f32 %v978, %v964
        %v980 = vadd.f32 %v979, %v965
        %v981 = vrot.slane %v980, 4
        %v982 = vadd.f32 %v980, %v981
        %v983 = vrot.slane %v982, 2
        %v984 = vadd.f32 %v982, %v983
        %v985 = vrot.slane %v984, 1
        %v986 = vadd.f32 %v984, %v985
        %987 = vst [vmem:[#allocation5 + $0x2] sm:$0x1] %v986
        %s988 = scalar_lea.vmem %s197, 384 [#allocation9]
        %v989 = vld [vmem:[%s988] sm:$0xff]
        %v990 = vld [vmem:[%s988 + $0x8] sm:$0xff]
        %v991 = vld [vmem:[%s988 + $0x10] sm:$0xff]
        %v992 = vld [vmem:[%s988 + $0x18] sm:$0xff]
        %v993 = vld [vmem:[%s988 + $0x20] sm:$0xff]
        %v994 = vld [vmem:[%s988 + $0x28] sm:$0xff]
        %v995 = vld [vmem:[%s988 + $0x30] sm:$0xff]
        %v996 = vld [vmem:[%s988 + $0x38] sm:$0xff]
        %v997 = vld [vmem:[%s988 + $0x40] sm:$0xff]
        %v998 = vld [vmem:[%s988 + $0x48] sm:$0xff]
        %v999 = vld [vmem:[%s988 + $0x50] sm:$0xff]
        %v1000 = vld [vmem:[%s988 + $0x58] sm:$0xff]
        %v1001 = vld [vmem:[%s988 + $0x60] sm:$0xff]
        %v1002 = vld [vmem:[%s988 + $0x68] sm:$0xff]
        %v1003 = vld [vmem:[%s988 + $0x70] sm:$0xff]
        %v1004 = vld [vmem:[%s988 + $0x78] sm:$0xff]
        %1005 = vmatprep.subr.mxu0 0.0
        %1006 = vmatpush1.msra.mxu0 %v989
        %1007 = vmatprep.subr.mxu0 0.0
        %1008 = vmatpush1.msra.mxu0 %v990
        %1009 = vmatprep.subr.mxu0 0.0
        %1010 = vmatpush1.msra.mxu0 %v991
        %1011 = vmatprep.subr.mxu0 0.0
        %1012 = vmatpush1.msra.mxu0 %v992
        %1013 = vmatprep.subr.mxu0 0.0
        %1014 = vmatpush1.msra.mxu0 %v993
        %1015 = vmatprep.subr.mxu0 0.0
        %1016 = vmatpush1.msra.mxu0 %v994
        %1017 = vmatprep.subr.mxu0 0.0
        %1018 = vmatpush1.msra.mxu0 %v995
        %1019 = vmatprep.subr.mxu0 0.0
        %1020 = vmatpush1.msra.mxu0 %v996
        %1021 = vmatprep.subr.mxu0 0.0
        %1022 = vmatpush1.msra.mxu0 %v997
        %1023 = vmatprep.subr.mxu0 0.0
        %1024 = vmatpush1.msra.mxu0 %v998
        %1025 = vmatprep.subr.mxu0 0.0
        %1026 = vmatpush1.msra.mxu0 %v999
        %1027 = vmatprep.subr.mxu0 0.0
        %1028 = vmatpush1.msra.mxu0 %v1000
        %1029 = vmatprep.subr.mxu0 0.0
        %1030 = vmatpush1.msra.mxu0 %v1001
        %1031 = vmatprep.subr.mxu0 0.0
        %1032 = vmatpush1.msra.mxu0 %v1002
        %1033 = vmatprep.subr.mxu0 0.0
        %1034 = vmatpush1.msra.mxu0 %v1003
        %1035 = vmatprep.subr.mxu0 0.0
        %1036 = vmatpush1.msra.mxu0 %v1004
        %1037 = vmatprep.subr.mxu0 0.0
        %1038 = vmatpush1.msra.mxu0 0.0
        %1039 = vmatprep.subr.mxu0 0.0
        %1040 = vmatpush1.msra.mxu0 0.0
        %1041 = vmatprep.subr.mxu0 0.0
        %1042 = vmatpush1.msra.mxu0 0.0
        %1043 = vmatprep.subr.mxu0 0.0
        %1044 = vmatpush1.msra.mxu0 0.0
        %1045 = vmatprep.subr.mxu0 0.0
        %1046 = vmatpush1.msra.mxu0 0.0
        %1047 = vmatprep.subr.mxu0 0.0
        %1048 = vmatpush1.msra.mxu0 0.0
        %1049 = vmatprep.subr.mxu0 0.0
        %1050 = vmatpush1.msra.mxu0 0.0
        %1051 = vmatprep.subr.mxu0 0.0
        %1052 = vmatpush1.msra.mxu0 0.0
        %1053 = vmatprep.subr.mxu0 0.0
        %1054 = vmatpush1.msra.mxu0 0.0
        %1055 = vmatprep.subr.mxu0 0.0
        %1056 = vmatpush1.msra.mxu0 0.0
        %1057 = vmatprep.subr.mxu0 0.0
        %1058 = vmatpush1.msra.mxu0 0.0
        %1059 = vmatprep.subr.mxu0 0.0
        %1060 = vmatpush1.msra.mxu0 0.0
        %1061 = vmatprep.subr.mxu0 0.0
        %1062 = vmatpush1.msra.mxu0 0.0
        %1063 = vmatprep.subr.mxu0 0.0
        %1064 = vmatpush1.msra.mxu0 0.0
        %1065 = vmatprep.subr.mxu0 0.0
        %1066 = vmatpush1.msra.mxu0 0.0
        %1067 = vmatprep.subr.mxu0 0.0
        %1068 = vmatpush1.msra.mxu0 0.0
        %1069 = vmatprep.mubr.f32.mxu0 0.0
        %1070 = vmatmul.mubr.f32.gmra.mrb[0].mxu0 %v229
        %v1071 = vpop.f32.mrb[0].mxu0
        %v1072 = vadd.f32 0.0, %v1071
        %v1073 = vpop.f32.mrb[0].mxu0
        %1074 = vmatprep.mubr.f32.mxu0 0.0
        %1075 = vmatmul.mubr.f32.gmra.mrb[0].mxu0 %v230
        %v1076 = vpop.f32.mrb[0].mxu0
        %v1077 = vadd.f32 0.0, %v1076
        %v1078 = vpop.f32.mrb[0].mxu0
        %1079 = vmatprep.mubr.f32.mxu0 0.0
        %1080 = vmatmul.mubr.f32.gmra.mrb[0].mxu0 %v231
        %v1081 = vpop.f32.mrb[0].mxu0
        %v1082 = vadd.f32 0.0, %v1081
        %v1083 = vpop.f32.mrb[0].mxu0
        %1084 = vmatprep.mubr.f32.mxu0 0.0
        %1085 = vmatmul.mubr.f32.gmra.mrb[0].mxu0 %v232
        %v1086 = vpop.f32.mrb[0].mxu0
        %v1087 = vadd.f32 0.0, %v1086
        %v1088 = vpop.f32.mrb[0].mxu0
        %1089 = vmatprep.mubr.f32.mxu0 0.0
        %1090 = vmatmul.mubr.f32.gmra.mrb[0].mxu0 %v233
        %v1091 = vpop.f32.mrb[0].mxu0
        %v1092 = vadd.f32 0.0, %v1091
        %v1093 = vpop.f32.mrb[0].mxu0
        %1094 = vmatprep.mubr.f32.mxu0 0.0
        %1095 = vmatmul.mubr.f32.gmra.mrb[0].mxu0 %v234
        %v1096 = vpop.f32.mrb[0].mxu0
        %v1097 = vadd.f32 0.0, %v1096
        %v1098 = vpop.f32.mrb[0].mxu0
        %1099 = vmatprep.mubr.f32.mxu0 0.0
        %1100 = vmatmul.mubr.f32.gmra.mrb[0].mxu0 %v235
        %v1101 = vpop.f32.mrb[0].mxu0
        %v1102 = vadd.f32 0.0, %v1101
        %v1103 = vpop.f32.mrb[0].mxu0
        %1104 = vmatprep.mubr.f32.mxu0 0.0
        %1105 = vmatmul.mubr.f32.gmra.mrb[0].mxu0 %v236
        %v1106 = vpop.f32.mrb[0].mxu0
        %v1107 = vadd.f32 0.0, %v1106
        %v1108 = vpop.f32.mrb[0].mxu0
        %1109 = vmatprep.mubr.f32.mxu0 0.0
        %1110 = vmatmul.mubr.f32.gmra.mrb[0].mxu0 %v237
        %v1111 = vpop.f32.mrb[0].mxu0
        %v1112 = vadd.f32 0.0, %v1111
        %v1113 = vpop.f32.mrb[0].mxu0
        %1114 = vmatprep.mubr.f32.mxu0 0.0
        %1115 = vmatmul.mubr.f32.gmra.mrb[0].mxu0 %v238
        %v1116 = vpop.f32.mrb[0].mxu0
        %v1117 = vadd.f32 0.0, %v1116
        %v1118 = vpop.f32.mrb[0].mxu0
        %1119 = vmatprep.mubr.f32.mxu0 0.0
        %1120 = vmatmul.mubr.f32.gmra.mrb[0].mxu0 %v239
        %v1121 = vpop.f32.mrb[0].mxu0
        %v1122 = vadd.f32 0.0, %v1121
        %v1123 = vpop.f32.mrb[0].mxu0
        %1124 = vmatprep.mubr.f32.mxu0 0.0
        %1125 = vmatmul.mubr.f32.gmra.mrb[0].mxu0 %v240
        %v1126 = vpop.f32.mrb[0].mxu0
        %v1127 = vadd.f32 0.0, %v1126
        %v1128 = vpop.f32.mrb[0].mxu0
        %1129 = vmatprep.mubr.f32.mxu0 0.0
        %1130 = vmatmul.mubr.f32.gmra.mrb[0].mxu0 %v241
        %v1131 = vpop.f32.mrb[0].mxu0
        %v1132 = vadd.f32 0.0, %v1131
        %v1133 = vpop.f32.mrb[0].mxu0
        %1134 = vmatprep.mubr.f32.mxu0 0.0
        %1135 = vmatmul.mubr.f32.gmra.mrb[0].mxu0 %v242
        %v1136 = vpop.f32.mrb[0].mxu0
        %v1137 = vadd.f32 0.0, %v1136
        %v1138 = vpop.f32.mrb[0].mxu0
        %1139 = vmatprep.mubr.f32.mxu0 0.0
        %1140 = vmatmul.mubr.f32.gmra.mrb[0].mxu0 %v243
        %v1141 = vpop.f32.mrb[0].mxu0
        %v1142 = vadd.f32 0.0, %v1141
        %v1143 = vpop.f32.mrb[0].mxu0
        %1144 = vmatprep.mubr.f32.mxu0 0.0
        %1145 = vmatmul.mubr.f32.gmra.mrb[0].mxu0 %v244
        %v1146 = vpop.f32.mrb[0].mxu0
        %v1147 = vadd.f32 0.0, %v1146
        %v1148 = vpop.f32.mrb[0].mxu0
        %1149 = vdwg.mxu0
        %v1150 = vmax.f32 %v1072, 0.0
        %v1151 = vmax.f32 %v1077, 0.0
        %v1152 = vmax.f32 %v1082, 0.0
        %v1153 = vmax.f32 %v1087, 0.0
        %v1154 = vmax.f32 %v1092, 0.0
        %v1155 = vmax.f32 %v1097, 0.0
        %v1156 = vmax.f32 %v1102, 0.0
        %v1157 = vmax.f32 %v1107, 0.0
        %v1158 = vmax.f32 %v1112, 0.0
        %v1159 = vmax.f32 %v1117, 0.0
        %v1160 = vmax.f32 %v1122, 0.0
        %v1161 = vmax.f32 %v1127, 0.0
        %v1162 = vmax.f32 %v1132, 0.0
        %v1163 = vmax.f32 %v1137, 0.0
        %v1164 = vmax.f32 %v1142, 0.0
        %v1165 = vmax.f32 %v1147, 0.0
        %v1166 = vmul.f32 %v441, %v1150
        %v1167 = vmul.f32 %v446, %v1151
        %v1168 = vmul.f32 %v451, %v1152
        %v1169 = vmul.f32 %v456, %v1153
        %v1170 = vmul.f32 %v461, %v1154
        %v1171 = vmul.f32 %v466, %v1155
        %v1172 = vmul.f32 %v471, %v1156
        %v1173 = vmul.f32 %v476, %v1157
        %v1174 = vmul.f32 %v481, %v1158
        %v1175 = vmul.f32 %v486, %v1159
        %v1176 = vmul.f32 %v491, %v1160
        %v1177 = vmul.f32 %v496, %v1161
        %v1178 = vmul.f32 %v501, %v1162
        %v1179 = vmul.f32 %v506, %v1163
        %v1180 = vmul.f32 %v511, %v1164
        %v1181 = vmul.f32 %v516, %v1165
        %v1182 = vadd.f32 %v1166, %v1167
        %v1183 = vadd.f32 %v1182, %v1168
        %v1184 = vadd.f32 %v1183, %v1169
        %v1185 = vadd.f32 %v1184, %v1170
        %v1186 = vadd.f32 %v1185, %v1171
        %v1187 = vadd.f32 %v1186, %v1172
        %v1188 = vadd.f32 %v1187, %v1173
        %v1189 = vadd.f32 %v1188, %v1174
        %v1190 = vadd.f32 %v1189, %v1175
        %v1191 = vadd.f32 %v1190, %v1176
        %v1192 = vadd.f32 %v1191, %v1177
        %v1193 = vadd.f32 %v1192, %v1178
        %v1194 = vadd.f32 %v1193, %v1179
        %v1195 = vadd.f32 %v1194, %v1180
        %v1196 = vadd.f32 %v1195, %v1181
        %v1197 = vrot.slane %v1196, 4
        %v1198 = vadd.f32 %v1196, %v1197
        %v1199 = vrot.slane %v1198, 2
        %v1200 = vadd.f32 %v1198, %v1199
        %v1201 = vrot.slane %v1200, 1
        %v1202 = vadd.f32 %v1200, %v1201
        %1203 = vst [vmem:[#allocation5 + $0x3] sm:$0x1] %v1202
        %s1204 = scalar_lea.vmem %s197, 512 [#allocation9]
        %v1205 = vld [vmem:[%s1204] sm:$0xff]
        %v1206 = vld [vmem:[%s1204 + $0x8] sm:$0xff]
        %v1207 = vld [vmem:[%s1204 + $0x10] sm:$0xff]
        %v1208 = vld [vmem:[%s1204 + $0x18] sm:$0xff]
        %v1209 = vld [vmem:[%s1204 + $0x20] sm:$0xff]
        %v1210 = vld [vmem:[%s1204 + $0x28] sm:$0xff]
        %v1211 = vld [vmem:[%s1204 + $0x30] sm:$0xff]
        %v1212 = vld [vmem:[%s1204 + $0x38] sm:$0xff]
        %v1213 = vld [vmem:[%s1204 + $0x40] sm:$0xff]
        %v1214 = vld [vmem:[%s1204 + $0x48] sm:$0xff]
        %v1215 = vld [vmem:[%s1204 + $0x50] sm:$0xff]
        %v1216 = vld [vmem:[%s1204 + $0x58] sm:$0xff]
        %v1217 = vld [vmem:[%s1204 + $0x60] sm:$0xff]
        %v1218 = vld [vmem:[%s1204 + $0x68] sm:$0xff]
        %v1219 = vld [vmem:[%s1204 + $0x70] sm:$0xff]
        %v1220 = vld [vmem:[%s1204 + $0x78] sm:$0xff]
        %1221 = vmatprep.subr.mxu0 0.0
        %1222 = vmatpush1.msra.mxu0 %v1205
        %1223 = vmatprep.subr.mxu0 0.0
        %1224 = vmatpush1.msra.mxu0 %v1206
        %1225 = vmatprep.subr.mxu0 0.0
        %1226 = vmatpush1.msra.mxu0 %v1207
        %1227 = vmatprep.subr.mxu0 0.0
        %1228 = vmatpush1.msra.mxu0 %v1208
        %1229 = vmatprep.subr.mxu0 0.0
        %1230 = vmatpush1.msra.mxu0 %v1209
        %1231 = vmatprep.subr.mxu0 0.0
        %1232 = vmatpush1.msra.mxu0 %v1210
        %1233 = vmatprep.subr.mxu0 0.0
        %1234 = vmatpush1.msra.mxu0 %v1211
        %1235 = vmatprep.subr.mxu0 0.0
        %1236 = vmatpush1.msra.mxu0 %v1212
        %1237 = vmatprep.subr.mxu0 0.0
        %1238 = vmatpush1.msra.mxu0 %v1213
        %1239 = vmatprep.subr.mxu0 0.0
        %1240 = vmatpush1.msra.mxu0 %v1214
        %1241 = vmatprep.subr.mxu0 0.0
        %1242 = vmatpush1.msra.mxu0 %v1215
        %1243 = vmatprep.subr.mxu0 0.0
        %1244 = vmatpush1.msra.mxu0 %v1216
        %1245 = vmatprep.subr.mxu0 0.0
        %1246 = vmatpush1.msra.mxu0 %v1217
        %1247 = vmatprep.subr.mxu0 0.0
        %1248 = vmatpush1.msra.mxu0 %v1218
        %1249 = vmatprep.subr.mxu0 0.0
        %1250 = vmatpush1.msra.mxu0 %v1219
        %1251 = vmatprep.subr.mxu0 0.0
        %1252 = vmatpush1.msra.mxu0 %v1220
        %1253 = vmatprep.subr.mxu0 0.0
        %1254 = vmatpush1.msra.mxu0 0.0
        %1255 = vmatprep.subr.mxu0 0.0
        %1256 = vmatpush1.msra.mxu0 0.0
        %1257 = vmatprep.subr.mxu0 0.0
        %1258 = vmatpush1.msra.mxu0 0.0
        %1259 = vmatprep.subr.mxu0 0.0
        %1260 = vmatpush1.msra.mxu0 0.0
        %1261 = vmatprep.subr.mxu0 0.0
        %1262 = vmatpush1.msra.mxu0 0.0
        %1263 = vmatprep.subr.mxu0 0.0
        %1264 = vmatpush1.msra.mxu0 0.0
        %1265 = vmatprep.subr.mxu0 0.0
        %1266 = vmatpush1.msra.mxu0 0.0
        %1267 = vmatprep.subr.mxu0 0.0
        %1268 = vmatpush1.msra.mxu0 0.0
        %1269 = vmatprep.subr.mxu0 0.0
        %1270 = vmatpush1.msra.mxu0 0.0
        %1271 = vmatprep.subr.mxu0 0.0
        %1272 = vmatpush1.msra.mxu0 0.0
        %1273 = vmatprep.subr.mxu0 0.0
        %1274 = vmatpush1.msra.mxu0 0.0
        %1275 = vmatprep.subr.mxu0 0.0
        %1276 = vmatpush1.msra.mxu0 0.0
        %1277 = vmatprep.subr.mxu0 0.0
        %1278 = vmatpush1.msra.mxu0 0.0
        %1279 = vmatprep.subr.mxu0 0.0
        %1280 = vmatpush1.msra.mxu0 0.0
        %1281 = vmatprep.subr.mxu0 0.0
        %1282 = vmatpush1.msra.mxu0 0.0
        %1283 = vmatprep.subr.mxu0 0.0
        %1284 = vmatpush1.msra.mxu0 0.0
        %1285 = vmatprep.mubr.f32.mxu0 0.0
        %1286 = vmatmul.mubr.f32.gmra.mrb[0].mxu0 %v229
        %v1287 = vpop.f32.mrb[0].mxu0
        %v1288 = vadd.f32 0.0, %v1287
        %v1289 = vpop.f32.mrb[0].mxu0
        %1290 = vmatprep.mubr.f32.mxu0 0.0
        %1291 = vmatmul.mubr.f32.gmra.mrb[0].mxu0 %v230
        %v1292 = vpop.f32.mrb[0].mxu0
        %v1293 = vadd.f32 0.0, %v1292
        %v1294 = vpop.f32.mrb[0].mxu0
        %1295 = vmatprep.mubr.f32.mxu0 0.0
        %1296 = vmatmul.mubr.f32.gmra.mrb[0].mxu0 %v231
        %v1297 = vpop.f32.mrb[0].mxu0
        %v1298 = vadd.f32 0.0, %v1297
        %v1299 = vpop.f32.mrb[0].mxu0
        %1300 = vmatprep.mubr.f32.mxu0 0.0
        %1301 = vmatmul.mubr.f32.gmra.mrb[0].mxu0 %v232
        %v1302 = vpop.f32.mrb[0].mxu0
        %v1303 = vadd.f32 0.0, %v1302
        %v1304 = vpop.f32.mrb[0].mxu0
        %1305 = vmatprep.mubr.f32.mxu0 0.0
        %1306 = vmatmul.mubr.f32.gmra.mrb[0].mxu0 %v233
        %v1307 = vpop.f32.mrb[0].mxu0
        %v1308 = vadd.f32 0.0, %v1307
        %v1309 = vpop.f32.mrb[0].mxu0
        %1310 = vmatprep.mubr.f32.mxu0 0.0
        %1311 = vmatmul.mubr.f32.gmra.mrb[0].mxu0 %v234
        %v1312 = vpop.f32.mrb[0].mxu0
        %v1313 = vadd.f32 0.0, %v1312
        %v1314 = vpop.f32.mrb[0].mxu0
        %1315 = vmatprep.mubr.f32.mxu0 0.0
        %1316 = vmatmul.mubr.f32.gmra.mrb[0].mxu0 %v235
        %v1317 = vpop.f32.mrb[0].mxu0
        %v1318 = vadd.f32 0.0, %v1317
        %v1319 = vpop.f32.mrb[0].mxu0
        %1320 = vmatprep.mubr.f32.mxu0 0.0
        %1321 = vmatmul.mubr.f32.gmra.mrb[0].mxu0 %v236
        %v1322 = vpop.f32.mrb[0].mxu0
        %v1323 = vadd.f32 0.0, %v1322
        %v1324 = vpop.f32.mrb[0].mxu0
        %1325 = vmatprep.mubr.f32.mxu0 0.0
        %1326 = vmatmul.mubr.f32.gmra.mrb[0].mxu0 %v237
        %v1327 = vpop.f32.mrb[0].mxu0
        %v1328 = vadd.f32 0.0, %v1327
        %v1329 = vpop.f32.mrb[0].mxu0
        %1330 = vmatprep.mubr.f32.mxu0 0.0
        %1331 = vmatmul.mubr.f32.gmra.mrb[0].mxu0 %v238
        %v1332 = vpop.f32.mrb[0].mxu0
        %v1333 = vadd.f32 0.0, %v1332
        %v1334 = vpop.f32.mrb[0].mxu0
        %1335 = vmatprep.mubr.f32.mxu0 0.0
        %1336 = vmatmul.mubr.f32.gmra.mrb[0].mxu0 %v239
        %v1337 = vpop.f32.mrb[0].mxu0
        %v1338 = vadd.f32 0.0, %v1337
        %v1339 = vpop.f32.mrb[0].mxu0
        %1340 = vmatprep.mubr.f32.mxu0 0.0
        %1341 = vmatmul.mubr.f32.gmra.mrb[0].mxu0 %v240
        %v1342 = vpop.f32.mrb[0].mxu0
        %v1343 = vadd.f32 0.0, %v1342
        %v1344 = vpop.f32.mrb[0].mxu0
        %1345 = vmatprep.mubr.f32.mxu0 0.0
        %1346 = vmatmul.mubr.f32.gmra.mrb[0].mxu0 %v241
        %v1347 = vpop.f32.mrb[0].mxu0
        %v1348 = vadd.f32 0.0, %v1347
        %v1349 = vpop.f32.mrb[0].mxu0
        %1350 = vmatprep.mubr.f32.mxu0 0.0
        %1351 = vmatmul.mubr.f32.gmra.mrb[0].mxu0 %v242
        %v1352 = vpop.f32.mrb[0].mxu0
        %v1353 = vadd.f32 0.0, %v1352
        %v1354 = vpop.f32.mrb[0].mxu0
        %1355 = vmatprep.mubr.f32.mxu0 0.0
        %1356 = vmatmul.mubr.f32.gmra.mrb[0].mxu0 %v243
        %v1357 = vpop.f32.mrb[0].mxu0
        %v1358 = vadd.f32 0.0, %v1357
        %v1359 = vpop.f32.mrb[0].mxu0
        %1360 = vmatprep.mubr.f32.mxu0 0.0
        %1361 = vmatmul.mubr.f32.gmra.mrb[0].mxu0 %v244
        %v1362 = vpop.f32.mrb[0].mxu0
        %v1363 = vadd.f32 0.0, %v1362
        %v1364 = vpop.f32.mrb[0].mxu0
        %1365 = vdwg.mxu0
        %v1366 = vmax.f32 %v1288, 0.0
        %v1367 = vmax.f32 %v1293, 0.0
        %v1368 = vmax.f32 %v1298, 0.0
        %v1369 = vmax.f32 %v1303, 0.0
        %v1370 = vmax.f32 %v1308, 0.0
        %v1371 = vmax.f32 %v1313, 0.0
        %v1372 = vmax.f32 %v1318, 0.0
        %v1373 = vmax.f32 %v1323, 0.0
        %v1374 = vmax.f32 %v1328, 0.0
        %v1375 = vmax.f32 %v1333, 0.0
        %v1376 = vmax.f32 %v1338, 0.0
        %v1377 = vmax.f32 %v1343, 0.0
        %v1378 = vmax.f32 %v1348, 0.0
        %v1379 = vmax.f32 %v1353, 0.0
        %v1380 = vmax.f32 %v1358, 0.0
        %v1381 = vmax.f32 %v1363, 0.0
        %v1382 = vmul.f32 %v441, %v1366
        %v1383 = vmul.f32 %v446, %v1367
        %v1384 = vmul.f32 %v451, %v1368
        %v1385 = vmul.f32 %v456, %v1369
        %v1386 = vmul.f32 %v461, %v1370
        %v1387 = vmul.f32 %v466, %v1371
        %v1388 = vmul.f32 %v471, %v1372
        %v1389 = vmul.f32 %v476, %v1373
        %v1390 = vmul.f32 %v481, %v1374
        %v1391 = vmul.f32 %v486, %v1375
        %v1392 = vmul.f32 %v491, %v1376
        %v1393 = vmul.f32 %v496, %v1377
        %v1394 = vmul.f32 %v501, %v1378
        %v1395 = vmul.f32 %v506, %v1379
        %v1396 = vmul.f32 %v511, %v1380
        %v1397 = vmul.f32 %v516, %v1381
        %v1398 = vadd.f32 %v1382, %v1383
        %v1399 = vadd.f32 %v1398, %v1384
        %v1400 = vadd.f32 %v1399, %v1385
        %v1401 = vadd.f32 %v1400, %v1386
        %v1402 = vadd.f32 %v1401, %v1387
        %v1403 = vadd.f32 %v1402, %v1388
        %v1404 = vadd.f32 %v1403, %v1389
        %v1405 = vadd.f32 %v1404, %v1390
        %v1406 = vadd.f32 %v1405, %v1391
        %v1407 = vadd.f32 %v1406, %v1392
        %v1408 = vadd.f32 %v1407, %v1393
        %v1409 = vadd.f32 %v1408, %v1394
        %v1410 = vadd.f32 %v1409, %v1395
        %v1411 = vadd.f32 %v1410, %v1396
        %v1412 = vadd.f32 %v1411, %v1397
        %v1413 = vrot.slane %v1412, 4
        %v1414 = vadd.f32 %v1412, %v1413
        %v1415 = vrot.slane %v1414, 2
        %v1416 = vadd.f32 %v1414, %v1415
        %v1417 = vrot.slane %v1416, 1
        %v1418 = vadd.f32 %v1416, %v1417
        %1419 = vst [vmem:[#allocation5 + $0x4] sm:$0x1] %v1418
        %s1420 = scalar_lea.vmem %s197, 640 [#allocation9]
        %v1421 = vld [vmem:[%s1420] sm:$0xff]
        %v1422 = vld [vmem:[%s1420 + $0x8] sm:$0xff]
        %v1423 = vld [vmem:[%s1420 + $0x10] sm:$0xff]
        %v1424 = vld [vmem:[%s1420 + $0x18] sm:$0xff]
        %v1425 = vld [vmem:[%s1420 + $0x20] sm:$0xff]
        %v1426 = vld [vmem:[%s1420 + $0x28] sm:$0xff]
        %v1427 = vld [vmem:[%s1420 + $0x30] sm:$0xff]
        %v1428 = vld [vmem:[%s1420 + $0x38] sm:$0xff]
        %v1429 = vld [vmem:[%s1420 + $0x40] sm:$0xff]
        %v1430 = vld [vmem:[%s1420 + $0x48] sm:$0xff]
        %v1431 = vld [vmem:[%s1420 + $0x50] sm:$0xff]
        %v1432 = vld [vmem:[%s1420 + $0x58] sm:$0xff]
        %v1433 = vld [vmem:[%s1420 + $0x60] sm:$0xff]
        %v1434 = vld [vmem:[%s1420 + $0x68] sm:$0xff]
        %v1435 = vld [vmem:[%s1420 + $0x70] sm:$0xff]
        %v1436 = vld [vmem:[%s1420 + $0x78] sm:$0xff]
        %1437 = vmatprep.subr.mxu0 0.0
        %1438 = vmatpush1.msra.mxu0 %v1421
        %1439 = vmatprep.subr.mxu0 0.0
        %1440 = vmatpush1.msra.mxu0 %v1422
        %1441 = vmatprep.subr.mxu0 0.0
        %1442 = vmatpush1.msra.mxu0 %v1423
        %1443 = vmatprep.subr.mxu0 0.0
        %1444 = vmatpush1.msra.mxu0 %v1424
        %1445 = vmatprep.subr.mxu0 0.0
        %1446 = vmatpush1.msra.mxu0 %v1425
        %1447 = vmatprep.subr.mxu0 0.0
        %1448 = vmatpush1.msra.mxu0 %v1426
        %1449 = vmatprep.subr.mxu0 0.0
        %1450 = vmatpush1.msra.mxu0 %v1427
        %1451 = vmatprep.subr.mxu0 0.0
        %1452 = vmatpush1.msra.mxu0 %v1428
        %1453 = vmatprep.subr.mxu0 0.0
        %1454 = vmatpush1.msra.mxu0 %v1429
        %1455 = vmatprep.subr.mxu0 0.0
        %1456 = vmatpush1.msra.mxu0 %v1430
        %1457 = vmatprep.subr.mxu0 0.0
        %1458 = vmatpush1.msra.mxu0 %v1431
        %1459 = vmatprep.subr.mxu0 0.0
        %1460 = vmatpush1.msra.mxu0 %v1432
        %1461 = vmatprep.subr.mxu0 0.0
        %1462 = vmatpush1.msra.mxu0 %v1433
        %1463 = vmatprep.subr.mxu0 0.0
        %1464 = vmatpush1.msra.mxu0 %v1434
        %1465 = vmatprep.subr.mxu0 0.0
        %1466 = vmatpush1.msra.mxu0 %v1435
        %1467 = vmatprep.subr.mxu0 0.0
        %1468 = vmatpush1.msra.mxu0 %v1436
        %1469 = vmatprep.subr.mxu0 0.0
        %1470 = vmatpush1.msra.mxu0 0.0
        %1471 = vmatprep.subr.mxu0 0.0
        %1472 = vmatpush1.msra.mxu0 0.0
        %1473 = vmatprep.subr.mxu0 0.0
        %1474 = vmatpush1.msra.mxu0 0.0
        %1475 = vmatprep.subr.mxu0 0.0
        %1476 = vmatpush1.msra.mxu0 0.0
        %1477 = vmatprep.subr.mxu0 0.0
        %1478 = vmatpush1.msra.mxu0 0.0
        %1479 = vmatprep.subr.mxu0 0.0
        %1480 = vmatpush1.msra.mxu0 0.0
        %1481 = vmatprep.subr.mxu0 0.0
        %1482 = vmatpush1.msra.mxu0 0.0
        %1483 = vmatprep.subr.mxu0 0.0
        %1484 = vmatpush1.msra.mxu0 0.0
        %1485 = vmatprep.subr.mxu0 0.0
        %1486 = vmatpush1.msra.mxu0 0.0
        %1487 = vmatprep.subr.mxu0 0.0
        %1488 = vmatpush1.msra.mxu0 0.0
        %1489 = vmatprep.subr.mxu0 0.0
        %1490 = vmatpush1.msra.mxu0 0.0
        %1491 = vmatprep.subr.mxu0 0.0
        %1492 = vmatpush1.msra.mxu0 0.0
        %1493 = vmatprep.subr.mxu0 0.0
        %1494 = vmatpush1.msra.mxu0 0.0
        %1495 = vmatprep.subr.mxu0 0.0
        %1496 = vmatpush1.msra.mxu0 0.0
        %1497 = vmatprep.subr.mxu0 0.0
        %1498 = vmatpush1.msra.mxu0 0.0
        %1499 = vmatprep.subr.mxu0 0.0
        %1500 = vmatpush1.msra.mxu0 0.0
        %1501 = vmatprep.mubr.f32.mxu0 0.0
        %1502 = vmatmul.mubr.f32.gmra.mrb[0].mxu0 %v229
        %v1503 = vpop.f32.mrb[0].mxu0
        %v1504 = vadd.f32 0.0, %v1503
        %v1505 = vpop.f32.mrb[0].mxu0
        %1506 = vmatprep.mubr.f32.mxu0 0.0
        %1507 = vmatmul.mubr.f32.gmra.mrb[0].mxu0 %v230
        %v1508 = vpop.f32.mrb[0].mxu0
        %v1509 = vadd.f32 0.0, %v1508
        %v1510 = vpop.f32.mrb[0].mxu0
        %1511 = vmatprep.mubr.f32.mxu0 0.0
        %1512 = vmatmul.mubr.f32.gmra.mrb[0].mxu0 %v231
        %v1513 = vpop.f32.mrb[0].mxu0
        %v1514 = vadd.f32 0.0, %v1513
        %v1515 = vpop.f32.mrb[0].mxu0
        %1516 = vmatprep.mubr.f32.mxu0 0.0
        %1517 = vmatmul.mubr.f32.gmra.mrb[0].mxu0 %v232
        %v1518 = vpop.f32.mrb[0].mxu0
        %v1519 = vadd.f32 0.0, %v1518
        %v1520 = vpop.f32.mrb[0].mxu0
        %1521 = vmatprep.mubr.f32.mxu0 0.0
        %1522 = vmatmul.mubr.f32.gmra.mrb[0].mxu0 %v233
        %v1523 = vpop.f32.mrb[0].mxu0
        %v1524 = vadd.f32 0.0, %v1523
        %v1525 = vpop.f32.mrb[0].mxu0
        %1526 = vmatprep.mubr.f32.mxu0 0.0
        %1527 = vmatmul.mubr.f32.gmra.mrb[0].mxu0 %v234
        %v1528 = vpop.f32.mrb[0].mxu0
        %v1529 = vadd.f32 0.0, %v1528
        %v1530 = vpop.f32.mrb[0].mxu0
        %1531 = vmatprep.mubr.f32.mxu0 0.0
        %1532 = vmatmul.mubr.f32.gmra.mrb[0].mxu0 %v235
        %v1533 = vpop.f32.mrb[0].mxu0
        %v1534 = vadd.f32 0.0, %v1533
        %v1535 = vpop.f32.mrb[0].mxu0
        %1536 = vmatprep.mubr.f32.mxu0 0.0
        %1537 = vmatmul.mubr.f32.gmra.mrb[0].mxu0 %v236
        %v1538 = vpop.f32.mrb[0].mxu0
        %v1539 = vadd.f32 0.0, %v1538
        %v1540 = vpop.f32.mrb[0].mxu0
        %1541 = vmatprep.mubr.f32.mxu0 0.0
        %1542 = vmatmul.mubr.f32.gmra.mrb[0].mxu0 %v237
        %v1543 = vpop.f32.mrb[0].mxu0
        %v1544 = vadd.f32 0.0, %v1543
        %v1545 = vpop.f32.mrb[0].mxu0
        %1546 = vmatprep.mubr.f32.mxu0 0.0
        %1547 = vmatmul.mubr.f32.gmra.mrb[0].mxu0 %v238
        %v1548 = vpop.f32.mrb[0].mxu0
        %v1549 = vadd.f32 0.0, %v1548
        %v1550 = vpop.f32.mrb[0].mxu0
        %1551 = vmatprep.mubr.f32.mxu0 0.0
        %1552 = vmatmul.mubr.f32.gmra.mrb[0].mxu0 %v239
        %v1553 = vpop.f32.mrb[0].mxu0
        %v1554 = vadd.f32 0.0, %v1553
        %v1555 = vpop.f32.mrb[0].mxu0
        %1556 = vmatprep.mubr.f32.mxu0 0.0
        %1557 = vmatmul.mubr.f32.gmra.mrb[0].mxu0 %v240
        %v1558 = vpop.f32.mrb[0].mxu0
        %v1559 = vadd.f32 0.0, %v1558
        %v1560 = vpop.f32.mrb[0].mxu0
        %1561 = vmatprep.mubr.f32.mxu0 0.0
        %1562 = vmatmul.mubr.f32.gmra.mrb[0].mxu0 %v241
        %v1563 = vpop.f32.mrb[0].mxu0
        %v1564 = vadd.f32 0.0, %v1563
        %v1565 = vpop.f32.mrb[0].mxu0
        %1566 = vmatprep.mubr.f32.mxu0 0.0
        %1567 = vmatmul.mubr.f32.gmra.mrb[0].mxu0 %v242
        %v1568 = vpop.f32.mrb[0].mxu0
        %v1569 = vadd.f32 0.0, %v1568
        %v1570 = vpop.f32.mrb[0].mxu0
        %1571 = vmatprep.mubr.f32.mxu0 0.0
        %1572 = vmatmul.mubr.f32.gmra.mrb[0].mxu0 %v243
        %v1573 = vpop.f32.mrb[0].mxu0
        %v1574 = vadd.f32 0.0, %v1573
        %v1575 = vpop.f32.mrb[0].mxu0
        %1576 = vmatprep.mubr.f32.mxu0 0.0
        %1577 = vmatmul.mubr.f32.gmra.mrb[0].mxu0 %v244
        %v1578 = vpop.f32.mrb[0].mxu0
        %v1579 = vadd.f32 0.0, %v1578
        %v1580 = vpop.f32.mrb[0].mxu0
        %1581 = vdwg.mxu0
        %v1582 = vmax.f32 %v1504, 0.0
        %v1583 = vmax.f32 %v1509, 0.0
        %v1584 = vmax.f32 %v1514, 0.0
        %v1585 = vmax.f32 %v1519, 0.0
        %v1586 = vmax.f32 %v1524, 0.0
        %v1587 = vmax.f32 %v1529, 0.0
        %v1588 = vmax.f32 %v1534, 0.0
        %v1589 = vmax.f32 %v1539, 0.0
        %v1590 = vmax.f32 %v1544, 0.0
        %v1591 = vmax.f32 %v1549, 0.0
        %v1592 = vmax.f32 %v1554, 0.0
        %v1593 = vmax.f32 %v1559, 0.0
        %v1594 = vmax.f32 %v1564, 0.0
        %v1595 = vmax.f32 %v1569, 0.0
        %v1596 = vmax.f32 %v1574, 0.0
        %v1597 = vmax.f32 %v1579, 0.0
        %v1598 = vmul.f32 %v441, %v1582
        %v1599 = vmul.f32 %v446, %v1583
        %v1600 = vmul.f32 %v451, %v1584
        %v1601 = vmul.f32 %v456, %v1585
        %v1602 = vmul.f32 %v461, %v1586
        %v1603 = vmul.f32 %v466, %v1587
        %v1604 = vmul.f32 %v471, %v1588
        %v1605 = vmul.f32 %v476, %v1589
        %v1606 = vmul.f32 %v481, %v1590
        %v1607 = vmul.f32 %v486, %v1591
        %v1608 = vmul.f32 %v491, %v1592
        %v1609 = vmul.f32 %v496, %v1593
        %v1610 = vmul.f32 %v501, %v1594
        %v1611 = vmul.f32 %v506, %v1595
        %v1612 = vmul.f32 %v511, %v1596
        %v1613 = vmul.f32 %v516, %v1597
        %v1614 = vadd.f32 %v1598, %v1599
        %v1615 = vadd.f32 %v1614, %v1600
        %v1616 = vadd.f32 %v1615, %v1601
        %v1617 = vadd.f32 %v1616, %v1602
        %v1618 = vadd.f32 %v1617, %v1603
        %v1619 = vadd.f32 %v1618, %v1604
        %v1620 = vadd.f32 %v1619, %v1605
        %v1621 = vadd.f32 %v1620, %v1606
        %v1622 = vadd.f32 %v1621, %v1607
        %v1623 = vadd.f32 %v1622, %v1608
        %v1624 = vadd.f32 %v1623, %v1609
        %v1625 = vadd.f32 %v1624, %v1610
        %v1626 = vadd.f32 %v1625, %v1611
        %v1627 = vadd.f32 %v1626, %v1612
        %v1628 = vadd.f32 %v1627, %v1613
        %v1629 = vrot.slane %v1628, 4
        %v1630 = vadd.f32 %v1628, %v1629
        %v1631 = vrot.slane %v1630, 2
        %v1632 = vadd.f32 %v1630, %v1631
        %v1633 = vrot.slane %v1632, 1
        %v1634 = vadd.f32 %v1632, %v1633
        %1635 = vst [vmem:[#allocation5 + $0x5] sm:$0x1] %v1634
        %s1636 = scalar_lea.vmem %s197, 768 [#allocation9]
        %v1637 = vld [vmem:[%s1636] sm:$0xff]
        %v1638 = vld [vmem:[%s1636 + $0x8] sm:$0xff]
        %v1639 = vld [vmem:[%s1636 + $0x10] sm:$0xff]
        %v1640 = vld [vmem:[%s1636 + $0x18] sm:$0xff]
        %v1641 = vld [vmem:[%s1636 + $0x20] sm:$0xff]
        %v1642 = vld [vmem:[%s1636 + $0x28] sm:$0xff]
        %v1643 = vld [vmem:[%s1636 + $0x30] sm:$0xff]
        %v1644 = vld [vmem:[%s1636 + $0x38] sm:$0xff]
        %v1645 = vld [vmem:[%s1636 + $0x40] sm:$0xff]
        %v1646 = vld [vmem:[%s1636 + $0x48] sm:$0xff]
        %v1647 = vld [vmem:[%s1636 + $0x50] sm:$0xff]
        %v1648 = vld [vmem:[%s1636 + $0x58] sm:$0xff]
        %v1649 = vld [vmem:[%s1636 + $0x60] sm:$0xff]
        %v1650 = vld [vmem:[%s1636 + $0x68] sm:$0xff]
        %v1651 = vld [vmem:[%s1636 + $0x70] sm:$0xff]
        %v1652 = vld [vmem:[%s1636 + $0x78] sm:$0xff]
        %1653 = vmatprep.subr.mxu0 0.0
        %1654 = vmatpush1.msra.mxu0 %v1637
        %1655 = vmatprep.subr.mxu0 0.0
        %1656 = vmatpush1.msra.mxu0 %v1638
        %1657 = vmatprep.subr.mxu0 0.0
        %1658 = vmatpush1.msra.mxu0 %v1639
        %1659 = vmatprep.subr.mxu0 0.0
        %1660 = vmatpush1.msra.mxu0 %v1640
        %1661 = vmatprep.subr.mxu0 0.0
        %1662 = vmatpush1.msra.mxu0 %v1641
        %1663 = vmatprep.subr.mxu0 0.0
        %1664 = vmatpush1.msra.mxu0 %v1642
        %1665 = vmatprep.subr.mxu0 0.0
        %1666 = vmatpush1.msra.mxu0 %v1643
        %1667 = vmatprep.subr.mxu0 0.0
        %1668 = vmatpush1.msra.mxu0 %v1644
        %1669 = vmatprep.subr.mxu0 0.0
        %1670 = vmatpush1.msra.mxu0 %v1645
        %1671 = vmatprep.subr.mxu0 0.0
        %1672 = vmatpush1.msra.mxu0 %v1646
        %1673 = vmatprep.subr.mxu0 0.0
        %1674 = vmatpush1.msra.mxu0 %v1647
        %1675 = vmatprep.subr.mxu0 0.0
        %1676 = vmatpush1.msra.mxu0 %v1648
        %1677 = vmatprep.subr.mxu0 0.0
        %1678 = vmatpush1.msra.mxu0 %v1649
        %1679 = vmatprep.subr.mxu0 0.0
        %1680 = vmatpush1.msra.mxu0 %v1650
        %1681 = vmatprep.subr.mxu0 0.0
        %1682 = vmatpush1.msra.mxu0 %v1651
        %1683 = vmatprep.subr.mxu0 0.0
        %1684 = vmatpush1.msra.mxu0 %v1652
        %1685 = vmatprep.subr.mxu0 0.0
        %1686 = vmatpush1.msra.mxu0 0.0
        %1687 = vmatprep.subr.mxu0 0.0
        %1688 = vmatpush1.msra.mxu0 0.0
        %1689 = vmatprep.subr.mxu0 0.0
        %1690 = vmatpush1.msra.mxu0 0.0
        %1691 = vmatprep.subr.mxu0 0.0
        %1692 = vmatpush1.msra.mxu0 0.0
        %1693 = vmatprep.subr.mxu0 0.0
        %1694 = vmatpush1.msra.mxu0 0.0
        %1695 = vmatprep.subr.mxu0 0.0
        %1696 = vmatpush1.msra.mxu0 0.0
        %1697 = vmatprep.subr.mxu0 0.0
        %1698 = vmatpush1.msra.mxu0 0.0
        %1699 = vmatprep.subr.mxu0 0.0
        %1700 = vmatpush1.msra.mxu0 0.0
        %1701 = vmatprep.subr.mxu0 0.0
        %1702 = vmatpush1.msra.mxu0 0.0
        %1703 = vmatprep.subr.mxu0 0.0
        %1704 = vmatpush1.msra.mxu0 0.0
        %1705 = vmatprep.subr.mxu0 0.0
        %1706 = vmatpush1.msra.mxu0 0.0
        %1707 = vmatprep.subr.mxu0 0.0
        %1708 = vmatpush1.msra.mxu0 0.0
        %1709 = vmatprep.subr.mxu0 0.0
        %1710 = vmatpush1.msra.mxu0 0.0
        %1711 = vmatprep.subr.mxu0 0.0
        %1712 = vmatpush1.msra.mxu0 0.0
        %1713 = vmatprep.subr.mxu0 0.0
        %1714 = vmatpush1.msra.mxu0 0.0
        %1715 = vmatprep.subr.mxu0 0.0
        %1716 = vmatpush1.msra.mxu0 0.0
        %1717 = vmatprep.mubr.f32.mxu0 0.0
        %1718 = vmatmul.mubr.f32.gmra.mrb[0].mxu0 %v229
        %v1719 = vpop.f32.mrb[0].mxu0
        %v1720 = vadd.f32 0.0, %v1719
        %v1721 = vpop.f32.mrb[0].mxu0
        %1722 = vmatprep.mubr.f32.mxu0 0.0
        %1723 = vmatmul.mubr.f32.gmra.mrb[0].mxu0 %v230
        %v1724 = vpop.f32.mrb[0].mxu0
        %v1725 = vadd.f32 0.0, %v1724
        %v1726 = vpop.f32.mrb[0].mxu0
        %1727 = vmatprep.mubr.f32.mxu0 0.0
        %1728 = vmatmul.mubr.f32.gmra.mrb[0].mxu0 %v231
        %v1729 = vpop.f32.mrb[0].mxu0
        %v1730 = vadd.f32 0.0, %v1729
        %v1731 = vpop.f32.mrb[0].mxu0
        %1732 = vmatprep.mubr.f32.mxu0 0.0
        %1733 = vmatmul.mubr.f32.gmra.mrb[0].mxu0 %v232
        %v1734 = vpop.f32.mrb[0].mxu0
        %v1735 = vadd.f32 0.0, %v1734
        %v1736 = vpop.f32.mrb[0].mxu0
        %1737 = vmatprep.mubr.f32.mxu0 0.0
        %1738 = vmatmul.mubr.f32.gmra.mrb[0].mxu0 %v233
        %v1739 = vpop.f32.mrb[0].mxu0
        %v1740 = vadd.f32 0.0, %v1739
        %v1741 = vpop.f32.mrb[0].mxu0
        %1742 = vmatprep.mubr.f32.mxu0 0.0
        %1743 = vmatmul.mubr.f32.gmra.mrb[0].mxu0 %v234
        %v1744 = vpop.f32.mrb[0].mxu0
        %v1745 = vadd.f32 0.0, %v1744
        %v1746 = vpop.f32.mrb[0].mxu0
        %1747 = vmatprep.mubr.f32.mxu0 0.0
        %1748 = vmatmul.mubr.f32.gmra.mrb[0].mxu0 %v235
        %v1749 = vpop.f32.mrb[0].mxu0
        %v1750 = vadd.f32 0.0, %v1749
        %v1751 = vpop.f32.mrb[0].mxu0
        %1752 = vmatprep.mubr.f32.mxu0 0.0
        %1753 = vmatmul.mubr.f32.gmra.mrb[0].mxu0 %v236
        %v1754 = vpop.f32.mrb[0].mxu0
        %v1755 = vadd.f32 0.0, %v1754
        %v1756 = vpop.f32.mrb[0].mxu0
        %1757 = vmatprep.mubr.f32.mxu0 0.0
        %1758 = vmatmul.mubr.f32.gmra.mrb[0].mxu0 %v237
        %v1759 = vpop.f32.mrb[0].mxu0
        %v1760 = vadd.f32 0.0, %v1759
        %v1761 = vpop.f32.mrb[0].mxu0
        %1762 = vmatprep.mubr.f32.mxu0 0.0
        %1763 = vmatmul.mubr.f32.gmra.mrb[0].mxu0 %v238
        %v1764 = vpop.f32.mrb[0].mxu0
        %v1765 = vadd.f32 0.0, %v1764
        %v1766 = vpop.f32.mrb[0].mxu0
        %1767 = vmatprep.mubr.f32.mxu0 0.0
        %1768 = vmatmul.mubr.f32.gmra.mrb[0].mxu0 %v239
        %v1769 = vpop.f32.mrb[0].mxu0
        %v1770 = vadd.f32 0.0, %v1769
        %v1771 = vpop.f32.mrb[0].mxu0
        %1772 = vmatprep.mubr.f32.mxu0 0.0
        %1773 = vmatmul.mubr.f32.gmra.mrb[0].mxu0 %v240
        %v1774 = vpop.f32.mrb[0].mxu0
        %v1775 = vadd.f32 0.0, %v1774
        %v1776 = vpop.f32.mrb[0].mxu0
        %1777 = vmatprep.mubr.f32.mxu0 0.0
        %1778 = vmatmul.mubr.f32.gmra.mrb[0].mxu0 %v241
        %v1779 = vpop.f32.mrb[0].mxu0
        %v1780 = vadd.f32 0.0, %v1779
        %v1781 = vpop.f32.mrb[0].mxu0
        %1782 = vmatprep.mubr.f32.mxu0 0.0
        %1783 = vmatmul.mubr.f32.gmra.mrb[0].mxu0 %v242
        %v1784 = vpop.f32.mrb[0].mxu0
        %v1785 = vadd.f32 0.0, %v1784
        %v1786 = vpop.f32.mrb[0].mxu0
        %1787 = vmatprep.mubr.f32.mxu0 0.0
        %1788 = vmatmul.mubr.f32.gmra.mrb[0].mxu0 %v243
        %v1789 = vpop.f32.mrb[0].mxu0
        %v1790 = vadd.f32 0.0, %v1789
        %v1791 = vpop.f32.mrb[0].mxu0
        %1792 = vmatprep.mubr.f32.mxu0 0.0
        %1793 = vmatmul.mubr.f32.gmra.mrb[0].mxu0 %v244
        %v1794 = vpop.f32.mrb[0].mxu0
        %v1795 = vadd.f32 0.0, %v1794
        %v1796 = vpop.f32.mrb[0].mxu0
        %1797 = vdwg.mxu0
        %v1798 = vmax.f32 %v1720, 0.0
        %v1799 = vmax.f32 %v1725, 0.0
        %v1800 = vmax.f32 %v1730, 0.0
        %v1801 = vmax.f32 %v1735, 0.0
        %v1802 = vmax.f32 %v1740, 0.0
        %v1803 = vmax.f32 %v1745, 0.0
        %v1804 = vmax.f32 %v1750, 0.0
        %v1805 = vmax.f32 %v1755, 0.0
        %v1806 = vmax.f32 %v1760, 0.0
        %v1807 = vmax.f32 %v1765, 0.0
        %v1808 = vmax.f32 %v1770, 0.0
        %v1809 = vmax.f32 %v1775, 0.0
        %v1810 = vmax.f32 %v1780, 0.0
        %v1811 = vmax.f32 %v1785, 0.0
        %v1812 = vmax.f32 %v1790, 0.0
        %v1813 = vmax.f32 %v1795, 0.0
        %v1814 = vmul.f32 %v441, %v1798
        %v1815 = vmul.f32 %v446, %v1799
        %v1816 = vmul.f32 %v451, %v1800
        %v1817 = vmul.f32 %v456, %v1801
        %v1818 = vmul.f32 %v461, %v1802
        %v1819 = vmul.f32 %v466, %v1803
        %v1820 = vmul.f32 %v471, %v1804
        %v1821 = vmul.f32 %v476, %v1805
        %v1822 = vmul.f32 %v481, %v1806
        %v1823 = vmul.f32 %v486, %v1807
        %v1824 = vmul.f32 %v491, %v1808
        %v1825 = vmul.f32 %v496, %v1809
        %v1826 = vmul.f32 %v501, %v1810
        %v1827 = vmul.f32 %v506, %v1811
        %v1828 = vmul.f32 %v511, %v1812
        %v1829 = vmul.f32 %v516, %v1813
        %v1830 = vadd.f32 %v1814, %v1815
        %v1831 = vadd.f32 %v1830, %v1816
        %v1832 = vadd.f32 %v1831, %v1817
        %v1833 = vadd.f32 %v1832, %v1818
        %v1834 = vadd.f32 %v1833, %v1819
        %v1835 = vadd.f32 %v1834, %v1820
        %v1836 = vadd.f32 %v1835, %v1821
        %v1837 = vadd.f32 %v1836, %v1822
        %v1838 = vadd.f32 %v1837, %v1823
        %v1839 = vadd.f32 %v1838, %v1824
        %v1840 = vadd.f32 %v1839, %v1825
        %v1841 = vadd.f32 %v1840, %v1826
        %v1842 = vadd.f32 %v1841, %v1827
        %v1843 = vadd.f32 %v1842, %v1828
        %v1844 = vadd.f32 %v1843, %v1829
        %v1845 = vrot.slane %v1844, 4
        %v1846 = vadd.f32 %v1844, %v1845
        %v1847 = vrot.slane %v1846, 2
        %v1848 = vadd.f32 %v1846, %v1847
        %v1849 = vrot.slane %v1848, 1
        %v1850 = vadd.f32 %v1848, %v1849
        %1851 = vst [vmem:[#allocation5 + $0x6] sm:$0x1] %v1850
        %s1852 = scalar_lea.vmem %s197, 896 [#allocation9]
        %v1853 = vld [vmem:[%s1852] sm:$0xff]
        %v1854 = vld [vmem:[%s1852 + $0x8] sm:$0xff]
        %v1855 = vld [vmem:[%s1852 + $0x10] sm:$0xff]
        %v1856 = vld [vmem:[%s1852 + $0x18] sm:$0xff]
        %v1857 = vld [vmem:[%s1852 + $0x20] sm:$0xff]
        %v1858 = vld [vmem:[%s1852 + $0x28] sm:$0xff]
        %v1859 = vld [vmem:[%s1852 + $0x30] sm:$0xff]
        %v1860 = vld [vmem:[%s1852 + $0x38] sm:$0xff]
        %v1861 = vld [vmem:[%s1852 + $0x40] sm:$0xff]
        %v1862 = vld [vmem:[%s1852 + $0x48] sm:$0xff]
        %v1863 = vld [vmem:[%s1852 + $0x50] sm:$0xff]
        %v1864 = vld [vmem:[%s1852 + $0x58] sm:$0xff]
        %v1865 = vld [vmem:[%s1852 + $0x60] sm:$0xff]
        %v1866 = vld [vmem:[%s1852 + $0x68] sm:$0xff]
        %v1867 = vld [vmem:[%s1852 + $0x70] sm:$0xff]
        %v1868 = vld [vmem:[%s1852 + $0x78] sm:$0xff]
        %1869 = vmatprep.subr.mxu0 0.0
        %1870 = vmatpush1.msra.mxu0 %v1853
        %1871 = vmatprep.subr.mxu0 0.0
        %1872 = vmatpush1.msra.mxu0 %v1854
        %1873 = vmatprep.subr.mxu0 0.0
        %1874 = vmatpush1.msra.mxu0 %v1855
        %1875 = vmatprep.subr.mxu0 0.0
        %1876 = vmatpush1.msra.mxu0 %v1856
        %1877 = vmatprep.subr.mxu0 0.0
        %1878 = vmatpush1.msra.mxu0 %v1857
        %1879 = vmatprep.subr.mxu0 0.0
        %1880 = vmatpush1.msra.mxu0 %v1858
        %1881 = vmatprep.subr.mxu0 0.0
        %1882 = vmatpush1.msra.mxu0 %v1859
        %1883 = vmatprep.subr.mxu0 0.0
        %1884 = vmatpush1.msra.mxu0 %v1860
        %1885 = vmatprep.subr.mxu0 0.0
        %1886 = vmatpush1.msra.mxu0 %v1861
        %1887 = vmatprep.subr.mxu0 0.0
        %1888 = vmatpush1.msra.mxu0 %v1862
        %1889 = vmatprep.subr.mxu0 0.0
        %1890 = vmatpush1.msra.mxu0 %v1863
        %1891 = vmatprep.subr.mxu0 0.0
        %1892 = vmatpush1.msra.mxu0 %v1864
        %1893 = vmatprep.subr.mxu0 0.0
        %1894 = vmatpush1.msra.mxu0 %v1865
        %1895 = vmatprep.subr.mxu0 0.0
        %1896 = vmatpush1.msra.mxu0 %v1866
        %1897 = vmatprep.subr.mxu0 0.0
        %1898 = vmatpush1.msra.mxu0 %v1867
        %1899 = vmatprep.subr.mxu0 0.0
        %1900 = vmatpush1.msra.mxu0 %v1868
        %1901 = vmatprep.subr.mxu0 0.0
        %1902 = vmatpush1.msra.mxu0 0.0
        %1903 = vmatprep.subr.mxu0 0.0
        %1904 = vmatpush1.msra.mxu0 0.0
        %1905 = vmatprep.subr.mxu0 0.0
        %1906 = vmatpush1.msra.mxu0 0.0
        %1907 = vmatprep.subr.mxu0 0.0
        %1908 = vmatpush1.msra.mxu0 0.0
        %1909 = vmatprep.subr.mxu0 0.0
        %1910 = vmatpush1.msra.mxu0 0.0
        %1911 = vmatprep.subr.mxu0 0.0
        %1912 = vmatpush1.msra.mxu0 0.0
        %1913 = vmatprep.subr.mxu0 0.0
        %1914 = vmatpush1.msra.mxu0 0.0
        %1915 = vmatprep.subr.mxu0 0.0
        %1916 = vmatpush1.msra.mxu0 0.0
        %1917 = vmatprep.subr.mxu0 0.0
        %1918 = vmatpush1.msra.mxu0 0.0
        %1919 = vmatprep.subr.mxu0 0.0
        %1920 = vmatpush1.msra.mxu0 0.0
        %1921 = vmatprep.subr.mxu0 0.0
        %1922 = vmatpush1.msra.mxu0 0.0
        %1923 = vmatprep.subr.mxu0 0.0
        %1924 = vmatpush1.msra.mxu0 0.0
        %1925 = vmatprep.subr.mxu0 0.0
        %1926 = vmatpush1.msra.mxu0 0.0
        %1927 = vmatprep.subr.mxu0 0.0
        %1928 = vmatpush1.msra.mxu0 0.0
        %1929 = vmatprep.subr.mxu0 0.0
        %1930 = vmatpush1.msra.mxu0 0.0
        %1931 = vmatprep.subr.mxu0 0.0
        %1932 = vmatpush1.msra.mxu0 0.0
        %1933 = vmatprep.mubr.f32.mxu0 0.0
        %1934 = vmatmul.mubr.f32.gmra.mrb[0].mxu0 %v229
        %v1935 = vpop.f32.mrb[0].mxu0
        %v1936 = vadd.f32 0.0, %v1935
        %v1937 = vpop.f32.mrb[0].mxu0
        %1938 = vmatprep.mubr.f32.mxu0 0.0
        %1939 = vmatmul.mubr.f32.gmra.mrb[0].mxu0 %v230
        %v1940 = vpop.f32.mrb[0].mxu0
        %v1941 = vadd.f32 0.0, %v1940
        %v1942 = vpop.f32.mrb[0].mxu0
        %1943 = vmatprep.mubr.f32.mxu0 0.0
        %1944 = vmatmul.mubr.f32.gmra.mrb[0].mxu0 %v231
        %v1945 = vpop.f32.mrb[0].mxu0
        %v1946 = vadd.f32 0.0, %v1945
        %v1947 = vpop.f32.mrb[0].mxu0
        %1948 = vmatprep.mubr.f32.mxu0 0.0
        %1949 = vmatmul.mubr.f32.gmra.mrb[0].mxu0 %v232
        %v1950 = vpop.f32.mrb[0].mxu0
        %v1951 = vadd.f32 0.0, %v1950
        %v1952 = vpop.f32.mrb[0].mxu0
        %1953 = vmatprep.mubr.f32.mxu0 0.0
        %1954 = vmatmul.mubr.f32.gmra.mrb[0].mxu0 %v233
        %v1955 = vpop.f32.mrb[0].mxu0
        %v1956 = vadd.f32 0.0, %v1955
        %v1957 = vpop.f32.mrb[0].mxu0
        %1958 = vmatprep.mubr.f32.mxu0 0.0
        %1959 = vmatmul.mubr.f32.gmra.mrb[0].mxu0 %v234
        %v1960 = vpop.f32.mrb[0].mxu0
        %v1961 = vadd.f32 0.0, %v1960
        %v1962 = vpop.f32.mrb[0].mxu0
        %1963 = vmatprep.mubr.f32.mxu0 0.0
        %1964 = vmatmul.mubr.f32.gmra.mrb[0].mxu0 %v235
        %v1965 = vpop.f32.mrb[0].mxu0
        %v1966 = vadd.f32 0.0, %v1965
        %v1967 = vpop.f32.mrb[0].mxu0
        %1968 = vmatprep.mubr.f32.mxu0 0.0
        %1969 = vmatmul.mubr.f32.gmra.mrb[0].mxu0 %v236
        %v1970 = vpop.f32.mrb[0].mxu0
        %v1971 = vadd.f32 0.0, %v1970
        %v1972 = vpop.f32.mrb[0].mxu0
        %1973 = vmatprep.mubr.f32.mxu0 0.0
        %1974 = vmatmul.mubr.f32.gmra.mrb[0].mxu0 %v237
        %v1975 = vpop.f32.mrb[0].mxu0
        %v1976 = vadd.f32 0.0, %v1975
        %v1977 = vpop.f32.mrb[0].mxu0
        %1978 = vmatprep.mubr.f32.mxu0 0.0
        %1979 = vmatmul.mubr.f32.gmra.mrb[0].mxu0 %v238
        %v1980 = vpop.f32.mrb[0].mxu0
        %v1981 = vadd.f32 0.0, %v1980
        %v1982 = vpop.f32.mrb[0].mxu0
        %1983 = vmatprep.mubr.f32.mxu0 0.0
        %1984 = vmatmul.mubr.f32.gmra.mrb[0].mxu0 %v239
        %v1985 = vpop.f32.mrb[0].mxu0
        %v1986 = vadd.f32 0.0, %v1985
        %v1987 = vpop.f32.mrb[0].mxu0
        %1988 = vmatprep.mubr.f32.mxu0 0.0
        %1989 = vmatmul.mubr.f32.gmra.mrb[0].mxu0 %v240
        %v1990 = vpop.f32.mrb[0].mxu0
        %v1991 = vadd.f32 0.0, %v1990
        %v1992 = vpop.f32.mrb[0].mxu0
        %1993 = vmatprep.mubr.f32.mxu0 0.0
        %1994 = vmatmul.mubr.f32.gmra.mrb[0].mxu0 %v241
        %v1995 = vpop.f32.mrb[0].mxu0
        %v1996 = vadd.f32 0.0, %v1995
        %v1997 = vpop.f32.mrb[0].mxu0
        %1998 = vmatprep.mubr.f32.mxu0 0.0
        %1999 = vmatmul.mubr.f32.gmra.mrb[0].mxu0 %v242
        %v2000 = vpop.f32.mrb[0].mxu0
        %v2001 = vadd.f32 0.0, %v2000
        %v2002 = vpop.f32.mrb[0].mxu0
        %2003 = vmatprep.mubr.f32.mxu0 0.0
        %2004 = vmatmul.mubr.f32.gmra.mrb[0].mxu0 %v243
        %v2005 = vpop.f32.mrb[0].mxu0
        %v2006 = vadd.f32 0.0, %v2005
        %v2007 = vpop.f32.mrb[0].mxu0
        %2008 = vmatprep.mubr.f32.mxu0 0.0
        %2009 = vmatmul.mubr.f32.gmra.mrb[0].mxu0 %v244
        %v2010 = vpop.f32.mrb[0].mxu0
        %v2011 = vadd.f32 0.0, %v2010
        %v2012 = vpop.f32.mrb[0].mxu0
        %2013 = vdwg.mxu0
        %v2014 = vmax.f32 %v1936, 0.0
        %v2015 = vmax.f32 %v1941, 0.0
        %v2016 = vmax.f32 %v1946, 0.0
        %v2017 = vmax.f32 %v1951, 0.0
        %v2018 = vmax.f32 %v1956, 0.0
        %v2019 = vmax.f32 %v1961, 0.0
        %v2020 = vmax.f32 %v1966, 0.0
        %v2021 = vmax.f32 %v1971, 0.0
        %v2022 = vmax.f32 %v1976, 0.0
        %v2023 = vmax.f32 %v1981, 0.0
        %v2024 = vmax.f32 %v1986, 0.0
        %v2025 = vmax.f32 %v1991, 0.0
        %v2026 = vmax.f32 %v1996, 0.0
        %v2027 = vmax.f32 %v2001, 0.0
        %v2028 = vmax.f32 %v2006, 0.0
        %v2029 = vmax.f32 %v2011, 0.0
        %v2030 = vmul.f32 %v441, %v2014
        %v2031 = vmul.f32 %v446, %v2015
        %v2032 = vmul.f32 %v451, %v2016
        %v2033 = vmul.f32 %v456, %v2017
        %v2034 = vmul.f32 %v461, %v2018
        %v2035 = vmul.f32 %v466, %v2019
        %v2036 = vmul.f32 %v471, %v2020
        %v2037 = vmul.f32 %v476, %v2021
        %v2038 = vmul.f32 %v481, %v2022
        %v2039 = vmul.f32 %v486, %v2023
        %v2040 = vmul.f32 %v491, %v2024
        %v2041 = vmul.f32 %v496, %v2025
        %v2042 = vmul.f32 %v501, %v2026
        %v2043 = vmul.f32 %v506, %v2027
        %v2044 = vmul.f32 %v511, %v2028
        %v2045 = vmul.f32 %v516, %v2029
        %v2046 = vadd.f32 %v2030, %v2031
        %v2047 = vadd.f32 %v2046, %v2032
        %v2048 = vadd.f32 %v2047, %v2033
        %v2049 = vadd.f32 %v2048, %v2034
        %v2050 = vadd.f32 %v2049, %v2035
        %v2051 = vadd.f32 %v2050, %v2036
        %v2052 = vadd.f32 %v2051, %v2037
        %v2053 = vadd.f32 %v2052, %v2038
        %v2054 = vadd.f32 %v2053, %v2039
        %v2055 = vadd.f32 %v2054, %v2040
        %v2056 = vadd.f32 %v2055, %v2041
        %v2057 = vadd.f32 %v2056, %v2042
        %v2058 = vadd.f32 %v2057, %v2043
        %v2059 = vadd.f32 %v2058, %v2044
        %v2060 = vadd.f32 %v2059, %v2045
        %v2061 = vrot.slane %v2060, 4
        %v2062 = vadd.f32 %v2060, %v2061
        %v2063 = vrot.slane %v2062, 2
        %v2064 = vadd.f32 %v2062, %v2063
        %v2065 = vrot.slane %v2064, 1
        %v2066 = vadd.f32 %v2064, %v2065
        %2067 = vst [vmem:[#allocation5 + $0x7] sm:$0x1] %v2066
        %v2068 = vld [vmem:[#allocation5] sm:$0xff]
        %v2069 = vadd.f32 %v2068, 0.0
        %v2070 = vmul.f32 %v2069, 0.9999
        %v2071 = vld [vmem:[#allocation2] sm:$0xff]
        %2072 = vmax.xlane.f32.xlu0 %v2070
        %v2073 = vpop.xlane.xlu0 %2072
        %v2074 = vmax.f32 %v2071, %v2073
        %v2075 = vsub.f32 %v2071, %v2074
        %v2076 = vmul.f32 %v2075, 1.442695
        %v2077 = vpow.pop %v2076
        %2079 = vset.pattern.permute.xlu0 0
        %2080 = vperm.xlu0 %2079, %v2074
        %v2081 = vpop.permute.xlu0 %2080
        %v2083 = vsub.f32 %v2070, %v2081
        %v2084 = vmul.f32 %v2083, 1.442695
        %v2085 = vpow.pop %v2084
        %v2086 = vld [vmem:[%s197] sm:$0xff]
        %v2087 = vld [vmem:[%s197 + $0x8] sm:$0xff]
        %v2088 = vld [vmem:[%s197 + $0x10] sm:$0xff]
        %v2089 = vld [vmem:[%s197 + $0x18] sm:$0xff]
        %v2090 = vld [vmem:[%s197 + $0x20] sm:$0xff]
        %v2091 = vld [vmem:[%s197 + $0x28] sm:$0xff]
        %v2092 = vld [vmem:[%s197 + $0x30] sm:$0xff]
        %v2093 = vld [vmem:[%s197 + $0x38] sm:$0xff]
        %v2094 = vld [vmem:[%s197 + $0x40] sm:$0xff]
        %v2095 = vld [vmem:[%s197 + $0x48] sm:$0xff]
        %v2096 = vld [vmem:[%s197 + $0x50] sm:$0xff]
        %v2097 = vld [vmem:[%s197 + $0x58] sm:$0xff]
        %v2098 = vld [vmem:[%s197 + $0x60] sm:$0xff]
        %v2099 = vld [vmem:[%s197 + $0x68] sm:$0xff]
        %v2100 = vld [vmem:[%s197 + $0x70] sm:$0xff]
        %v2101 = vld [vmem:[%s197 + $0x78] sm:$0xff]
        %v2102 = vld [vmem:[%s197 + $0x80] sm:$0xff]
        %v2103 = vld [vmem:[%s197 + $0x88] sm:$0xff]
        %v2104 = vld [vmem:[%s197 + $0x90] sm:$0xff]
        %v2105 = vld [vmem:[%s197 + $0x98] sm:$0xff]
        %v2106 = vld [vmem:[%s197 + $0xa0] sm:$0xff]
        %v2107 = vld [vmem:[%s197 + $0xa8] sm:$0xff]
        %v2108 = vld [vmem:[%s197 + $0xb0] sm:$0xff]
        %v2109 = vld [vmem:[%s197 + $0xb8] sm:$0xff]
        %v2110 = vld [vmem:[%s197 + $0xc0] sm:$0xff]
        %v2111 = vld [vmem:[%s197 + $0xc8] sm:$0xff]
        %v2112 = vld [vmem:[%s197 + $0xd0] sm:$0xff]
        %v2113 = vld [vmem:[%s197 + $0xd8] sm:$0xff]
        %v2114 = vld [vmem:[%s197 + $0xe0] sm:$0xff]
        %v2115 = vld [vmem:[%s197 + $0xe8] sm:$0xff]
        %v2116 = vld [vmem:[%s197 + $0xf0] sm:$0xff]
        %v2117 = vld [vmem:[%s197 + $0xf8] sm:$0xff]
        %v2118 = vld [vmem:[%s197 + $0x100] sm:$0xff]
        %v2119 = vld [vmem:[%s197 + $0x108] sm:$0xff]
        %v2120 = vld [vmem:[%s197 + $0x110] sm:$0xff]
        %v2121 = vld [vmem:[%s197 + $0x118] sm:$0xff]
        %v2122 = vld [vmem:[%s197 + $0x120] sm:$0xff]
        %v2123 = vld [vmem:[%s197 + $0x128] sm:$0xff]
        %v2124 = vld [vmem:[%s197 + $0x130] sm:$0xff]
        %v2125 = vld [vmem:[%s197 + $0x138] sm:$0xff]
        %v2126 = vld [vmem:[%s197 + $0x140] sm:$0xff]
        %v2127 = vld [vmem:[%s197 + $0x148] sm:$0xff]
        %v2128 = vld [vmem:[%s197 + $0x150] sm:$0xff]
        %v2129 = vld [vmem:[%s197 + $0x158] sm:$0xff]
        %v2130 = vld [vmem:[%s197 + $0x160] sm:$0xff]
        %v2131 = vld [vmem:[%s197 + $0x168] sm:$0xff]
        %v2132 = vld [vmem:[%s197 + $0x170] sm:$0xff]
        %v2133 = vld [vmem:[%s197 + $0x178] sm:$0xff]
        %v2134 = vld [vmem:[%s197 + $0x180] sm:$0xff]
        %v2135 = vld [vmem:[%s197 + $0x188] sm:$0xff]
        %v2136 = vld [vmem:[%s197 + $0x190] sm:$0xff]
        %v2137 = vld [vmem:[%s197 + $0x198] sm:$0xff]
        %v2138 = vld [vmem:[%s197 + $0x1a0] sm:$0xff]
        %v2139 = vld [vmem:[%s197 + $0x1a8] sm:$0xff]
        %v2140 = vld [vmem:[%s197 + $0x1b0] sm:$0xff]
        %v2141 = vld [vmem:[%s197 + $0x1b8] sm:$0xff]
        %v2142 = vld [vmem:[%s197 + $0x1c0] sm:$0xff]
        %v2143 = vld [vmem:[%s197 + $0x1c8] sm:$0xff]
        %v2144 = vld [vmem:[%s197 + $0x1d0] sm:$0xff]
        %v2145 = vld [vmem:[%s197 + $0x1d8] sm:$0xff]
        %v2146 = vld [vmem:[%s197 + $0x1e0] sm:$0xff]
        %v2147 = vld [vmem:[%s197 + $0x1e8] sm:$0xff]
        %v2148 = vld [vmem:[%s197 + $0x1f0] sm:$0xff]
        %v2149 = vld [vmem:[%s197 + $0x1f8] sm:$0xff]
        %v2150 = vld [vmem:[%s197 + $0x200] sm:$0xff]
        %v2151 = vld [vmem:[%s197 + $0x208] sm:$0xff]
        %v2152 = vld [vmem:[%s197 + $0x210] sm:$0xff]
        %v2153 = vld [vmem:[%s197 + $0x218] sm:$0xff]
        %v2154 = vld [vmem:[%s197 + $0x220] sm:$0xff]
        %v2155 = vld [vmem:[%s197 + $0x228] sm:$0xff]
        %v2156 = vld [vmem:[%s197 + $0x230] sm:$0xff]
        %v2157 = vld [vmem:[%s197 + $0x238] sm:$0xff]
        %v2158 = vld [vmem:[%s197 + $0x240] sm:$0xff]
        %v2159 = vld [vmem:[%s197 + $0x248] sm:$0xff]
        %v2160 = vld [vmem:[%s197 + $0x250] sm:$0xff]
        %v2161 = vld [vmem:[%s197 + $0x258] sm:$0xff]
        %v2162 = vld [vmem:[%s197 + $0x260] sm:$0xff]
        %v2163 = vld [vmem:[%s197 + $0x268] sm:$0xff]
        %v2164 = vld [vmem:[%s197 + $0x270] sm:$0xff]
        %v2165 = vld [vmem:[%s197 + $0x278] sm:$0xff]
        %v2166 = vld [vmem:[%s197 + $0x280] sm:$0xff]
        %v2167 = vld [vmem:[%s197 + $0x288] sm:$0xff]
        %v2168 = vld [vmem:[%s197 + $0x290] sm:$0xff]
        %v2169 = vld [vmem:[%s197 + $0x298] sm:$0xff]
        %v2170 = vld [vmem:[%s197 + $0x2a0] sm:$0xff]
        %v2171 = vld [vmem:[%s197 + $0x2a8] sm:$0xff]
        %v2172 = vld [vmem:[%s197 + $0x2b0] sm:$0xff]
        %v2173 = vld [vmem:[%s197 + $0x2b8] sm:$0xff]
        %v2174 = vld [vmem:[%s197 + $0x2c0] sm:$0xff]
        %v2175 = vld [vmem:[%s197 + $0x2c8] sm:$0xff]
        %v2176 = vld [vmem:[%s197 + $0x2d0] sm:$0xff]
        %v2177 = vld [vmem:[%s197 + $0x2d8] sm:$0xff]
        %v2178 = vld [vmem:[%s197 + $0x2e0] sm:$0xff]
        %v2179 = vld [vmem:[%s197 + $0x2e8] sm:$0xff]
        %v2180 = vld [vmem:[%s197 + $0x2f0] sm:$0xff]
        %v2181 = vld [vmem:[%s197 + $0x2f8] sm:$0xff]
        %v2182 = vld [vmem:[%s197 + $0x300] sm:$0xff]
        %v2183 = vld [vmem:[%s197 + $0x308] sm:$0xff]
        %v2184 = vld [vmem:[%s197 + $0x310] sm:$0xff]
        %v2185 = vld [vmem:[%s197 + $0x318] sm:$0xff]
        %v2186 = vld [vmem:[%s197 + $0x320] sm:$0xff]
        %v2187 = vld [vmem:[%s197 + $0x328] sm:$0xff]
        %v2188 = vld [vmem:[%s197 + $0x330] sm:$0xff]
        %v2189 = vld [vmem:[%s197 + $0x338] sm:$0xff]
        %v2190 = vld [vmem:[%s197 + $0x340] sm:$0xff]
        %v2191 = vld [vmem:[%s197 + $0x348] sm:$0xff]
        %v2192 = vld [vmem:[%s197 + $0x350] sm:$0xff]
        %v2193 = vld [vmem:[%s197 + $0x358] sm:$0xff]
        %v2194 = vld [vmem:[%s197 + $0x360] sm:$0xff]
        %v2195 = vld [vmem:[%s197 + $0x368] sm:$0xff]
        %v2196 = vld [vmem:[%s197 + $0x370] sm:$0xff]
        %v2197 = vld [vmem:[%s197 + $0x378] sm:$0xff]
        %v2198 = vld [vmem:[%s197 + $0x380] sm:$0xff]
        %v2199 = vld [vmem:[%s197 + $0x388] sm:$0xff]
        %v2200 = vld [vmem:[%s197 + $0x390] sm:$0xff]
        %v2201 = vld [vmem:[%s197 + $0x398] sm:$0xff]
        %v2202 = vld [vmem:[%s197 + $0x3a0] sm:$0xff]
        %v2203 = vld [vmem:[%s197 + $0x3a8] sm:$0xff]
        %v2204 = vld [vmem:[%s197 + $0x3b0] sm:$0xff]
        %v2205 = vld [vmem:[%s197 + $0x3b8] sm:$0xff]
        %v2206 = vld [vmem:[%s197 + $0x3c0] sm:$0xff]
        %v2207 = vld [vmem:[%s197 + $0x3c8] sm:$0xff]
        %v2208 = vld [vmem:[%s197 + $0x3d0] sm:$0xff]
        %v2209 = vld [vmem:[%s197 + $0x3d8] sm:$0xff]
        %v2210 = vld [vmem:[%s197 + $0x3e0] sm:$0xff]
        %v2211 = vld [vmem:[%s197 + $0x3e8] sm:$0xff]
        %v2212 = vld [vmem:[%s197 + $0x3f0] sm:$0xff]
        %v2213 = vld [vmem:[%s197 + $0x3f8] sm:$0xff]
        %v2214 = vld [vmem:[#allocation4] sm:$0xff]
        %2216 = vset.pattern.permute.xlu0 0
        %2217 = vperm.xlu0 %2216, %v2077
        %v2218 = vpop.permute.xlu0 %2217
        %v2220 = vmul.f32 %v2218, %v2214
        %v2222 = vcombine.high %v2085, %v2085
        %v2224 = vunpack.c.l.s4 1966171168
        %v2225 = vunpack.c.0.s8 %v2224
        %v2226 = vlaneseq
        %v2227 = vshrl.u32 %v2226, 7
        %v2228 = vsub.s32 %v2225, %v2227
        %v2229 = vrot.slane %v2085, %v2228
        %v2231 = vunpack.c.l.s4 1966171168
        %v2232 = vunpack.c.0.s8 %v2231
        %v2233 = vlaneseq
        %v2234 = vshrl.u32 %v2233, 7
        %v2235 = vsub.s32 %v2232, %v2234
        %v2236 = vrot.slane %v2222, %v2235
        %v2237 = vcombine.high %v2229, %v2229
        %v2238 = vcombine.high %v2236, %v2236
        %v2240 = vunpack.c.l.s4 1966171168
        %v2241 = vunpack.c.0.s8 %v2240
        %v2242 = vlaneseq
        %v2243 = vshrl.u32 %v2242, 7
        %v2244 = vsub.s32 %v2241, %v2243
        %v2245 = vrot.slane %v2229, %v2244
        %v2247 = vunpack.c.l.s4 1966171168
        %v2248 = vunpack.c.0.s8 %v2247
        %v2249 = vlaneseq
        %v2250 = vshrl.u32 %v2249, 7
        %v2251 = vsub.s32 %v2248, %v2250
        %v2252 = vrot.slane %v2236, %v2251
        %v2254 = vunpack.c.l.s4 1966171168
        %v2255 = vunpack.c.0.s8 %v2254
        %v2256 = vlaneseq
        %v2257 = vshrl.u32 %v2256, 7
        %v2258 = vsub.s32 %v2255, %v2257
        %v2259 = vrot.slane %v2237, %v2258
        %v2261 = vunpack.c.l.s4 1966171168
        %v2262 = vunpack.c.0.s8 %v2261
        %v2263 = vlaneseq
        %v2264 = vshrl.u32 %v2263, 7
        %v2265 = vsub.s32 %v2262, %v2264
        %v2266 = vrot.slane %v2238, %v2265
        %v2267 = vcombine.high %v2245, %v2245
        %v2268 = vcombine.high %v2252, %v2252
        %v2269 = vcombine.high %v2259, %v2259
        %v2270 = vcombine.high %v2266, %v2266
        %v2271 = vlaneseq
        %v2272 = vshrl.u32 %v2271, 7
        %v2273 = vsub.s32 0, %v2272
        %v2274 = vrot.slane %v2245, %v2273
        %v2275 = vlaneseq
        %v2276 = vshrl.u32 %v2275, 7
        %v2277 = vsub.s32 0, %v2276
        %v2278 = vrot.slane %v2259, %v2277
        %v2279 = vlaneseq
        %v2280 = vshrl.u32 %v2279, 7
        %v2281 = vsub.s32 0, %v2280
        %v2282 = vrot.slane %v2267, %v2281
        %v2283 = vlaneseq
        %v2284 = vshrl.u32 %v2283, 7
        %v2285 = vsub.s32 0, %v2284
        %v2286 = vrot.slane %v2269, %v2285
        %v2287 = vlaneseq
        %v2288 = vshrl.u32 %v2287, 7
        %v2289 = vsub.s32 0, %v2288
        %v2290 = vrot.slane %v2252, %v2289
        %v2291 = vlaneseq
        %v2292 = vshrl.u32 %v2291, 7
        %v2293 = vsub.s32 0, %v2292
        %v2294 = vrot.slane %v2266, %v2293
        %v2295 = vlaneseq
        %v2296 = vshrl.u32 %v2295, 7
        %v2297 = vsub.s32 0, %v2296
        %v2298 = vrot.slane %v2268, %v2297
        %v2299 = vlaneseq
        %v2300 = vshrl.u32 %v2299, 7
        %v2301 = vsub.s32 0, %v2300
        %v2302 = vrot.slane %v2270, %v2301
        %v2311 = vmul.f32 %v2086, %v2274
        %v2312 = vmul.f32 %v2087, %v2274
        %v2313 = vmul.f32 %v2088, %v2274
        %v2314 = vmul.f32 %v2089, %v2274
        %v2315 = vmul.f32 %v2090, %v2274
        %v2316 = vmul.f32 %v2091, %v2274
        %v2317 = vmul.f32 %v2092, %v2274
        %v2318 = vmul.f32 %v2093, %v2274
        %v2319 = vmul.f32 %v2094, %v2274
        %v2320 = vmul.f32 %v2095, %v2274
        %v2321 = vmul.f32 %v2096, %v2274
        %v2322 = vmul.f32 %v2097, %v2274
        %v2323 = vmul.f32 %v2098, %v2274
        %v2324 = vmul.f32 %v2099, %v2274
        %v2325 = vmul.f32 %v2100, %v2274
        %v2326 = vmul.f32 %v2101, %v2274
        %v2327 = vmul.f32 %v2102, %v2278
        %v2328 = vmul.f32 %v2103, %v2278
        %v2329 = vmul.f32 %v2104, %v2278
        %v2330 = vmul.f32 %v2105, %v2278
        %v2331 = vmul.f32 %v2106, %v2278
        %v2332 = vmul.f32 %v2107, %v2278
        %v2333 = vmul.f32 %v2108, %v2278
        %v2334 = vmul.f32 %v2109, %v2278
        %v2335 = vmul.f32 %v2110, %v2278
        %v2336 = vmul.f32 %v2111, %v2278
        %v2337 = vmul.f32 %v2112, %v2278
        %v2338 = vmul.f32 %v2113, %v2278
        %v2339 = vmul.f32 %v2114, %v2278
        %v2340 = vmul.f32 %v2115, %v2278
        %v2341 = vmul.f32 %v2116, %v2278
        %v2342 = vmul.f32 %v2117, %v2278
        %v2343 = vmul.f32 %v2118, %v2282
        %v2344 = vmul.f32 %v2119, %v2282
        %v2345 = vmul.f32 %v2120, %v2282
        %v2346 = vmul.f32 %v2121, %v2282
        %v2347 = vmul.f32 %v2122, %v2282
        %v2348 = vmul.f32 %v2123, %v2282
        %v2349 = vmul.f32 %v2124, %v2282
        %v2350 = vmul.f32 %v2125, %v2282
        %v2351 = vmul.f32 %v2126, %v2282
        %v2352 = vmul.f32 %v2127, %v2282
        %v2353 = vmul.f32 %v2128, %v2282
        %v2354 = vmul.f32 %v2129, %v2282
        %v2355 = vmul.f32 %v2130, %v2282
        %v2356 = vmul.f32 %v2131, %v2282
        %v2357 = vmul.f32 %v2132, %v2282
        %v2358 = vmul.f32 %v2133, %v2282
        %v2359 = vmul.f32 %v2134, %v2286
        %v2360 = vmul.f32 %v2135, %v2286
        %v2361 = vmul.f32 %v2136, %v2286
        %v2362 = vmul.f32 %v2137, %v2286
        %v2363 = vmul.f32 %v2138, %v2286
        %v2364 = vmul.f32 %v2139, %v2286
        %v2365 = vmul.f32 %v2140, %v2286
        %v2366 = vmul.f32 %v2141, %v2286
        %v2367 = vmul.f32 %v2142, %v2286
        %v2368 = vmul.f32 %v2143, %v2286
        %v2369 = vmul.f32 %v2144, %v2286
        %v2370 = vmul.f32 %v2145, %v2286
        %v2371 = vmul.f32 %v2146, %v2286
        %v2372 = vmul.f32 %v2147, %v2286
        %v2373 = vmul.f32 %v2148, %v2286
        %v2374 = vmul.f32 %v2149, %v2286
        %v2375 = vmul.f32 %v2150, %v2290
        %v2376 = vmul.f32 %v2151, %v2290
        %v2377 = vmul.f32 %v2152, %v2290
        %v2378 = vmul.f32 %v2153, %v2290
        %v2379 = vmul.f32 %v2154, %v2290
        %v2380 = vmul.f32 %v2155, %v2290
        %v2381 = vmul.f32 %v2156, %v2290
        %v2382 = vmul.f32 %v2157, %v2290
        %v2383 = vmul.f32 %v2158, %v2290
        %v2384 = vmul.f32 %v2159, %v2290
        %v2385 = vmul.f32 %v2160, %v2290
        %v2386 = vmul.f32 %v2161, %v2290
        %v2387 = vmul.f32 %v2162, %v2290
        %v2388 = vmul.f32 %v2163, %v2290
        %v2389 = vmul.f32 %v2164, %v2290
        %v2390 = vmul.f32 %v2165, %v2290
        %v2391 = vmul.f32 %v2166, %v2294
        %v2392 = vmul.f32 %v2167, %v2294
        %v2393 = vmul.f32 %v2168, %v2294
        %v2394 = vmul.f32 %v2169, %v2294
        %v2395 = vmul.f32 %v2170, %v2294
        %v2396 = vmul.f32 %v2171, %v2294
        %v2397 = vmul.f32 %v2172, %v2294
        %v2398 = vmul.f32 %v2173, %v2294
        %v2399 = vmul.f32 %v2174, %v2294
        %v2400 = vmul.f32 %v2175, %v2294
        %v2401 = vmul.f32 %v2176, %v2294
        %v2402 = vmul.f32 %v2177, %v2294
        %v2403 = vmul.f32 %v2178, %v2294
        %v2404 = vmul.f32 %v2179, %v2294
        %v2405 = vmul.f32 %v2180, %v2294
        %v2406 = vmul.f32 %v2181, %v2294
        %v2407 = vmul.f32 %v2182, %v2298
        %v2408 = vmul.f32 %v2183, %v2298
        %v2409 = vmul.f32 %v2184, %v2298
        %v2410 = vmul.f32 %v2185, %v2298
        %v2411 = vmul.f32 %v2186, %v2298
        %v2412 = vmul.f32 %v2187, %v2298
        %v2413 = vmul.f32 %v2188, %v2298
        %v2414 = vmul.f32 %v2189, %v2298
        %v2415 = vmul.f32 %v2190, %v2298
        %v2416 = vmul.f32 %v2191, %v2298
        %v2417 = vmul.f32 %v2192, %v2298
        %v2418 = vmul.f32 %v2193, %v2298
        %v2419 = vmul.f32 %v2194, %v2298
        %v2420 = vmul.f32 %v2195, %v2298
        %v2421 = vmul.f32 %v2196, %v2298
        %v2422 = vmul.f32 %v2197, %v2298
        %v2423 = vmul.f32 %v2198, %v2302
        %v2424 = vmul.f32 %v2199, %v2302
        %v2425 = vmul.f32 %v2200, %v2302
        %v2426 = vmul.f32 %v2201, %v2302
        %v2427 = vmul.f32 %v2202, %v2302
        %v2428 = vmul.f32 %v2203, %v2302
        %v2429 = vmul.f32 %v2204, %v2302
        %v2430 = vmul.f32 %v2205, %v2302
        %v2431 = vmul.f32 %v2206, %v2302
        %v2432 = vmul.f32 %v2207, %v2302
        %v2433 = vmul.f32 %v2208, %v2302
        %v2434 = vmul.f32 %v2209, %v2302
        %v2435 = vmul.f32 %v2210, %v2302
        %v2436 = vmul.f32 %v2211, %v2302
        %v2437 = vmul.f32 %v2212, %v2302
        %v2438 = vmul.f32 %v2213, %v2302
        %2439 = vadd.xlane.f32.xlu0 %v2311
        %v2440 = vpop.xlane.xlu0 %2439
        %2441 = vadd.xlane.f32.xlu0 %v2312
        %v2442 = vpop.xlane.xlu0 %2441
        %2443 = vadd.xlane.f32.xlu0 %v2313
        %v2444 = vpop.xlane.xlu0 %2443
        %2445 = vadd.xlane.f32.xlu0 %v2314
        %v2446 = vpop.xlane.xlu0 %2445
        %2447 = vadd.xlane.f32.xlu0 %v2315
        %v2448 = vpop.xlane.xlu0 %2447
        %2449 = vadd.xlane.f32.xlu0 %v2316
        %v2450 = vpop.xlane.xlu0 %2449
        %2451 = vadd.xlane.f32.xlu0 %v2317
        %v2452 = vpop.xlane.xlu0 %2451
        %2453 = vadd.xlane.f32.xlu0 %v2318
        %v2454 = vpop.xlane.xlu0 %2453
        %2455 = vadd.xlane.f32.xlu0 %v2319
        %v2456 = vpop.xlane.xlu0 %2455
        %2457 = vadd.xlane.f32.xlu0 %v2320
        %v2458 = vpop.xlane.xlu0 %2457
        %2459 = vadd.xlane.f32.xlu0 %v2321
        %v2460 = vpop.xlane.xlu0 %2459
        %2461 = vadd.xlane.f32.xlu0 %v2322
        %v2462 = vpop.xlane.xlu0 %2461
        %2463 = vadd.xlane.f32.xlu0 %v2323
        %v2464 = vpop.xlane.xlu0 %2463
        %2465 = vadd.xlane.f32.xlu0 %v2324
        %v2466 = vpop.xlane.xlu0 %2465
        %2467 = vadd.xlane.f32.xlu0 %v2325
        %v2468 = vpop.xlane.xlu0 %2467
        %2469 = vadd.xlane.f32.xlu0 %v2326
        %v2470 = vpop.xlane.xlu0 %2469
        %2471 = vadd.xlane.f32.xlu0 %v2327
        %v2472 = vpop.xlane.xlu0 %2471
        %2473 = vadd.xlane.f32.xlu0 %v2328
        %v2474 = vpop.xlane.xlu0 %2473
        %2475 = vadd.xlane.f32.xlu0 %v2329
        %v2476 = vpop.xlane.xlu0 %2475
        %2477 = vadd.xlane.f32.xlu0 %v2330
        %v2478 = vpop.xlane.xlu0 %2477
        %2479 = vadd.xlane.f32.xlu0 %v2331
        %v2480 = vpop.xlane.xlu0 %2479
        %2481 = vadd.xlane.f32.xlu0 %v2332
        %v2482 = vpop.xlane.xlu0 %2481
        %2483 = vadd.xlane.f32.xlu0 %v2333
        %v2484 = vpop.xlane.xlu0 %2483
        %2485 = vadd.xlane.f32.xlu0 %v2334
        %v2486 = vpop.xlane.xlu0 %2485
        %2487 = vadd.xlane.f32.xlu0 %v2335
        %v2488 = vpop.xlane.xlu0 %2487
        %2489 = vadd.xlane.f32.xlu0 %v2336
        %v2490 = vpop.xlane.xlu0 %2489
        %2491 = vadd.xlane.f32.xlu0 %v2337
        %v2492 = vpop.xlane.xlu0 %2491
        %2493 = vadd.xlane.f32.xlu0 %v2338
        %v2494 = vpop.xlane.xlu0 %2493
        %2495 = vadd.xlane.f32.xlu0 %v2339
        %v2496 = vpop.xlane.xlu0 %2495
        %2497 = vadd.xlane.f32.xlu0 %v2340
        %v2498 = vpop.xlane.xlu0 %2497
        %2499 = vadd.xlane.f32.xlu0 %v2341
        %v2500 = vpop.xlane.xlu0 %2499
        %2501 = vadd.xlane.f32.xlu0 %v2342
        %v2502 = vpop.xlane.xlu0 %2501
        %2503 = vadd.xlane.f32.xlu0 %v2343
        %v2504 = vpop.xlane.xlu0 %2503
        %2505 = vadd.xlane.f32.xlu0 %v2344
        %v2506 = vpop.xlane.xlu0 %2505
        %2507 = vadd.xlane.f32.xlu0 %v2345
        %v2508 = vpop.xlane.xlu0 %2507
        %2509 = vadd.xlane.f32.xlu0 %v2346
        %v2510 = vpop.xlane.xlu0 %2509
        %2511 = vadd.xlane.f32.xlu0 %v2347
        %v2512 = vpop.xlane.xlu0 %2511
        %2513 = vadd.xlane.f32.xlu0 %v2348
        %v2514 = vpop.xlane.xlu0 %2513
        %2515 = vadd.xlane.f32.xlu0 %v2349
        %v2516 = vpop.xlane.xlu0 %2515
        %2517 = vadd.xlane.f32.xlu0 %v2350
        %v2518 = vpop.xlane.xlu0 %2517
        %2519 = vadd.xlane.f32.xlu0 %v2351
        %v2520 = vpop.xlane.xlu0 %2519
        %2521 = vadd.xlane.f32.xlu0 %v2352
        %v2522 = vpop.xlane.xlu0 %2521
        %2523 = vadd.xlane.f32.xlu0 %v2353
        %v2524 = vpop.xlane.xlu0 %2523
        %2525 = vadd.xlane.f32.xlu0 %v2354
        %v2526 = vpop.xlane.xlu0 %2525
        %2527 = vadd.xlane.f32.xlu0 %v2355
        %v2528 = vpop.xlane.xlu0 %2527
        %2529 = vadd.xlane.f32.xlu0 %v2356
        %v2530 = vpop.xlane.xlu0 %2529
        %2531 = vadd.xlane.f32.xlu0 %v2357
        %v2532 = vpop.xlane.xlu0 %2531
        %2533 = vadd.xlane.f32.xlu0 %v2358
        %v2534 = vpop.xlane.xlu0 %2533
        %2535 = vadd.xlane.f32.xlu0 %v2359
        %v2536 = vpop.xlane.xlu0 %2535
        %2537 = vadd.xlane.f32.xlu0 %v2360
        %v2538 = vpop.xlane.xlu0 %2537
        %2539 = vadd.xlane.f32.xlu0 %v2361
        %v2540 = vpop.xlane.xlu0 %2539
        %2541 = vadd.xlane.f32.xlu0 %v2362
        %v2542 = vpop.xlane.xlu0 %2541
        %2543 = vadd.xlane.f32.xlu0 %v2363
        %v2544 = vpop.xlane.xlu0 %2543
        %2545 = vadd.xlane.f32.xlu0 %v2364
        %v2546 = vpop.xlane.xlu0 %2545
        %2547 = vadd.xlane.f32.xlu0 %v2365
        %v2548 = vpop.xlane.xlu0 %2547
        %2549 = vadd.xlane.f32.xlu0 %v2366
        %v2550 = vpop.xlane.xlu0 %2549
        %2551 = vadd.xlane.f32.xlu0 %v2367
        %v2552 = vpop.xlane.xlu0 %2551
        %2553 = vadd.xlane.f32.xlu0 %v2368
        %v2554 = vpop.xlane.xlu0 %2553
        %2555 = vadd.xlane.f32.xlu0 %v2369
        %v2556 = vpop.xlane.xlu0 %2555
        %2557 = vadd.xlane.f32.xlu0 %v2370
        %v2558 = vpop.xlane.xlu0 %2557
        %2559 = vadd.xlane.f32.xlu0 %v2371
        %v2560 = vpop.xlane.xlu0 %2559
        %2561 = vadd.xlane.f32.xlu0 %v2372
        %v2562 = vpop.xlane.xlu0 %2561
        %2563 = vadd.xlane.f32.xlu0 %v2373
        %v2564 = vpop.xlane.xlu0 %2563
        %2565 = vadd.xlane.f32.xlu0 %v2374
        %v2566 = vpop.xlane.xlu0 %2565
        %2567 = vadd.xlane.f32.xlu0 %v2375
        %v2568 = vpop.xlane.xlu0 %2567
        %2569 = vadd.xlane.f32.xlu0 %v2376
        %v2570 = vpop.xlane.xlu0 %2569
        %2571 = vadd.xlane.f32.xlu0 %v2377
        %v2572 = vpop.xlane.xlu0 %2571
        %2573 = vadd.xlane.f32.xlu0 %v2378
        %v2574 = vpop.xlane.xlu0 %2573
        %2575 = vadd.xlane.f32.xlu0 %v2379
        %v2576 = vpop.xlane.xlu0 %2575
        %2577 = vadd.xlane.f32.xlu0 %v2380
        %v2578 = vpop.xlane.xlu0 %2577
        %2579 = vadd.xlane.f32.xlu0 %v2381
        %v2580 = vpop.xlane.xlu0 %2579
        %2581 = vadd.xlane.f32.xlu0 %v2382
        %v2582 = vpop.xlane.xlu0 %2581
        %2583 = vadd.xlane.f32.xlu0 %v2383
        %v2584 = vpop.xlane.xlu0 %2583
        %2585 = vadd.xlane.f32.xlu0 %v2384
        %v2586 = vpop.xlane.xlu0 %2585
        %2587 = vadd.xlane.f32.xlu0 %v2385
        %v2588 = vpop.xlane.xlu0 %2587
        %2589 = vadd.xlane.f32.xlu0 %v2386
        %v2590 = vpop.xlane.xlu0 %2589
        %2591 = vadd.xlane.f32.xlu0 %v2387
        %v2592 = vpop.xlane.xlu0 %2591
        %2593 = vadd.xlane.f32.xlu0 %v2388
        %v2594 = vpop.xlane.xlu0 %2593
        %2595 = vadd.xlane.f32.xlu0 %v2389
        %v2596 = vpop.xlane.xlu0 %2595
        %2597 = vadd.xlane.f32.xlu0 %v2390
        %v2598 = vpop.xlane.xlu0 %2597
        %2599 = vadd.xlane.f32.xlu0 %v2391
        %v2600 = vpop.xlane.xlu0 %2599
        %2601 = vadd.xlane.f32.xlu0 %v2392
        %v2602 = vpop.xlane.xlu0 %2601
        %2603 = vadd.xlane.f32.xlu0 %v2393
        %v2604 = vpop.xlane.xlu0 %2603
        %2605 = vadd.xlane.f32.xlu0 %v2394
        %v2606 = vpop.xlane.xlu0 %2605
        %2607 = vadd.xlane.f32.xlu0 %v2395
        %v2608 = vpop.xlane.xlu0 %2607
        %2609 = vadd.xlane.f32.xlu0 %v2396
        %v2610 = vpop.xlane.xlu0 %2609
        %2611 = vadd.xlane.f32.xlu0 %v2397
        %v2612 = vpop.xlane.xlu0 %2611
        %2613 = vadd.xlane.f32.xlu0 %v2398
        %v2614 = vpop.xlane.xlu0 %2613
        %2615 = vadd.xlane.f32.xlu0 %v2399
        %v2616 = vpop.xlane.xlu0 %2615
        %2617 = vadd.xlane.f32.xlu0 %v2400
        %v2618 = vpop.xlane.xlu0 %2617
        %2619 = vadd.xlane.f32.xlu0 %v2401
        %v2620 = vpop.xlane.xlu0 %2619
        %2621 = vadd.xlane.f32.xlu0 %v2402
        %v2622 = vpop.xlane.xlu0 %2621
        %2623 = vadd.xlane.f32.xlu0 %v2403
        %v2624 = vpop.xlane.xlu0 %2623
        %2625 = vadd.xlane.f32.xlu0 %v2404
        %v2626 = vpop.xlane.xlu0 %2625
        %2627 = vadd.xlane.f32.xlu0 %v2405
        %v2628 = vpop.xlane.xlu0 %2627
        %2629 = vadd.xlane.f32.xlu0 %v2406
        %v2630 = vpop.xlane.xlu0 %2629
        %2631 = vadd.xlane.f32.xlu0 %v2407
        %v2632 = vpop.xlane.xlu0 %2631
        %2633 = vadd.xlane.f32.xlu0 %v2408
        %v2634 = vpop.xlane.xlu0 %2633
        %2635 = vadd.xlane.f32.xlu0 %v2409
        %v2636 = vpop.xlane.xlu0 %2635
        %2637 = vadd.xlane.f32.xlu0 %v2410
        %v2638 = vpop.xlane.xlu0 %2637
        %2639 = vadd.xlane.f32.xlu0 %v2411
        %v2640 = vpop.xlane.xlu0 %2639
        %2641 = vadd.xlane.f32.xlu0 %v2412
        %v2642 = vpop.xlane.xlu0 %2641
        %2643 = vadd.xlane.f32.xlu0 %v2413
        %v2644 = vpop.xlane.xlu0 %2643
        %2645 = vadd.xlane.f32.xlu0 %v2414
        %v2646 = vpop.xlane.xlu0 %2645
        %2647 = vadd.xlane.f32.xlu0 %v2415
        %v2648 = vpop.xlane.xlu0 %2647
        %2649 = vadd.xlane.f32.xlu0 %v2416
        %v2650 = vpop.xlane.xlu0 %2649
        %2651 = vadd.xlane.f32.xlu0 %v2417
        %v2652 = vpop.xlane.xlu0 %2651
        %2653 = vadd.xlane.f32.xlu0 %v2418
        %v2654 = vpop.xlane.xlu0 %2653
        %2655 = vadd.xlane.f32.xlu0 %v2419
        %v2656 = vpop.xlane.xlu0 %2655
        %2657 = vadd.xlane.f32.xlu0 %v2420
        %v2658 = vpop.xlane.xlu0 %2657
        %2659 = vadd.xlane.f32.xlu0 %v2421
        %v2660 = vpop.xlane.xlu0 %2659
        %2661 = vadd.xlane.f32.xlu0 %v2422
        %v2662 = vpop.xlane.xlu0 %2661
        %2663 = vadd.xlane.f32.xlu0 %v2423
        %v2664 = vpop.xlane.xlu0 %2663
        %2665 = vadd.xlane.f32.xlu0 %v2424
        %v2666 = vpop.xlane.xlu0 %2665
        %2667 = vadd.xlane.f32.xlu0 %v2425
        %v2668 = vpop.xlane.xlu0 %2667
        %2669 = vadd.xlane.f32.xlu0 %v2426
        %v2670 = vpop.xlane.xlu0 %2669
        %2671 = vadd.xlane.f32.xlu0 %v2427
        %v2672 = vpop.xlane.xlu0 %2671
        %2673 = vadd.xlane.f32.xlu0 %v2428
        %v2674 = vpop.xlane.xlu0 %2673
        %2675 = vadd.xlane.f32.xlu0 %v2429
        %v2676 = vpop.xlane.xlu0 %2675
        %2677 = vadd.xlane.f32.xlu0 %v2430
        %v2678 = vpop.xlane.xlu0 %2677
        %2679 = vadd.xlane.f32.xlu0 %v2431
        %v2680 = vpop.xlane.xlu0 %2679
        %2681 = vadd.xlane.f32.xlu0 %v2432
        %v2682 = vpop.xlane.xlu0 %2681
        %2683 = vadd.xlane.f32.xlu0 %v2433
        %v2684 = vpop.xlane.xlu0 %2683
        %2685 = vadd.xlane.f32.xlu0 %v2434
        %v2686 = vpop.xlane.xlu0 %2685
        %2687 = vadd.xlane.f32.xlu0 %v2435
        %v2688 = vpop.xlane.xlu0 %2687
        %2689 = vadd.xlane.f32.xlu0 %v2436
        %v2690 = vpop.xlane.xlu0 %2689
        %2691 = vadd.xlane.f32.xlu0 %v2437
        %v2692 = vpop.xlane.xlu0 %2691
        %2693 = vadd.xlane.f32.xlu0 %v2438
        %v2694 = vpop.xlane.xlu0 %2693
        %v2823 = vlaneseq
        %v2824 = vand.u32 %v2823, 127
        %v2825 = vlaneseq
        %v2826 = vshrl.u32 %v2825, 7
        %v2827 = vsub.s32 %v2824, %v2826
        %v2828 = vrot.slane %v2440, %v2827
        %v2829 = vadd.s32 %v2824, 4294967288
        %v2830 = vlaneseq
        %v2831 = vshrl.u32 %v2830, 7
        %v2832 = vsub.s32 %v2829, %v2831
        %v2833 = vrot.slane %v2442, %v2832
        %vm2834 = vcmask 130112
        %v2835 = vsel %vm2834, %v2833, %v2828
        %v2836 = vadd.s32 %v2824, 4294967280
        %v2837 = vlaneseq
        %v2838 = vshrl.u32 %v2837, 7
        %v2839 = vsub.s32 %v2836, %v2838
        %v2840 = vrot.slane %v2444, %v2839
        %vm2841 = vcmask 195712
        %v2842 = vsel %vm2841, %v2840, %v2835
        %v2843 = vadd.s32 %v2824, 4294967272
        %v2844 = vlaneseq
        %v2845 = vshrl.u32 %v2844, 7
        %v2846 = vsub.s32 %v2843, %v2845
        %v2847 = vrot.slane %v2446, %v2846
        %vm2848 = vcmask 261312
        %v2849 = vsel %vm2848, %v2847, %v2842
        %v2850 = vadd.s32 %v2824, 4294967264
        %v2851 = vlaneseq
        %v2852 = vshrl.u32 %v2851, 7
        %v2853 = vsub.s32 %v2850, %v2852
        %v2854 = vrot.slane %v2448, %v2853
        %vm2855 = vcmask 326912
        %v2856 = vsel %vm2855, %v2854, %v2849
        %v2857 = vadd.s32 %v2824, 4294967256
        %v2858 = vlaneseq
        %v2859 = vshrl.u32 %v2858, 7
        %v2860 = vsub.s32 %v2857, %v2859
        %v2861 = vrot.slane %v2450, %v2860
        %vm2862 = vcmask 392512
        %v2863 = vsel %vm2862, %v2861, %v2856
        %v2864 = vadd.s32 %v2824, 4294967248
        %v2865 = vlaneseq
        %v2866 = vshrl.u32 %v2865, 7
        %v2867 = vsub.s32 %v2864, %v2866
        %v2868 = vrot.slane %v2452, %v2867
        %vm2869 = vcmask 458112
        %v2870 = vsel %vm2869, %v2868, %v2863
        %v2871 = vadd.s32 %v2824, 4294967240
        %v2872 = vlaneseq
        %v2873 = vshrl.u32 %v2872, 7
        %v2874 = vsub.s32 %v2871, %v2873
        %v2875 = vrot.slane %v2454, %v2874
        %vm2876 = vcmask 523712
        %v2877 = vsel %vm2876, %v2875, %v2870
        %v2878 = vadd.s32 %v2824, 4294967232
        %v2879 = vlaneseq
        %v2880 = vshrl.u32 %v2879, 7
        %v2881 = vsub.s32 %v2878, %v2880
        %v2882 = vrot.slane %v2456, %v2881
        %vm2883 = vcmask 589312
        %v2884 = vsel %vm2883, %v2882, %v2877
        %v2885 = vadd.s32 %v2824, 4294967224
        %v2886 = vlaneseq
        %v2887 = vshrl.u32 %v2886, 7
        %v2888 = vsub.s32 %v2885, %v2887
        %v2889 = vrot.slane %v2458, %v2888
        %vm2890 = vcmask 654912
        %v2891 = vsel %vm2890, %v2889, %v2884
        %v2892 = vadd.s32 %v2824, 4294967216
        %v2893 = vlaneseq
        %v2894 = vshrl.u32 %v2893, 7
        %v2895 = vsub.s32 %v2892, %v2894
        %v2896 = vrot.slane %v2460, %v2895
        %vm2897 = vcmask 720512
        %v2898 = vsel %vm2897, %v2896, %v2891
        %v2899 = vadd.s32 %v2824, 4294967208
        %v2900 = vlaneseq
        %v2901 = vshrl.u32 %v2900, 7
        %v2902 = vsub.s32 %v2899, %v2901
        %v2903 = vrot.slane %v2462, %v2902
        %vm2904 = vcmask 786112
        %v2905 = vsel %vm2904, %v2903, %v2898
        %v2906 = vadd.s32 %v2824, 4294967200
        %v2907 = vlaneseq
        %v2908 = vshrl.u32 %v2907, 7
        %v2909 = vsub.s32 %v2906, %v2908
        %v2910 = vrot.slane %v2464, %v2909
        %vm2911 = vcmask 851712
        %v2912 = vsel %vm2911, %v2910, %v2905
        %v2913 = vadd.s32 %v2824, 4294967192
        %v2914 = vlaneseq
        %v2915 = vshrl.u32 %v2914, 7
        %v2916 = vsub.s32 %v2913, %v2915
        %v2917 = vrot.slane %v2466, %v2916
        %vm2918 = vcmask 917312
        %v2919 = vsel %vm2918, %v2917, %v2912
        %v2920 = vadd.s32 %v2824, 4294967184
        %v2921 = vlaneseq
        %v2922 = vshrl.u32 %v2921, 7
        %v2923 = vsub.s32 %v2920, %v2922
        %v2924 = vrot.slane %v2468, %v2923
        %vm2925 = vcmask 982912
        %v2926 = vsel %vm2925, %v2924, %v2919
        %v2927 = vadd.s32 %v2824, 4294967176
        %v2928 = vlaneseq
        %v2929 = vshrl.u32 %v2928, 7
        %v2930 = vsub.s32 %v2927, %v2929
        %v2931 = vrot.slane %v2470, %v2930
        %vm2932 = vcmask 1048512
        %v2933 = vsel %vm2932, %v2931, %v2926
        %v2934 = vlaneseq
        %v2935 = vshrl.u32 %v2934, 7
        %v2936 = vsub.s32 %v2824, %v2935
        %v2937 = vrot.slane %v2472, %v2936
        %v2938 = vlaneseq
        %v2939 = vshrl.u32 %v2938, 7
        %v2940 = vsub.s32 %v2829, %v2939
        %v2941 = vrot.slane %v2474, %v2940
        %v2942 = vsel %vm2834, %v2941, %v2937
        %v2943 = vlaneseq
        %v2944 = vshrl.u32 %v2943, 7
        %v2945 = vsub.s32 %v2836, %v2944
        %v2946 = vrot.slane %v2476, %v2945
        %v2947 = vsel %vm2841, %v2946, %v2942
        %v2948 = vlaneseq
        %v2949 = vshrl.u32 %v2948, 7
        %v2950 = vsub.s32 %v2843, %v2949
        %v2951 = vrot.slane %v2478, %v2950
        %v2952 = vsel %vm2848, %v2951, %v2947
        %v2953 = vlaneseq
        %v2954 = vshrl.u32 %v2953, 7
        %v2955 = vsub.s32 %v2850, %v2954
        %v2956 = vrot.slane %v2480, %v2955
        %v2957 = vsel %vm2855, %v2956, %v2952
        %v2958 = vlaneseq
        %v2959 = vshrl.u32 %v2958, 7
        %v2960 = vsub.s32 %v2857, %v2959
        %v2961 = vrot.slane %v2482, %v2960
        %v2962 = vsel %vm2862, %v2961, %v2957
        %v2963 = vlaneseq
        %v2964 = vshrl.u32 %v2963, 7
        %v2965 = vsub.s32 %v2864, %v2964
        %v2966 = vrot.slane %v2484, %v2965
        %v2967 = vsel %vm2869, %v2966, %v2962
        %v2968 = vlaneseq
        %v2969 = vshrl.u32 %v2968, 7
        %v2970 = vsub.s32 %v2871, %v2969
        %v2971 = vrot.slane %v2486, %v2970
        %v2972 = vsel %vm2876, %v2971, %v2967
        %v2973 = vlaneseq
        %v2974 = vshrl.u32 %v2973, 7
        %v2975 = vsub.s32 %v2878, %v2974
        %v2976 = vrot.slane %v2488, %v2975
        %v2977 = vsel %vm2883, %v2976, %v2972
        %v2978 = vlaneseq
        %v2979 = vshrl.u32 %v2978, 7
        %v2980 = vsub.s32 %v2885, %v2979
        %v2981 = vrot.slane %v2490, %v2980
        %v2982 = vsel %vm2890, %v2981, %v2977
        %v2983 = vlaneseq
        %v2984 = vshrl.u32 %v2983, 7
        %v2985 = vsub.s32 %v2892, %v2984
        %v2986 = vrot.slane %v2492, %v2985
        %v2987 = vsel %vm2897, %v2986, %v2982
        %v2988 = vlaneseq
        %v2989 = vshrl.u32 %v2988, 7
        %v2990 = vsub.s32 %v2899, %v2989
        %v2991 = vrot.slane %v2494, %v2990
        %v2992 = vsel %vm2904, %v2991, %v2987
        %v2993 = vlaneseq
        %v2994 = vshrl.u32 %v2993, 7
        %v2995 = vsub.s32 %v2906, %v2994
        %v2996 = vrot.slane %v2496, %v2995
        %v2997 = vsel %vm2911, %v2996, %v2992
        %v2998 = vlaneseq
        %v2999 = vshrl.u32 %v2998, 7
        %v3000 = vsub.s32 %v2913, %v2999
        %v3001 = vrot.slane %v2498, %v3000
        %v3002 = vsel %vm2918, %v3001, %v2997
        %v3003 = vlaneseq
        %v3004 = vshrl.u32 %v3003, 7
        %v3005 = vsub.s32 %v2920, %v3004
        %v3006 = vrot.slane %v2500, %v3005
        %v3007 = vsel %vm2925, %v3006, %v3002
        %v3008 = vlaneseq
        %v3009 = vshrl.u32 %v3008, 7
        %v3010 = vsub.s32 %v2927, %v3009
        %v3011 = vrot.slane %v2502, %v3010
        %v3012 = vsel %vm2932, %v3011, %v3007
        %v3013 = vlaneseq
        %v3014 = vshrl.u32 %v3013, 7
        %v3015 = vsub.s32 %v2824, %v3014
        %v3016 = vrot.slane %v2504, %v3015
        %v3017 = vlaneseq
        %v3018 = vshrl.u32 %v3017, 7
        %v3019 = vsub.s32 %v2829, %v3018
        %v3020 = vrot.slane %v2506, %v3019
        %v3021 = vsel %vm2834, %v3020, %v3016
        %v3022 = vlaneseq
        %v3023 = vshrl.u32 %v3022, 7
        %v3024 = vsub.s32 %v2836, %v3023
        %v3025 = vrot.slane %v2508, %v3024
        %v3026 = vsel %vm2841, %v3025, %v3021
        %v3027 = vlaneseq
        %v3028 = vshrl.u32 %v3027, 7
        %v3029 = vsub.s32 %v2843, %v3028
        %v3030 = vrot.slane %v2510, %v3029
        %v3031 = vsel %vm2848, %v3030, %v3026
        %v3032 = vlaneseq
        %v3033 = vshrl.u32 %v3032, 7
        %v3034 = vsub.s32 %v2850, %v3033
        %v3035 = vrot.slane %v2512, %v3034
        %v3036 = vsel %vm2855, %v3035, %v3031
        %v3037 = vlaneseq
        %v3038 = vshrl.u32 %v3037, 7
        %v3039 = vsub.s32 %v2857, %v3038
        %v3040 = vrot.slane %v2514, %v3039
        %v3041 = vsel %vm2862, %v3040, %v3036
        %v3042 = vlaneseq
        %v3043 = vshrl.u32 %v3042, 7
        %v3044 = vsub.s32 %v2864, %v3043
        %v3045 = vrot.slane %v2516, %v3044
        %v3046 = vsel %vm2869, %v3045, %v3041
        %v3047 = vlaneseq
        %v3048 = vshrl.u32 %v3047, 7
        %v3049 = vsub.s32 %v2871, %v3048
        %v3050 = vrot.slane %v2518, %v3049
        %v3051 = vsel %vm2876, %v3050, %v3046
        %v3052 = vlaneseq
        %v3053 = vshrl.u32 %v3052, 7
        %v3054 = vsub.s32 %v2878, %v3053
        %v3055 = vrot.slane %v2520, %v3054
        %v3056 = vsel %vm2883, %v3055, %v3051
        %v3057 = vlaneseq
        %v3058 = vshrl.u32 %v3057, 7
        %v3059 = vsub.s32 %v2885, %v3058
        %v3060 = vrot.slane %v2522, %v3059
        %v3061 = vsel %vm2890, %v3060, %v3056
        %v3062 = vlaneseq
        %v3063 = vshrl.u32 %v3062, 7
        %v3064 = vsub.s32 %v2892, %v3063
        %v3065 = vrot.slane %v2524, %v3064
        %v3066 = vsel %vm2897, %v3065, %v3061
        %v3067 = vlaneseq
        %v3068 = vshrl.u32 %v3067, 7
        %v3069 = vsub.s32 %v2899, %v3068
        %v3070 = vrot.slane %v2526, %v3069
        %v3071 = vsel %vm2904, %v3070, %v3066
        %v3072 = vlaneseq
        %v3073 = vshrl.u32 %v3072, 7
        %v3074 = vsub.s32 %v2906, %v3073
        %v3075 = vrot.slane %v2528, %v3074
        %v3076 = vsel %vm2911, %v3075, %v3071
        %v3077 = vlaneseq
        %v3078 = vshrl.u32 %v3077, 7
        %v3079 = vsub.s32 %v2913, %v3078
        %v3080 = vrot.slane %v2530, %v3079
        %v3081 = vsel %vm2918, %v3080, %v3076
        %v3082 = vlaneseq
        %v3083 = vshrl.u32 %v3082, 7
        %v3084 = vsub.s32 %v2920, %v3083
        %v3085 = vrot.slane %v2532, %v3084
        %v3086 = vsel %vm2925, %v3085, %v3081
        %v3087 = vlaneseq
        %v3088 = vshrl.u32 %v3087, 7
        %v3089 = vsub.s32 %v2927, %v3088
        %v3090 = vrot.slane %v2534, %v3089
        %v3091 = vsel %vm2932, %v3090, %v3086
        %v3092 = vlaneseq
        %v3093 = vshrl.u32 %v3092, 7
        %v3094 = vsub.s32 %v2824, %v3093
        %v3095 = vrot.slane %v2536, %v3094
        %v3096 = vlaneseq
        %v3097 = vshrl.u32 %v3096, 7
        %v3098 = vsub.s32 %v2829, %v3097
        %v3099 = vrot.slane %v2538, %v3098
        %v3100 = vsel %vm2834, %v3099, %v3095
        %v3101 = vlaneseq
        %v3102 = vshrl.u32 %v3101, 7
        %v3103 = vsub.s32 %v2836, %v3102
        %v3104 = vrot.slane %v2540, %v3103
        %v3105 = vsel %vm2841, %v3104, %v3100
        %v3106 = vlaneseq
        %v3107 = vshrl.u32 %v3106, 7
        %v3108 = vsub.s32 %v2843, %v3107
        %v3109 = vrot.slane %v2542, %v3108
        %v3110 = vsel %vm2848, %v3109, %v3105
        %v3111 = vlaneseq
        %v3112 = vshrl.u32 %v3111, 7
        %v3113 = vsub.s32 %v2850, %v3112
        %v3114 = vrot.slane %v2544, %v3113
        %v3115 = vsel %vm2855, %v3114, %v3110
        %v3116 = vlaneseq
        %v3117 = vshrl.u32 %v3116, 7
        %v3118 = vsub.s32 %v2857, %v3117
        %v3119 = vrot.slane %v2546, %v3118
        %v3120 = vsel %vm2862, %v3119, %v3115
        %v3121 = vlaneseq
        %v3122 = vshrl.u32 %v3121, 7
        %v3123 = vsub.s32 %v2864, %v3122
        %v3124 = vrot.slane %v2548, %v3123
        %v3125 = vsel %vm2869, %v3124, %v3120
        %v3126 = vlaneseq
        %v3127 = vshrl.u32 %v3126, 7
        %v3128 = vsub.s32 %v2871, %v3127
        %v3129 = vrot.slane %v2550, %v3128
        %v3130 = vsel %vm2876, %v3129, %v3125
        %v3131 = vlaneseq
        %v3132 = vshrl.u32 %v3131, 7
        %v3133 = vsub.s32 %v2878, %v3132
        %v3134 = vrot.slane %v2552, %v3133
        %v3135 = vsel %vm2883, %v3134, %v3130
        %v3136 = vlaneseq
        %v3137 = vshrl.u32 %v3136, 7
        %v3138 = vsub.s32 %v2885, %v3137
        %v3139 = vrot.slane %v2554, %v3138
        %v3140 = vsel %vm2890, %v3139, %v3135
        %v3141 = vlaneseq
        %v3142 = vshrl.u32 %v3141, 7
        %v3143 = vsub.s32 %v2892, %v3142
        %v3144 = vrot.slane %v2556, %v3143
        %v3145 = vsel %vm2897, %v3144, %v3140
        %v3146 = vlaneseq
        %v3147 = vshrl.u32 %v3146, 7
        %v3148 = vsub.s32 %v2899, %v3147
        %v3149 = vrot.slane %v2558, %v3148
        %v3150 = vsel %vm2904, %v3149, %v3145
        %v3151 = vlaneseq
        %v3152 = vshrl.u32 %v3151, 7
        %v3153 = vsub.s32 %v2906, %v3152
        %v3154 = vrot.slane %v2560, %v3153
        %v3155 = vsel %vm2911, %v3154, %v3150
        %v3156 = vlaneseq
        %v3157 = vshrl.u32 %v3156, 7
        %v3158 = vsub.s32 %v2913, %v3157
        %v3159 = vrot.slane %v2562, %v3158
        %v3160 = vsel %vm2918, %v3159, %v3155
        %v3161 = vlaneseq
        %v3162 = vshrl.u32 %v3161, 7
        %v3163 = vsub.s32 %v2920, %v3162
        %v3164 = vrot.slane %v2564, %v3163
        %v3165 = vsel %vm2925, %v3164, %v3160
        %v3166 = vlaneseq
        %v3167 = vshrl.u32 %v3166, 7
        %v3168 = vsub.s32 %v2927, %v3167
        %v3169 = vrot.slane %v2566, %v3168
        %v3170 = vsel %vm2932, %v3169, %v3165
        %v3171 = vlaneseq
        %v3172 = vshrl.u32 %v3171, 7
        %v3173 = vsub.s32 %v2824, %v3172
        %v3174 = vrot.slane %v2568, %v3173
        %v3175 = vlaneseq
        %v3176 = vshrl.u32 %v3175, 7
        %v3177 = vsub.s32 %v2829, %v3176
        %v3178 = vrot.slane %v2570, %v3177
        %v3179 = vsel %vm2834, %v3178, %v3174
        %v3180 = vlaneseq
        %v3181 = vshrl.u32 %v3180, 7
        %v3182 = vsub.s32 %v2836, %v3181
        %v3183 = vrot.slane %v2572, %v3182
        %v3184 = vsel %vm2841, %v3183, %v3179
        %v3185 = vlaneseq
        %v3186 = vshrl.u32 %v3185, 7
        %v3187 = vsub.s32 %v2843, %v3186
        %v3188 = vrot.slane %v2574, %v3187
        %v3189 = vsel %vm2848, %v3188, %v3184
        %v3190 = vlaneseq
        %v3191 = vshrl.u32 %v3190, 7
        %v3192 = vsub.s32 %v2850, %v3191
        %v3193 = vrot.slane %v2576, %v3192
        %v3194 = vsel %vm2855, %v3193, %v3189
        %v3195 = vlaneseq
        %v3196 = vshrl.u32 %v3195, 7
        %v3197 = vsub.s32 %v2857, %v3196
        %v3198 = vrot.slane %v2578, %v3197
        %v3199 = vsel %vm2862, %v3198, %v3194
        %v3200 = vlaneseq
        %v3201 = vshrl.u32 %v3200, 7
        %v3202 = vsub.s32 %v2864, %v3201
        %v3203 = vrot.slane %v2580, %v3202
        %v3204 = vsel %vm2869, %v3203, %v3199
        %v3205 = vlaneseq
        %v3206 = vshrl.u32 %v3205, 7
        %v3207 = vsub.s32 %v2871, %v3206
        %v3208 = vrot.slane %v2582, %v3207
        %v3209 = vsel %vm2876, %v3208, %v3204
        %v3210 = vlaneseq
        %v3211 = vshrl.u32 %v3210, 7
        %v3212 = vsub.s32 %v2878, %v3211
        %v3213 = vrot.slane %v2584, %v3212
        %v3214 = vsel %vm2883, %v3213, %v3209
        %v3215 = vlaneseq
        %v3216 = vshrl.u32 %v3215, 7
        %v3217 = vsub.s32 %v2885, %v3216
        %v3218 = vrot.slane %v2586, %v3217
        %v3219 = vsel %vm2890, %v3218, %v3214
        %v3220 = vlaneseq
        %v3221 = vshrl.u32 %v3220, 7
        %v3222 = vsub.s32 %v2892, %v3221
        %v3223 = vrot.slane %v2588, %v3222
        %v3224 = vsel %vm2897, %v3223, %v3219
        %v3225 = vlaneseq
        %v3226 = vshrl.u32 %v3225, 7
        %v3227 = vsub.s32 %v2899, %v3226
        %v3228 = vrot.slane %v2590, %v3227
        %v3229 = vsel %vm2904, %v3228, %v3224
        %v3230 = vlaneseq
        %v3231 = vshrl.u32 %v3230, 7
        %v3232 = vsub.s32 %v2906, %v3231
        %v3233 = vrot.slane %v2592, %v3232
        %v3234 = vsel %vm2911, %v3233, %v3229
        %v3235 = vlaneseq
        %v3236 = vshrl.u32 %v3235, 7
        %v3237 = vsub.s32 %v2913, %v3236
        %v3238 = vrot.slane %v2594, %v3237
        %v3239 = vsel %vm2918, %v3238, %v3234
        %v3240 = vlaneseq
        %v3241 = vshrl.u32 %v3240, 7
        %v3242 = vsub.s32 %v2920, %v3241
        %v3243 = vrot.slane %v2596, %v3242
        %v3244 = vsel %vm2925, %v3243, %v3239
        %v3245 = vlaneseq
        %v3246 = vshrl.u32 %v3245, 7
        %v3247 = vsub.s32 %v2927, %v3246
        %v3248 = vrot.slane %v2598, %v3247
        %v3249 = vsel %vm2932, %v3248, %v3244
        %v3250 = vlaneseq
        %v3251 = vshrl.u32 %v3250, 7
        %v3252 = vsub.s32 %v2824, %v3251
        %v3253 = vrot.slane %v2600, %v3252
        %v3254 = vlaneseq
        %v3255 = vshrl.u32 %v3254, 7
        %v3256 = vsub.s32 %v2829, %v3255
        %v3257 = vrot.slane %v2602, %v3256
        %v3258 = vsel %vm2834, %v3257, %v3253
        %v3259 = vlaneseq
        %v3260 = vshrl.u32 %v3259, 7
        %v3261 = vsub.s32 %v2836, %v3260
        %v3262 = vrot.slane %v2604, %v3261
        %v3263 = vsel %vm2841, %v3262, %v3258
        %v3264 = vlaneseq
        %v3265 = vshrl.u32 %v3264, 7
        %v3266 = vsub.s32 %v2843, %v3265
        %v3267 = vrot.slane %v2606, %v3266
        %v3268 = vsel %vm2848, %v3267, %v3263
        %v3269 = vlaneseq
        %v3270 = vshrl.u32 %v3269, 7
        %v3271 = vsub.s32 %v2850, %v3270
        %v3272 = vrot.slane %v2608, %v3271
        %v3273 = vsel %vm2855, %v3272, %v3268
        %v3274 = vlaneseq
        %v3275 = vshrl.u32 %v3274, 7
        %v3276 = vsub.s32 %v2857, %v3275
        %v3277 = vrot.slane %v2610, %v3276
        %v3278 = vsel %vm2862, %v3277, %v3273
        %v3279 = vlaneseq
        %v3280 = vshrl.u32 %v3279, 7
        %v3281 = vsub.s32 %v2864, %v3280
        %v3282 = vrot.slane %v2612, %v3281
        %v3283 = vsel %vm2869, %v3282, %v3278
        %v3284 = vlaneseq
        %v3285 = vshrl.u32 %v3284, 7
        %v3286 = vsub.s32 %v2871, %v3285
        %v3287 = vrot.slane %v2614, %v3286
        %v3288 = vsel %vm2876, %v3287, %v3283
        %v3289 = vlaneseq
        %v3290 = vshrl.u32 %v3289, 7
        %v3291 = vsub.s32 %v2878, %v3290
        %v3292 = vrot.slane %v2616, %v3291
        %v3293 = vsel %vm2883, %v3292, %v3288
        %v3294 = vlaneseq
        %v3295 = vshrl.u32 %v3294, 7
        %v3296 = vsub.s32 %v2885, %v3295
        %v3297 = vrot.slane %v2618, %v3296
        %v3298 = vsel %vm2890, %v3297, %v3293
        %v3299 = vlaneseq
        %v3300 = vshrl.u32 %v3299, 7
        %v3301 = vsub.s32 %v2892, %v3300
        %v3302 = vrot.slane %v2620, %v3301
        %v3303 = vsel %vm2897, %v3302, %v3298
        %v3304 = vlaneseq
        %v3305 = vshrl.u32 %v3304, 7
        %v3306 = vsub.s32 %v2899, %v3305
        %v3307 = vrot.slane %v2622, %v3306
        %v3308 = vsel %vm2904, %v3307, %v3303
        %v3309 = vlaneseq
        %v3310 = vshrl.u32 %v3309, 7
        %v3311 = vsub.s32 %v2906, %v3310
        %v3312 = vrot.slane %v2624, %v3311
        %v3313 = vsel %vm2911, %v3312, %v3308
        %v3314 = vlaneseq
        %v3315 = vshrl.u32 %v3314, 7
        %v3316 = vsub.s32 %v2913, %v3315
        %v3317 = vrot.slane %v2626, %v3316
        %v3318 = vsel %vm2918, %v3317, %v3313
        %v3319 = vlaneseq
        %v3320 = vshrl.u32 %v3319, 7
        %v3321 = vsub.s32 %v2920, %v3320
        %v3322 = vrot.slane %v2628, %v3321
        %v3323 = vsel %vm2925, %v3322, %v3318
        %v3324 = vlaneseq
        %v3325 = vshrl.u32 %v3324, 7
        %v3326 = vsub.s32 %v2927, %v3325
        %v3327 = vrot.slane %v2630, %v3326
        %v3328 = vsel %vm2932, %v3327, %v3323
        %v3329 = vlaneseq
        %v3330 = vshrl.u32 %v3329, 7
        %v3331 = vsub.s32 %v2824, %v3330
        %v3332 = vrot.slane %v2632, %v3331
        %v3333 = vlaneseq
        %v3334 = vshrl.u32 %v3333, 7
        %v3335 = vsub.s32 %v2829, %v3334
        %v3336 = vrot.slane %v2634, %v3335
        %v3337 = vsel %vm2834, %v3336, %v3332
        %v3338 = vlaneseq
        %v3339 = vshrl.u32 %v3338, 7
        %v3340 = vsub.s32 %v2836, %v3339
        %v3341 = vrot.slane %v2636, %v3340
        %v3342 = vsel %vm2841, %v3341, %v3337
        %v3343 = vlaneseq
        %v3344 = vshrl.u32 %v3343, 7
        %v3345 = vsub.s32 %v2843, %v3344
        %v3346 = vrot.slane %v2638, %v3345
        %v3347 = vsel %vm2848, %v3346, %v3342
        %v3348 = vlaneseq
        %v3349 = vshrl.u32 %v3348, 7
        %v3350 = vsub.s32 %v2850, %v3349
        %v3351 = vrot.slane %v2640, %v3350
        %v3352 = vsel %vm2855, %v3351, %v3347
        %v3353 = vlaneseq
        %v3354 = vshrl.u32 %v3353, 7
        %v3355 = vsub.s32 %v2857, %v3354
        %v3356 = vrot.slane %v2642, %v3355
        %v3357 = vsel %vm2862, %v3356, %v3352
        %v3358 = vlaneseq
        %v3359 = vshrl.u32 %v3358, 7
        %v3360 = vsub.s32 %v2864, %v3359
        %v3361 = vrot.slane %v2644, %v3360
        %v3362 = vsel %vm2869, %v3361, %v3357
        %v3363 = vlaneseq
        %v3364 = vshrl.u32 %v3363, 7
        %v3365 = vsub.s32 %v2871, %v3364
        %v3366 = vrot.slane %v2646, %v3365
        %v3367 = vsel %vm2876, %v3366, %v3362
        %v3368 = vlaneseq
        %v3369 = vshrl.u32 %v3368, 7
        %v3370 = vsub.s32 %v2878, %v3369
        %v3371 = vrot.slane %v2648, %v3370
        %v3372 = vsel %vm2883, %v3371, %v3367
        %v3373 = vlaneseq
        %v3374 = vshrl.u32 %v3373, 7
        %v3375 = vsub.s32 %v2885, %v3374
        %v3376 = vrot.slane %v2650, %v3375
        %v3377 = vsel %vm2890, %v3376, %v3372
        %v3378 = vlaneseq
        %v3379 = vshrl.u32 %v3378, 7
        %v3380 = vsub.s32 %v2892, %v3379
        %v3381 = vrot.slane %v2652, %v3380
        %v3382 = vsel %vm2897, %v3381, %v3377
        %v3383 = vlaneseq
        %v3384 = vshrl.u32 %v3383, 7
        %v3385 = vsub.s32 %v2899, %v3384
        %v3386 = vrot.slane %v2654, %v3385
        %v3387 = vsel %vm2904, %v3386, %v3382
        %v3388 = vlaneseq
        %v3389 = vshrl.u32 %v3388, 7
        %v3390 = vsub.s32 %v2906, %v3389
        %v3391 = vrot.slane %v2656, %v3390
        %v3392 = vsel %vm2911, %v3391, %v3387
        %v3393 = vlaneseq
        %v3394 = vshrl.u32 %v3393, 7
        %v3395 = vsub.s32 %v2913, %v3394
        %v3396 = vrot.slane %v2658, %v3395
        %v3397 = vsel %vm2918, %v3396, %v3392
        %v3398 = vlaneseq
        %v3399 = vshrl.u32 %v3398, 7
        %v3400 = vsub.s32 %v2920, %v3399
        %v3401 = vrot.slane %v2660, %v3400
        %v3402 = vsel %vm2925, %v3401, %v3397
        %v3403 = vlaneseq
        %v3404 = vshrl.u32 %v3403, 7
        %v3405 = vsub.s32 %v2927, %v3404
        %v3406 = vrot.slane %v2662, %v3405
        %v3407 = vsel %vm2932, %v3406, %v3402
        %v3408 = vlaneseq
        %v3409 = vshrl.u32 %v3408, 7
        %v3410 = vsub.s32 %v2824, %v3409
        %v3411 = vrot.slane %v2664, %v3410
        %v3412 = vlaneseq
        %v3413 = vshrl.u32 %v3412, 7
        %v3414 = vsub.s32 %v2829, %v3413
        %v3415 = vrot.slane %v2666, %v3414
        %v3416 = vsel %vm2834, %v3415, %v3411
        %v3417 = vlaneseq
        %v3418 = vshrl.u32 %v3417, 7
        %v3419 = vsub.s32 %v2836, %v3418
        %v3420 = vrot.slane %v2668, %v3419
        %v3421 = vsel %vm2841, %v3420, %v3416
        %v3422 = vlaneseq
        %v3423 = vshrl.u32 %v3422, 7
        %v3424 = vsub.s32 %v2843, %v3423
        %v3425 = vrot.slane %v2670, %v3424
        %v3426 = vsel %vm2848, %v3425, %v3421
        %v3427 = vlaneseq
        %v3428 = vshrl.u32 %v3427, 7
        %v3429 = vsub.s32 %v2850, %v3428
        %v3430 = vrot.slane %v2672, %v3429
        %v3431 = vsel %vm2855, %v3430, %v3426
        %v3432 = vlaneseq
        %v3433 = vshrl.u32 %v3432, 7
        %v3434 = vsub.s32 %v2857, %v3433
        %v3435 = vrot.slane %v2674, %v3434
        %v3436 = vsel %vm2862, %v3435, %v3431
        %v3437 = vlaneseq
        %v3438 = vshrl.u32 %v3437, 7
        %v3439 = vsub.s32 %v2864, %v3438
        %v3440 = vrot.slane %v2676, %v3439
        %v3441 = vsel %vm2869, %v3440, %v3436
        %v3442 = vlaneseq
        %v3443 = vshrl.u32 %v3442, 7
        %v3444 = vsub.s32 %v2871, %v3443
        %v3445 = vrot.slane %v2678, %v3444
        %v3446 = vsel %vm2876, %v3445, %v3441
        %v3447 = vlaneseq
        %v3448 = vshrl.u32 %v3447, 7
        %v3449 = vsub.s32 %v2878, %v3448
        %v3450 = vrot.slane %v2680, %v3449
        %v3451 = vsel %vm2883, %v3450, %v3446
        %v3452 = vlaneseq
        %v3453 = vshrl.u32 %v3452, 7
        %v3454 = vsub.s32 %v2885, %v3453
        %v3455 = vrot.slane %v2682, %v3454
        %v3456 = vsel %vm2890, %v3455, %v3451
        %v3457 = vlaneseq
        %v3458 = vshrl.u32 %v3457, 7
        %v3459 = vsub.s32 %v2892, %v3458
        %v3460 = vrot.slane %v2684, %v3459
        %v3461 = vsel %vm2897, %v3460, %v3456
        %v3462 = vlaneseq
        %v3463 = vshrl.u32 %v3462, 7
        %v3464 = vsub.s32 %v2899, %v3463
        %v3465 = vrot.slane %v2686, %v3464
        %v3466 = vsel %vm2904, %v3465, %v3461
        %v3467 = vlaneseq
        %v3468 = vshrl.u32 %v3467, 7
        %v3469 = vsub.s32 %v2906, %v3468
        %v3470 = vrot.slane %v2688, %v3469
        %v3471 = vsel %vm2911, %v3470, %v3466
        %v3472 = vlaneseq
        %v3473 = vshrl.u32 %v3472, 7
        %v3474 = vsub.s32 %v2913, %v3473
        %v3475 = vrot.slane %v2690, %v3474
        %v3476 = vsel %vm2918, %v3475, %v3471
        %v3477 = vlaneseq
        %v3478 = vshrl.u32 %v3477, 7
        %v3479 = vsub.s32 %v2920, %v3478
        %v3480 = vrot.slane %v2692, %v3479
        %v3481 = vsel %vm2925, %v3480, %v3476
        %v3482 = vlaneseq
        %v3483 = vshrl.u32 %v3482, 7
        %v3484 = vsub.s32 %v2927, %v3483
        %v3485 = vrot.slane %v2694, %v3484
        %v3486 = vsel %vm2932, %v3485, %v3481
        %vm3487 = vcmask 1041409
        %v3488 = vsel %vm3487, %v3012, %v2933
        %vm3489 = vcmask 1042434
        %v3490 = vsel %vm3489, %v3091, %v3488
        %vm3491 = vcmask 1043459
        %v3492 = vsel %vm3491, %v3170, %v3490
        %vm3493 = vcmask 1044484
        %v3494 = vsel %vm3493, %v3249, %v3492
        %vm3495 = vcmask 1045509
        %v3496 = vsel %vm3495, %v3328, %v3494
        %vm3497 = vcmask 1046534
        %v3498 = vsel %vm3497, %v3407, %v3496
        %vm3499 = vcmask 1047559
        %v3500 = vsel %vm3499, %v3486, %v3498
        %v3502 = vadd.f32 %v2220, %v3500
        %3503 = vst [vmem:[#allocation4] sm:$0xff] %v3502
        %v3504 = vld [vmem:[#allocation3] sm:$0xff]
        %v3505 = vmul.f32 %v2077, %v3504
        %3506 = vadd.xlane.f32.xlu0 %v2085
        %v3507 = vpop.xlane.xlu0 %3506
        %v3508 = vadd.f32 %v3505, %v3507
        %vm3509 = vcmask 7168
        %3510 = vst.msk [vmem:[#allocation3] sm:$0xff] %vm3509, %v3508
        %3511 = vst.msk [vmem:[#allocation2] sm:$0xff] %vm3509, %v2074
        %p3512 = scmp.eq.s32.totalorder %s26, 1
        // Predicated region
        $region45: #{tpu_custom_call.1} parent=31 // pred_check
          %p3513 = pneg %p3512
        $region46: #{tpu_custom_call.1} parent=31 // pred_check_branch
          %3515 = sbr.rel (%p3513) target = $region48
        $region47: #{tpu_custom_call.1} parent=31 // pred_region
          %v3516 = vld [vmem:[#allocation3] sm:$0xff]
          %v3517 = vrcp.pop %v3516
          %v3518 = vld [vmem:[#allocation4] sm:$0xff]
          %3520 = vset.pattern.permute.xlu0 0
          %3521 = vperm.xlu0 %3520, %v3517
          %v3522 = vpop.permute.xlu0 %3521
          %v3524 = vmul.f32 %v3518, %v3522
          %3525 = vst [vmem:[%s219] sm:$0xff] %v3524
        $region48: #{tpu_custom_call.1} parent=31 // pred_fallthru
          _
        %s3526 = sand.u32 %s111, 1
        %s3527 = scalar_lea.sflag [#allocation8], %s3526
        %s3528 = sand.u32 %s111, 1
        %s3529 = smul.addr %s3528, 8
        %s3530 = scalar_lea.vmem [#allocation11], %s3529
        // Predicated region
        $region49: #{tpu_custom_call.1} parent=31 // pred_check
          %p3531 = pneg %p121
        $region50: #{tpu_custom_call.1} parent=31 // pred_check_branch
          %3533 = sbr.rel (%p3531) target = $region52
        $region51: #{tpu_custom_call.1} parent=31 // pred_region
          %s3535 = ssub.s32 128, 128
          %3536 = vsyncadd %s3527, %s3535
          %s3537 = smul.addr %s25, 128
          %s3538 = scalar_lea.hbm %s3, %s3537
          %s3540 = sshll.u32 %s3530, 4
          %s3541 = int_to_ptr.vmem [resolvable:$true] %s3540
          %3543 = dma.vmem_to_hbm [thread:$0]  %s3541, 128, %s3538, %s3527
        $region52: #{tpu_custom_call.1} parent=31 // pred_fallthru
          _
      $region32: #{tpu_custom_call.1} parent=5 // pred_fallthru
        _
      %p3544 = scmp.le.s32.totalorder 2, %s16
      // Predicated region
      $region53: #{tpu_custom_call.1} parent=5 // pred_check
        %p3545 = pneg %p3544
      $region54: #{tpu_custom_call.1} parent=5 // pred_check_branch
        %3547 = sbr.rel (%p3545) target = $region56
      $region55: #{tpu_custom_call.1} parent=5 // pred_region
        %s3548 = ssub.s32 %s16, 2
        // Predicated region
        $region57: #{tpu_custom_call.1} parent=55 // pred_check
          %p3549 = pneg %p127
        $region58: #{tpu_custom_call.1} parent=55 // pred_check_branch
          %3551 = sbr.rel (%p3549) target = $region60
        $region59: #{tpu_custom_call.1} parent=55 // pred_region
          %s3552 = sand.u32 %s112, 1
          %s3553 = scalar_lea.sflag [#allocation8], %s3552
          %s3554 = sand.u32 %s112, 1
          %s3555 = smul.addr %s3554, 8
          %s3556 = scalar_lea.vmem [#allocation11], %s3555
          %3557 = dma.done %s3553, 128
        $region60: #{tpu_custom_call.1} parent=55 // pred_fallthru
          _
      $region56: #{tpu_custom_call.1} parent=5 // pred_fallthru
        _
    $region6: #{tpu_custom_call.1} parent=1 // loop_footer
      %s20 = sadd.s32 1, %s16
    $region7: #{tpu_custom_call.1} parent=1 // loop_footer_branch
      %15 = sbr.rel target = $region3
    $region8: #{tpu_custom_call.1} parent=1 // loop_exit
      _
    %3558 = vsyncpa [#allocation7], 1
    %s3559 = scalar_lea.sflag [#allocation7], 1
    %3560 = vsyncpa %s3559, 1
    %3561 = vsyncpa [#allocation10], 1
    %s3562 = scalar_lea.sflag [#allocation10], 1
    %3563 = vsyncpa %s3562, 1
    %3564 = vsyncpa [#allocation8], 1
    %s3565 = scalar_lea.sflag [#allocation8], 1
    %3566 = vsyncpa %s3565, 1

</llo_original>
